<compile_context>
chip_gen: v7x
topology: tpu7x:2x2x1
jax: 0.10.0
libtpu: 0.0.40
codegen_flags: <defaults>
</compile_context>

<pallas_src>
import functools

import jax
import jax.numpy as jnp
from jax.experimental import pallas as pl
from jax.experimental.pallas import tpu as pltpu

EPS = 1e-5
GROUPS = 7
KH = KW = 3
STRIDE = 2
PAD = 1


def _fused_kernel(x_ref, w_ref, g1_ref, b1_ref, g2_ref, b2_ref, out_ref,
                  xs_even_ref, xs_odd_ref, *, n, h, w, oh, ow, cg):
    w2 = w // 2
    m_rows = n * oh * ow

    # ---- BatchNorm #1 (training mode: batch stats, biased variance) + ReLU ----
    # Load the block as two column-deinterleaved halves (the only strided sublane reads in the
    # kernel); every conv tap below then reads contiguous sublanes.
    x_even_wi = x_ref[:, :, pl.ds(0, w2, stride=STRIDE), :]   # columns wi = 0,2,...  (n,h,w2,cg)
    x_odd_wi = x_ref[:, :, pl.ds(1, w2, stride=STRIDE), :]    # columns wi = 1,3,...

    cnt1 = float(n * h * w)
    s1 = (jnp.sum(x_even_wi, axis=(0, 1, 2), keepdims=True)
          + jnp.sum(x_odd_wi, axis=(0, 1, 2), keepdims=True))
    q1 = (jnp.sum(x_even_wi * x_even_wi, axis=(0, 1, 2), keepdims=True)
          + jnp.sum(x_odd_wi * x_odd_wi, axis=(0, 1, 2), keepdims=True))
    mean1 = s1 / cnt1
    var1 = q1 / cnt1 - mean1 * mean1   # one-pass variance; fine for BN-scale activations
    gamma1 = g1_ref[...].reshape(1, 1, 1, cg)
    beta1 = b1_ref[...].reshape(1, 1, 1, cg)
    scale1 = gamma1 * jax.lax.rsqrt(var1 + EPS)
    shift1 = beta1 - mean1 * scale1

    # ---- zero ONLY the pad ring the conv actually reads (interior is fully rewritten) ----
    # With even H,W and 3x3/stride-2/pad-1 the bottom pad row and the right pad column are never
    # read, so scratch carries only padded rows 0..h; only the top row and xs_even's left pad
    # column need zeroing each step.
    xs_even_ref[:, 0:1, :, :] = jnp.zeros((n, 1, w2 + 1, cg), jnp.float32)   # top pad row
    xs_even_ref[:, :, 0:1, :] = jnp.zeros((n, h + 1, 1, cg), jnp.float32)    # left pad column
    xs_odd_ref[:, 0:1, :, :] = jnp.zeros((n, 1, w2, cg), jnp.float32)        # top pad row

    # BN1 + ReLU written into the interior.  Padded column j = wi + 1 (PAD = 1): odd wi -> even j
    # (xs_even positions 1..w2), even wi -> odd j (xs_odd positions 0..w2-1).
    xs_even_ref[:, 1:1 + h, 1:1 + w2, :] = jnp.maximum(x_odd_wi * scale1 + shift1, 0.0)
    xs_odd_ref[:, 1:1 + h, 0:w2, :] = jnp.maximum(x_even_wi * scale1 + shift1, 0.0)

    # ---- grouped 3x3 / stride-2 conv: 9 per-tap bf16 matmuls into an f32 accumulator ----
    # No im2col LHS is materialized; each (m_rows, cg) patch is live only for its own dot.
    acc = jnp.zeros((m_rows, cg), jnp.float32)
    tap = 0
    for kh in range(KH):
        rows = pl.ds(kh, oh, stride=STRIDE)   # stride-2 on 3rd-from-last axis: address arithmetic
        # kw = 0 -> even cols [0:ow] ; kw = 1 -> odd cols [0:ow] ; kw = 2 -> even cols [1:1+ow]
        for src_ref, col0 in ((xs_even_ref, 0), (xs_odd_ref, 0), (xs_even_ref, 1)):
            patch = src_ref[:, rows, pl.ds(col0, ow), :]
            lhs = patch.reshape(m_rows, cg).astype(jnp.bfloat16)
            wt = w_ref[tap * cg:(tap + 1) * cg, :]                 # static slice of bf16 weights
            acc = acc + jnp.dot(lhs, wt, preferred_element_type=jnp.float32)
            tap += 1

    # ---- BatchNorm #2 (training-mode batch stats over this group's channels) ----
    cnt2 = float(m_rows)
    m2 = jnp.sum(acc, axis=0, keepdims=True) / cnt2
    v2 = jnp.sum(acc * acc, axis=0, keepdims=True) / cnt2 - m2 * m2
    scale2 = g2_ref[...] * jax.lax.rsqrt(v2 + EPS)                 # (1, cg)
    shift2 = b2_ref[...] - m2 * scale2
    out_ref[...] = (acc * scale2 + shift2).reshape(n, oh, ow, cg)


def prepare_conv_weight(w_oihw):
    """PyTorch (C_out, C_in/g, kh, kw) -> per-group im2col layout (g, kh*kw*cin, cout), bf16.

    Done once outside the per-call path so the reshape/transpose is not paid on every forward.
    """
    c_out, cg_in, kh, kw = w_oihw.shape
    cg_out = c_out // GROUPS
    w_g = jnp.transpose(w_oihw.reshape(GROUPS, cg_out, cg_in, kh, kw), (0, 3, 4, 2, 1))
    return w_g.reshape(GROUPS, kh * kw * cg_in, cg_out).astype(jnp.bfloat16)


def bn_relu_gconv_bn(x_nchw, w_packed, gamma1, beta1, gamma2, beta2):
    n, c, h, w = x_nchw.shape
    assert c % GROUPS == 0 and h % 2 == 0 and w % 2 == 0
    cg = c // GROUPS
    oh = (h + 2 * PAD - KH) // STRIDE + 1
    ow = (w + 2 * PAD - KW) // STRIDE + 1

    # Single transpose into group-major layout so every per-group DMA inside the kernel is one
    # fully contiguous block:  (N, C, H, W) -> (G, N, H, W, cg).
    x_g = jnp.transpose(x_nchw.reshape(n, GROUPS, cg, h, w).astype(jnp.float32),
                        (1, 0, 3, 4, 2))
    g1 = gamma1.reshape(1, c).astype(jnp.float32)
    b1 = beta1.reshape(1, c).astype(jnp.float32)
    g2 = gamma2.reshape(1, c).astype(jnp.float32)
    b2 = beta2.reshape(1, c).astype(jnp.float32)

    conv_flops = 2 * GROUPS * (n * oh * ow) * (KH * KW * cg) * cg
    bn_flops = 10 * n * c * (h * w + oh * ow)
    bytes_accessed = (x_g.size * 4 + w_packed.size * 2
                      + GROUPS * n * oh * ow * cg * 4 + 4 * c * 4)

    kernel = functools.partial(_fused_kernel, n=n, h=h, w=w, oh=oh, ow=ow, cg=cg)
    out_g = pl.pallas_call(
        kernel,
        out_shape=jax.ShapeDtypeStruct((GROUPS, n, oh, ow, cg), jnp.float32),
        grid_spec=pltpu.PrefetchScalarGridSpec(
            num_scalar_prefetch=0,
            grid=(GROUPS,),
            in_specs=[
                pl.BlockSpec((None, n, h, w, cg), lambda g: (g, 0, 0, 0, 0)),   # contiguous group
                pl.BlockSpec((None, KH * KW * cg, cg), lambda g: (g, 0, 0)),    # bf16 im2col weight
                pl.BlockSpec((1, cg), lambda g: (0, g)),
                pl.BlockSpec((1, cg), lambda g: (0, g)),
                pl.BlockSpec((1, cg), lambda g: (0, g)),
                pl.BlockSpec((1, cg), lambda g: (0, g)),
            ],
            out_specs=pl.BlockSpec((None, n, oh, ow, cg), lambda g: (g, 0, 0, 0, 0)),
            scratch_shapes=[
                pltpu.VMEM((n, h + 1, w // 2 + 1, cg), jnp.float32),   # even padded cols (+ left pad)
                pltpu.VMEM((n, h + 1, w // 2, cg), jnp.float32),       # odd padded cols
            ],
        ),
        compiler_params=pltpu.CompilerParams(dimension_semantics=("parallel",)),
        cost_estimate=pl.CostEstimate(flops=conv_flops + bn_flops, transcendentals=0,
                                      bytes_accessed=bytes_accessed),
    )(x_g, w_packed, g1, b1, g2, b2)

    # (G, N, OH, OW, cg) -> (N, C, OH, OW) in one transpose + free reshape.
    return jnp.transpose(out_g, (1, 0, 4, 2, 3)).reshape(n, c, oh, ow)


def _reference(x, w, gamma1, beta1, gamma2, beta2):
    def bn(z, g, b):
        m = jnp.mean(z, axis=(0, 2, 3), keepdims=True)
        v = jnp.var(z, axis=(0, 2, 3), keepdims=True)   # biased, as in training BN
        return (z - m) * jax.lax.rsqrt(v + EPS) * g.reshape(1, -1, 1, 1) + b.reshape(1, -1, 1, 1)

    z = jnp.maximum(bn(x, gamma1, beta1), 0.0)
    y = jax.lax.conv_general_dilated(
        z, w, window_strides=(STRIDE, STRIDE), padding=((PAD, PAD), (PAD, PAD)),
        dimension_numbers=("NCHW", "OIHW", "NCHW"), feature_group_count=GROUPS,
        precision=jax.lax.Precision.HIGHEST)
    return bn(y, gamma2, beta2)


if __name__ == "__main__":
    key = jax.random.PRNGKey(0)
    k = jax.random.split(key, 6)
    N, C, H, W = 2, 896, 16, 16          # channels fixed at 896 by the module; small spatial/batch
    x = jax.random.normal(k[0], (N, C, H, W), jnp.float32)
    w = jax.random.normal(k[1], (C, C // GROUPS, KH, KW), jnp.float32) * 0.05
    gamma1 = 1.0 + 0.1 * jax.random.normal(k[2], (C,), jnp.float32)
    beta1 = 0.1 * jax.random.normal(k[3], (C,), jnp.float32)
    gamma2 = 1.0 + 0.1 * jax.random.normal(k[4], (C,), jnp.float32)
    beta2 = 0.1 * jax.random.normal(k[5], (C,), jnp.float32)

    w_packed = prepare_conv_weight(w)    # one-time weight packing, outside the per-call path
    out = jax.block_until_ready(
        jax.jit(bn_relu_gconv_bn)(x, w_packed, gamma1, beta1, gamma2, beta2))

    ref = jax.block_until_ready(_reference(x, w, gamma1, beta1, gamma2, beta2))
    assert out.shape == ref.shape == (N, C, H // 2, W // 2)
    err = float(jnp.max(jnp.abs(out - ref)))
    assert err < 5e-2, err
    print("KERNEL_OK")
</pallas_src>

<mosaic_0001>
module attributes {stable_mosaic.version = 11 : i64} {
  func.func @_fused_kernel(%arg0: i32, %arg1: memref<1x2x16x16x128xf32, #tpu.memory_space<vmem>>, %arg2: memref<1x1152x128xbf16, #tpu.memory_space<vmem>>, %arg3: memref<1x128xf32, #tpu.memory_space<vmem>>, %arg4: memref<1x128xf32, #tpu.memory_space<vmem>>, %arg5: memref<1x128xf32, #tpu.memory_space<vmem>>, %arg6: memref<1x128xf32, #tpu.memory_space<vmem>>, %arg7: memref<1x2x8x8x128xf32, #tpu.memory_space<vmem>>, %arg8: memref<2x17x9x128xf32, #tpu.memory_space<vmem>>, %arg9: memref<2x17x8x128xf32, #tpu.memory_space<vmem>>) attributes {dimension_semantics = [#tpu.dimension_semantics<parallel>], iteration_bounds = array<i64: 7>, scalar_prefetch = 0 : i64, scratch_operands = 2 : i64, tpu.core_type = #tpu.core_type<tc>, window_params = [{transform_indices = @transform_0, window_bounds = array<i64: 1, 2, 16, 16, 128>}, {transform_indices = @transform_1, window_bounds = array<i64: 1, 1152, 128>}, {transform_indices = @transform_2, window_bounds = array<i64: 1, 128>}, {transform_indices = @transform_3, window_bounds = array<i64: 1, 128>}, {transform_indices = @transform_4, window_bounds = array<i64: 1, 128>}, {transform_indices = @transform_5, window_bounds = array<i64: 1, 128>}, {transform_indices = @transform_6, window_bounds = array<i64: 1, 2, 8, 8, 128>}]} {
    %c0 = arith.constant 0 : index
    %c0_0 = arith.constant 0 : index
    %c0_1 = arith.constant 0 : index
    %c0_2 = arith.constant 0 : index
    %c0_3 = arith.constant 0 : index
    %0 = tpu.strided_load %arg1[%c0, %c0_0, %c0_1, %c0_2, %c0_3] {strides = array<i32: 1, 1, 1, 2, 1>} : memref<1x2x16x16x128xf32, #tpu.memory_space<vmem>>, vector<1x2x16x8x128xf32>
    %1 = vector.shape_cast %0 : vector<1x2x16x8x128xf32> to vector<2x16x8x128xf32>
    %c0_4 = arith.constant 0 : index
    %c0_5 = arith.constant 0 : index
    %c0_6 = arith.constant 0 : index
    %c1 = arith.constant 1 : index
    %c0_7 = arith.constant 0 : index
    %2 = tpu.strided_load %arg1[%c0_4, %c0_5, %c0_6, %c1, %c0_7] {strides = array<i32: 1, 1, 1, 2, 1>} : memref<1x2x16x16x128xf32, #tpu.memory_space<vmem>>, vector<1x2x16x8x128xf32>
    %3 = vector.shape_cast %2 : vector<1x2x16x8x128xf32> to vector<2x16x8x128xf32>
    %cst = arith.constant dense<0.000000e+00> : vector<128xf32>
    %4 = vector.multi_reduction <add>, %1, %cst [0, 1, 2] : vector<2x16x8x128xf32> to vector<128xf32>
    %5 = vector.shape_cast %4 : vector<128xf32> to vector<1x1x1x128xf32>
    %cst_8 = arith.constant dense<0.000000e+00> : vector<128xf32>
    %6 = vector.multi_reduction <add>, %3, %cst_8 [0, 1, 2] : vector<2x16x8x128xf32> to vector<128xf32>
    %7 = vector.shape_cast %6 : vector<128xf32> to vector<1x1x1x128xf32>
    %8 = arith.addf %5, %7 : vector<1x1x1x128xf32>
    %9 = arith.mulf %1, %1 : vector<2x16x8x128xf32>
    %cst_9 = arith.constant dense<0.000000e+00> : vector<128xf32>
    %10 = vector.multi_reduction <add>, %9, %cst_9 [0, 1, 2] : vector<2x16x8x128xf32> to vector<128xf32>
    %11 = vector.shape_cast %10 : vector<128xf32> to vector<1x1x1x128xf32>
    %12 = arith.mulf %3, %3 : vector<2x16x8x128xf32>
    %cst_10 = arith.constant dense<0.000000e+00> : vector<128xf32>
    %13 = vector.multi_reduction <add>, %12, %cst_10 [0, 1, 2] : vector<2x16x8x128xf32> to vector<128xf32>
    %14 = vector.shape_cast %13 : vector<128xf32> to vector<1x1x1x128xf32>
    %15 = arith.addf %11, %14 : vector<1x1x1x128xf32>
    %cst_11 = arith.constant 5.120000e+02 : f32
    %16 = vector.broadcast %cst_11 : f32 to vector<1x1x1x128xf32>
    %17 = arith.divf %8, %16 : vector<1x1x1x128xf32>
    %cst_12 = arith.constant 5.120000e+02 : f32
    %18 = vector.broadcast %cst_12 : f32 to vector<1x1x1x128xf32>
    %19 = arith.divf %15, %18 : vector<1x1x1x128xf32>
    %20 = arith.mulf %17, %17 : vector<1x1x1x128xf32>
    %21 = arith.subf %19, %20 : vector<1x1x1x128xf32>
    %c0_13 = arith.constant 0 : index
    %c0_14 = arith.constant 0 : index
    %22 = vector.load %arg3[%c0_13, %c0_14] : memref<1x128xf32, #tpu.memory_space<vmem>>, vector<1x128xf32>
    %23 = vector.shape_cast %22 : vector<1x128xf32> to vector<1x1x1x128xf32>
    %c0_15 = arith.constant 0 : index
    %c0_16 = arith.constant 0 : index
    %24 = vector.load %arg4[%c0_15, %c0_16] : memref<1x128xf32, #tpu.memory_space<vmem>>, vector<1x128xf32>
    %25 = vector.shape_cast %24 : vector<1x128xf32> to vector<1x1x1x128xf32>
    %cst_17 = arith.constant 9.99999974E-6 : f32
    %26 = vector.broadcast %cst_17 : f32 to vector<1x1x1x128xf32>
    %27 = arith.addf %21, %26 : vector<1x1x1x128xf32>
    %28 = math.rsqrt %27 : vector<1x1x1x128xf32>
    %29 = arith.mulf %23, %28 : vector<1x1x1x128xf32>
    %30 = arith.mulf %17, %29 : vector<1x1x1x128xf32>
    %31 = arith.subf %25, %30 : vector<1x1x1x128xf32>
    %cst_18 = arith.constant 0.000000e+00 : f32
    %32 = vector.broadcast %cst_18 : f32 to vector<2x1x9x128xf32>
    %c0_19 = arith.constant 0 : index
    %c0_20 = arith.constant 0 : index
    %c0_21 = arith.constant 0 : index
    %c0_22 = arith.constant 0 : index
    %33 = vector.load %arg8[%c0_19, %c0_20, %c0_21, %c0_22] : memref<2x17x9x128xf32, #tpu.memory_space<vmem>>, vector<2x1x9x128xf32>
    tpu.vector_store %arg8[%c0_19, %c0_20, %c0_21, %c0_22], %32 {strides = array<i32>} : memref<2x17x9x128xf32, #tpu.memory_space<vmem>>, vector<2x1x9x128xf32>,
    %cst_23 = arith.constant 0.000000e+00 : f32
    %34 = vector.broadcast %cst_23 : f32 to vector<2x17x1x128xf32>
    %c0_24 = arith.constant 0 : index
    %c0_25 = arith.constant 0 : index
    %c0_26 = arith.constant 0 : index
    %c0_27 = arith.constant 0 : index
    %35 = vector.load %arg8[%c0_24, %c0_25, %c0_26, %c0_27] : memref<2x17x9x128xf32, #tpu.memory_space<vmem>>, vector<2x17x1x128xf32>
    tpu.vector_store %arg8[%c0_24, %c0_25, %c0_26, %c0_27], %34 {strides = array<i32>} : memref<2x17x9x128xf32, #tpu.memory_space<vmem>>, vector<2x17x1x128xf32>,
    %cst_28 = arith.constant 0.000000e+00 : f32
    %36 = vector.broadcast %cst_28 : f32 to vector<2x1x8x128xf32>
    %c0_29 = arith.constant 0 : index
    %c0_30 = arith.constant 0 : index
    %c0_31 = arith.constant 0 : index
    %c0_32 = arith.constant 0 : index
    %37 = vector.load %arg9[%c0_29, %c0_30, %c0_31, %c0_32] : memref<2x17x8x128xf32, #tpu.memory_space<vmem>>, vector<2x1x8x128xf32>
    tpu.vector_store %arg9[%c0_29, %c0_30, %c0_31, %c0_32], %36 {strides = array<i32>} : memref<2x17x8x128xf32, #tpu.memory_space<vmem>>, vector<2x1x8x128xf32>,
    %38 = vector.broadcast %29 : vector<1x1x1x128xf32> to vector<2x16x8x128xf32>
    %39 = arith.mulf %3, %38 : vector<2x16x8x128xf32>
    %40 = vector.broadcast %31 : vector<1x1x1x128xf32> to vector<2x16x8x128xf32>
    %41 = arith.addf %39, %40 : vector<2x16x8x128xf32>
    %cst_33 = arith.constant 0.000000e+00 : f32
    %42 = vector.broadcast %cst_33 : f32 to vector<2x16x8x128xf32>
    %43 = arith.maximumf %41, %42 : vector<2x16x8x128xf32>
    %c0_34 = arith.constant 0 : index
    %c1_35 = arith.constant 1 : index
    %c1_36 = arith.constant 1 : index
    %c0_37 = arith.constant 0 : index
    %44 = vector.load %arg8[%c0_34, %c1_35, %c1_36, %c0_37] : memref<2x17x9x128xf32, #tpu.memory_space<vmem>>, vector<2x16x8x128xf32>
    tpu.vector_store %arg8[%c0_34, %c1_35, %c1_36, %c0_37], %43 {strides = array<i32>} : memref<2x17x9x128xf32, #tpu.memory_space<vmem>>, vector<2x16x8x128xf32>,
    %45 = vector.broadcast %29 : vector<1x1x1x128xf32> to vector<2x16x8x128xf32>
    %46 = arith.mulf %1, %45 : vector<2x16x8x128xf32>
    %47 = vector.broadcast %31 : vector<1x1x1x128xf32> to vector<2x16x8x128xf32>
    %48 = arith.addf %46, %47 : vector<2x16x8x128xf32>
    %cst_38 = arith.constant 0.000000e+00 : f32
    %49 = vector.broadcast %cst_38 : f32 to vector<2x16x8x128xf32>
    %50 = arith.maximumf %48, %49 : vector<2x16x8x128xf32>
    %c0_39 = arith.constant 0 : index
    %c1_40 = arith.constant 1 : index
    %c0_41 = arith.constant 0 : index
    %c0_42 = arith.constant 0 : index
    %51 = vector.load %arg9[%c0_39, %c1_40, %c0_41, %c0_42] : memref<2x17x8x128xf32, #tpu.memory_space<vmem>>, vector<2x16x8x128xf32>
    tpu.vector_store %arg9[%c0_39, %c1_40, %c0_41, %c0_42], %50 {strides = array<i32>} : memref<2x17x8x128xf32, #tpu.memory_space<vmem>>, vector<2x16x8x128xf32>,
    %cst_43 = arith.constant 0.000000e+00 : f32
    %52 = vector.broadcast %cst_43 : f32 to vector<128x128xf32>
    %c0_44 = arith.constant 0 : index
    %c0_45 = arith.constant 0 : index
    %c0_46 = arith.constant 0 : index
    %c0_47 = arith.constant 0 : index
    %53 = tpu.strided_load %arg8[%c0_44, %c0_45, %c0_46, %c0_47] {strides = array<i32: 1, 2, 1, 1>} : memref<2x17x9x128xf32, #tpu.memory_space<vmem>>, vector<2x8x8x128xf32>
    %54 = vector.shape_cast %53 : vector<2x8x8x128xf32> to vector<128x128xf32>
    %55 = arith.truncf %54 : vector<128x128xf32> to vector<128x128xbf16>
    %c0_48 = arith.constant 0 : index
    %c0_49 = arith.constant 0 : index
    %c0_50 = arith.constant 0 : index
    %56 = vector.load %arg2[%c0_48, %c0_49, %c0_50] : memref<1x1152x128xbf16, #tpu.memory_space<vmem>>, vector<1x128x128xbf16>
    %57 = vector.shape_cast %56 : vector<1x128x128xbf16> to vector<128x128xbf16>
    %cst_51 = arith.constant dense<0.000000e+00> : vector<128x128xf32>
    %58 = tpu.matmul %55, %57, %cst_51 {dimension_numbers = #tpu.dot_dimension_numbers<[1], [0], [0], [1], [0, 0, 1, 1], [], []>} : vector<128x128xbf16>, vector<128x128xbf16>, vector<128x128xf32> -> vector<128x128xf32>
    %59 = arith.addf %52, %58 : vector<128x128xf32>
    %c0_52 = arith.constant 0 : index
    %c0_53 = arith.constant 0 : index
    %c0_54 = arith.constant 0 : index
    %c0_55 = arith.constant 0 : index
    %60 = tpu.strided_load %arg9[%c0_52, %c0_53, %c0_54, %c0_55] {strides = array<i32: 1, 2, 1, 1>} : memref<2x17x8x128xf32, #tpu.memory_space<vmem>>, vector<2x8x8x128xf32>
    %61 = vector.shape_cast %60 : vector<2x8x8x128xf32> to vector<128x128xf32>
    %62 = arith.truncf %61 : vector<128x128xf32> to vector<128x128xbf16>
    %c0_56 = arith.constant 0 : index
    %c128 = arith.constant 128 : index
    %c0_57 = arith.constant 0 : index
    %63 = vector.load %arg2[%c0_56, %c128, %c0_57] : memref<1x1152x128xbf16, #tpu.memory_space<vmem>>, vector<1x128x128xbf16>
    %64 = vector.shape_cast %63 : vector<1x128x128xbf16> to vector<128x128xbf16>
    %cst_58 = arith.constant dense<0.000000e+00> : vector<128x128xf32>
    %65 = tpu.matmul %62, %64, %cst_58 {dimension_numbers = #tpu.dot_dimension_numbers<[1], [0], [0], [1], [0, 0, 1, 1], [], []>} : vector<128x128xbf16>, vector<128x128xbf16>, vector<128x128xf32> -> vector<128x128xf32>
    %66 = arith.addf %59, %65 : vector<128x128xf32>
    %c0_59 = arith.constant 0 : index
    %c0_60 = arith.constant 0 : index
    %c1_61 = arith.constant 1 : index
    %c0_62 = arith.constant 0 : index
    %67 = tpu.strided_load %arg8[%c0_59, %c0_60, %c1_61, %c0_62] {strides = array<i32: 1, 2, 1, 1>} : memref<2x17x9x128xf32, #tpu.memory_space<vmem>>, vector<2x8x8x128xf32>
    %68 = vector.shape_cast %67 : vector<2x8x8x128xf32> to vector<128x128xf32>
    %69 = arith.truncf %68 : vector<128x128xf32> to vector<128x128xbf16>
    %c0_63 = arith.constant 0 : index
    %c256 = arith.constant 256 : index
    %c0_64 = arith.constant 0 : index
    %70 = vector.load %arg2[%c0_63, %c256, %c0_64] : memref<1x1152x128xbf16, #tpu.memory_space<vmem>>, vector<1x128x128xbf16>
    %71 = vector.shape_cast %70 : vector<1x128x128xbf16> to vector<128x128xbf16>
    %cst_65 = arith.constant dense<0.000000e+00> : vector<128x128xf32>
    %72 = tpu.matmul %69, %71, %cst_65 {dimension_numbers = #tpu.dot_dimension_numbers<[1], [0], [0], [1], [0, 0, 1, 1], [], []>} : vector<128x128xbf16>, vector<128x128xbf16>, vector<128x128xf32> -> vector<128x128xf32>
    %73 = arith.addf %66, %72 : vector<128x128xf32>
    %c0_66 = arith.constant 0 : index
    %c1_67 = arith.constant 1 : index
    %c0_68 = arith.constant 0 : index
    %c0_69 = arith.constant 0 : index
    %74 = tpu.strided_load %arg8[%c0_66, %c1_67, %c0_68, %c0_69] {strides = array<i32: 1, 2, 1, 1>} : memref<2x17x9x128xf32, #tpu.memory_space<vmem>>, vector<2x8x8x128xf32>
    %75 = vector.shape_cast %74 : vector<2x8x8x128xf32> to vector<128x128xf32>
    %76 = arith.truncf %75 : vector<128x128xf32> to vector<128x128xbf16>
    %c0_70 = arith.constant 0 : index
    %c384 = arith.constant 384 : index
    %c0_71 = arith.constant 0 : index
    %77 = vector.load %arg2[%c0_70, %c384, %c0_71] : memref<1x1152x128xbf16, #tpu.memory_space<vmem>>, vector<1x128x128xbf16>
    %78 = vector.shape_cast %77 : vector<1x128x128xbf16> to vector<128x128xbf16>
    %cst_72 = arith.constant dense<0.000000e+00> : vector<128x128xf32>
    %79 = tpu.matmul %76, %78, %cst_72 {dimension_numbers = #tpu.dot_dimension_numbers<[1], [0], [0], [1], [0, 0, 1, 1], [], []>} : vector<128x128xbf16>, vector<128x128xbf16>, vector<128x128xf32> -> vector<128x128xf32>
    %80 = arith.addf %73, %79 : vector<128x128xf32>
    %c0_73 = arith.constant 0 : index
    %c1_74 = arith.constant 1 : index
    %c0_75 = arith.constant 0 : index
    %c0_76 = arith.constant 0 : index
    %81 = tpu.strided_load %arg9[%c0_73, %c1_74, %c0_75, %c0_76] {strides = array<i32: 1, 2, 1, 1>} : memref<2x17x8x128xf32, #tpu.memory_space<vmem>>, vector<2x8x8x128xf32>
    %82 = vector.shape_cast %81 : vector<2x8x8x128xf32> to vector<128x128xf32>
    %83 = arith.truncf %82 : vector<128x128xf32> to vector<128x128xbf16>
    %c0_77 = arith.constant 0 : index
    %c512 = arith.constant 512 : index
    %c0_78 = arith.constant 0 : index
    %84 = vector.load %arg2[%c0_77, %c512, %c0_78] : memref<1x1152x128xbf16, #tpu.memory_space<vmem>>, vector<1x128x128xbf16>
    %85 = vector.shape_cast %84 : vector<1x128x128xbf16> to vector<128x128xbf16>
    %cst_79 = arith.constant dense<0.000000e+00> : vector<128x128xf32>
    %86 = tpu.matmul %83, %85, %cst_79 {dimension_numbers = #tpu.dot_dimension_numbers<[1], [0], [0], [1], [0, 0, 1, 1], [], []>} : vector<128x128xbf16>, vector<128x128xbf16>, vector<128x128xf32> -> vector<128x128xf32>
    %87 = arith.addf %80, %86 : vector<128x128xf32>
    %c0_80 = arith.constant 0 : index
    %c1_81 = arith.constant 1 : index
    %c1_82 = arith.constant 1 : index
    %c0_83 = arith.constant 0 : index
    %88 = tpu.strided_load %arg8[%c0_80, %c1_81, %c1_82, %c0_83] {strides = array<i32: 1, 2, 1, 1>} : memref<2x17x9x128xf32, #tpu.memory_space<vmem>>, vector<2x8x8x128xf32>
    %89 = vector.shape_cast %88 : vector<2x8x8x128xf32> to vector<128x128xf32>
    %90 = arith.truncf %89 : vector<128x128xf32> to vector<128x128xbf16>
    %c0_84 = arith.constant 0 : index
    %c640 = arith.constant 640 : index
    %c0_85 = arith.constant 0 : index
    %91 = vector.load %arg2[%c0_84, %c640, %c0_85] : memref<1x1152x128xbf16, #tpu.memory_space<vmem>>, vector<1x128x128xbf16>
    %92 = vector.shape_cast %91 : vector<1x128x128xbf16> to vector<128x128xbf16>
    %cst_86 = arith.constant dense<0.000000e+00> : vector<128x128xf32>
    %93 = tpu.matmul %90, %92, %cst_86 {dimension_numbers = #tpu.dot_dimension_numbers<[1], [0], [0], [1], [0, 0, 1, 1], [], []>} : vector<128x128xbf16>, vector<128x128xbf16>, vector<128x128xf32> -> vector<128x128xf32>
    %94 = arith.addf %87, %93 : vector<128x128xf32>
    %c0_87 = arith.constant 0 : index
    %c2 = arith.constant 2 : index
    %c0_88 = arith.constant 0 : index
    %c0_89 = arith.constant 0 : index
    %95 = tpu.strided_load %arg8[%c0_87, %c2, %c0_88, %c0_89] {strides = array<i32: 1, 2, 1, 1>} : memref<2x17x9x128xf32, #tpu.memory_space<vmem>>, vector<2x8x8x128xf32>
    %96 = vector.shape_cast %95 : vector<2x8x8x128xf32> to vector<128x128xf32>
    %97 = arith.truncf %96 : vector<128x128xf32> to vector<128x128xbf16>
    %c0_90 = arith.constant 0 : index
    %c768 = arith.constant 768 : index
    %c0_91 = arith.constant 0 : index
    %98 = vector.load %arg2[%c0_90, %c768, %c0_91] : memref<1x1152x128xbf16, #tpu.memory_space<vmem>>, vector<1x128x128xbf16>
    %99 = vector.shape_cast %98 : vector<1x128x128xbf16> to vector<128x128xbf16>
    %cst_92 = arith.constant dense<0.000000e+00> : vector<128x128xf32>
    %100 = tpu.matmul %97, %99, %cst_92 {dimension_numbers = #tpu.dot_dimension_numbers<[1], [0], [0], [1], [0, 0, 1, 1], [], []>} : vector<128x128xbf16>, vector<128x128xbf16>, vector<128x128xf32> -> vector<128x128xf32>
    %101 = arith.addf %94, %100 : vector<128x128xf32>
    %c0_93 = arith.constant 0 : index
    %c2_94 = arith.constant 2 : index
    %c0_95 = arith.constant 0 : index
    %c0_96 = arith.constant 0 : index
    %102 = tpu.strided_load %arg9[%c0_93, %c2_94, %c0_95, %c0_96] {strides = array<i32: 1, 2, 1, 1>} : memref<2x17x8x128xf32, #tpu.memory_space<vmem>>, vector<2x8x8x128xf32>
    %103 = vector.shape_cast %102 : vector<2x8x8x128xf32> to vector<128x128xf32>
    %104 = arith.truncf %103 : vector<128x128xf32> to vector<128x128xbf16>
    %c0_97 = arith.constant 0 : index
    %c896 = arith.constant 896 : index
    %c0_98 = arith.constant 0 : index
    %105 = vector.load %arg2[%c0_97, %c896, %c0_98] : memref<1x1152x128xbf16, #tpu.memory_space<vmem>>, vector<1x128x128xbf16>
    %106 = vector.shape_cast %105 : vector<1x128x128xbf16> to vector<128x128xbf16>
    %cst_99 = arith.constant dense<0.000000e+00> : vector<128x128xf32>
    %107 = tpu.matmul %104, %106, %cst_99 {dimension_numbers = #tpu.dot_dimension_numbers<[1], [0], [0], [1], [0, 0, 1, 1], [], []>} : vector<128x128xbf16>, vector<128x128xbf16>, vector<128x128xf32> -> vector<128x128xf32>
    %108 = arith.addf %101, %107 : vector<128x128xf32>
    %c0_100 = arith.constant 0 : index
    %c2_101 = arith.constant 2 : index
    %c1_102 = arith.constant 1 : index
    %c0_103 = arith.constant 0 : index
    %109 = tpu.strided_load %arg8[%c0_100, %c2_101, %c1_102, %c0_103] {strides = array<i32: 1, 2, 1, 1>} : memref<2x17x9x128xf32, #tpu.memory_space<vmem>>, vector<2x8x8x128xf32>
    %110 = vector.shape_cast %109 : vector<2x8x8x128xf32> to vector<128x128xf32>
    %111 = arith.truncf %110 : vector<128x128xf32> to vector<128x128xbf16>
    %c0_104 = arith.constant 0 : index
    %c1024 = arith.constant 1024 : index
    %c0_105 = arith.constant 0 : index
    %112 = vector.load %arg2[%c0_104, %c1024, %c0_105] : memref<1x1152x128xbf16, #tpu.memory_space<vmem>>, vector<1x128x128xbf16>
    %113 = vector.shape_cast %112 : vector<1x128x128xbf16> to vector<128x128xbf16>
    %cst_106 = arith.constant dense<0.000000e+00> : vector<128x128xf32>
    %114 = tpu.matmul %111, %113, %cst_106 {dimension_numbers = #tpu.dot_dimension_numbers<[1], [0], [0], [1], [0, 0, 1, 1], [], []>} : vector<128x128xbf16>, vector<128x128xbf16>, vector<128x128xf32> -> vector<128x128xf32>
    %115 = arith.addf %108, %114 : vector<128x128xf32>
    %cst_107 = arith.constant dense<0.000000e+00> : vector<128xf32>
    %116 = vector.multi_reduction <add>, %115, %cst_107 [0] : vector<128x128xf32> to vector<128xf32>
    %117 = vector.shape_cast %116 : vector<128xf32> to vector<1x128xf32>
    %cst_108 = arith.constant 1.280000e+02 : f32
    %118 = vector.broadcast %cst_108 : f32 to vector<1x128xf32>
    %119 = arith.divf %117, %118 : vector<1x128xf32>
    %120 = arith.mulf %115, %115 : vector<128x128xf32>
    %cst_109 = arith.constant dense<0.000000e+00> : vector<128xf32>
    %121 = vector.multi_reduction <add>, %120, %cst_109 [0] : vector<128x128xf32> to vector<128xf32>
    %122 = vector.shape_cast %121 : vector<128xf32> to vector<1x128xf32>
    %cst_110 = arith.constant 1.280000e+02 : f32
    %123 = vector.broadcast %cst_110 : f32 to vector<1x128xf32>
    %124 = arith.divf %122, %123 : vector<1x128xf32>
    %125 = arith.mulf %119, %119 : vector<1x128xf32>
    %126 = arith.subf %124, %125 : vector<1x128xf32>
    %c0_111 = arith.constant 0 : index
    %c0_112 = arith.constant 0 : index
    %127 = vector.load %arg5[%c0_111, %c0_112] : memref<1x128xf32, #tpu.memory_space<vmem>>, vector<1x128xf32>
    %cst_113 = arith.constant 9.99999974E-6 : f32
    %128 = vector.broadcast %cst_113 : f32 to vector<1x128xf32>
    %129 = arith.addf %126, %128 : vector<1x128xf32>
    %130 = math.rsqrt %129 : vector<1x128xf32>
    %131 = arith.mulf %127, %130 : vector<1x128xf32>
    %c0_114 = arith.constant 0 : index
    %c0_115 = arith.constant 0 : index
    %132 = vector.load %arg6[%c0_114, %c0_115] : memref<1x128xf32, #tpu.memory_space<vmem>>, vector<1x128xf32>
    %133 = arith.mulf %119, %131 : vector<1x128xf32>
    %134 = arith.subf %132, %133 : vector<1x128xf32>
    %135 = vector.broadcast %131 : vector<1x128xf32> to vector<128x128xf32>
    %136 = arith.mulf %115, %135 : vector<128x128xf32>
    %137 = vector.broadcast %134 : vector<1x128xf32> to vector<128x128xf32>
    %138 = arith.addf %136, %137 : vector<128x128xf32>
    %139 = vector.shape_cast %138 : vector<128x128xf32> to vector<2x8x8x128xf32>
    %c0_116 = arith.constant 0 : index
    %c0_117 = arith.constant 0 : index
    %c0_118 = arith.constant 0 : index
    %c0_119 = arith.constant 0 : index
    %c0_120 = arith.constant 0 : index
    %140 = vector.load %arg7[%c0_116, %c0_117, %c0_118, %c0_119, %c0_120] : memref<1x2x8x8x128xf32, #tpu.memory_space<vmem>>, vector<1x2x8x8x128xf32>
    %141 = vector.shape_cast %140 : vector<1x2x8x8x128xf32> to vector<2x8x8x128xf32>
    %142 = vector.shape_cast %139 : vector<2x8x8x128xf32> to vector<1x2x8x8x128xf32>
    tpu.vector_store %arg7[%c0_116, %c0_117, %c0_118, %c0_119, %c0_120], %142 {strides = array<i32>} : memref<1x2x8x8x128xf32, #tpu.memory_space<vmem>>, vector<1x2x8x8x128xf32>,
    return
  }
  func.func @transform_0(%arg0: i32) -> (i32, i32, i32, i32, i32) {
    %c0_i32 = arith.constant 0 : i32
    %c0_i32_0 = arith.constant 0 : i32
    %c0_i32_1 = arith.constant 0 : i32
    %c0_i32_2 = arith.constant 0 : i32
    %c0_i32_3 = arith.constant 0 : i32
    return %arg0, %c0_i32, %c0_i32_0, %c0_i32_1, %c0_i32_2 : i32, i32, i32, i32, i32
  }
  func.func @transform_1(%arg0: i32) -> (i32, i32, i32) {
    %c0_i32 = arith.constant 0 : i32
    %c0_i32_0 = arith.constant 0 : i32
    %c0_i32_1 = arith.constant 0 : i32
    return %arg0, %c0_i32, %c0_i32_0 : i32, i32, i32
  }
  func.func @transform_2(%arg0: i32) -> (i32, i32) {
    %c0_i32 = arith.constant 0 : i32
    %c0_i32_0 = arith.constant 0 : i32
    return %c0_i32, %arg0 : i32, i32
  }
  func.func @transform_3(%arg0: i32) -> (i32, i32) {
    %c0_i32 = arith.constant 0 : i32
    %c0_i32_0 = arith.constant 0 : i32
    return %c0_i32, %arg0 : i32, i32
  }
  func.func @transform_4(%arg0: i32) -> (i32, i32) {
    %c0_i32 = arith.constant 0 : i32
    %c0_i32_0 = arith.constant 0 : i32
    return %c0_i32, %arg0 : i32, i32
  }
  func.func @transform_5(%arg0: i32) -> (i32, i32) {
    %c0_i32 = arith.constant 0 : i32
    %c0_i32_0 = arith.constant 0 : i32
    return %c0_i32, %arg0 : i32, i32
  }
  func.func @transform_6(%arg0: i32) -> (i32, i32, i32, i32, i32) {
    %c0_i32 = arith.constant 0 : i32
    %c0_i32_0 = arith.constant 0 : i32
    %c0_i32_1 = arith.constant 0 : i32
    %c0_i32_2 = arith.constant 0 : i32
    %c0_i32_3 = arith.constant 0 : i32
    return %arg0, %c0_i32, %c0_i32_0, %c0_i32_1, %c0_i32_2 : i32, i32, i32, i32, i32
  }
}

</mosaic_0001>

<llo_original>
// kernel: bn_relu_gconv_bn.1
$region0: #{bn_relu_gconv_bn.1}
  #allocation0 [shape = 'u32[]', space=smem, size = 0x4, offset = 0x4, fixed_abs, tag = 'smem constant byte address 0x4 - core index']
  #allocation1 [shape = 'u32[144,128]{1,0:T(1,128)}', space=vmem, size = 0x12000, scoped, tag = 'internal scratch']
  #allocation2 [shape = 'f32[2,17,9,128]{3,2,1,0:T(8,128)}', space=vmem, size = 0x44000, scoped, tag = 'scratch operand']
  #allocation3 [shape = 'f32[2,17,8,128]{3,2,1,0:T(8,128)}', space=vmem, size = 0x22000, scoped, tag = 'scratch operand']
  %s0 = inlined_call_operand.vmem [shape: f32[7,2,16,16,128], index: 0, kind: input, shape index: {}]
  %s1 = inlined_call_operand.vmem [shape: bf16[7,1152,128], index: 1, kind: input, shape index: {}]
  %s2 = inlined_call_operand.vmem [shape: f32[1,896], index: 2, kind: input, shape index: {}]
  %s3 = inlined_call_operand.vmem [shape: f32[1,896], index: 3, kind: input, shape index: {}]
  %s4 = inlined_call_operand.vmem [shape: f32[1,896], index: 4, kind: input, shape index: {}]
  %s5 = inlined_call_operand.vmem [shape: f32[1,896], index: 5, kind: input, shape index: {}]
  %s6 = inlined_call_operand.vmem [shape: f32[7,2,8,8,128], index: 6, kind: output, shape index: {}]
  %s7 = sld [smem:[#allocation0]]
  $region57: #{bn_relu_gconv_bn.1} parent=0
    _
  %s9 = ssub.s32 1, %s7
  %s10 = scalar_select 0, %s9, %s7
  loop: start=0, step=1, limit=9
  $region2: #{bn_relu_gconv_bn.1} parent=0 // loop_pre_header
    _
  $region3: #{bn_relu_gconv_bn.1} parent=0 // loop_header
    %s12 = sphi 0, %s16
    %p13 = scmp.ge.s32.totalorder %s12, 9
    %s22 = sphi 0, %s24
    %s25 = sphi 0, %s22
    %s26 = sphi 0, %s25
    %s42 = sphi 0, %s26
    %s48 = sphi 0, %s50
    %s51 = sphi 0, %s48
    %s52 = sphi 0, %s51
    %s68 = sphi 0, %s52
    %s74 = sphi 0, %s76
    %s77 = sphi 0, %s74
    %s78 = sphi 0, %s77
    %s94 = sphi 0, %s78
    %s100 = sphi 0, %s102
    %s103 = sphi 0, %s100
    %s104 = sphi 0, %s103
    %s120 = sphi 0, %s104
    %s126 = sphi 0, %s128
    %s129 = sphi 0, %s126
    %s130 = sphi 0, %s129
    %s146 = sphi 0, %s130
    %s152 = sphi 0, %s154
    %s155 = sphi 0, %s152
    %s156 = sphi 0, %s155
    %s172 = sphi 0, %s156
    %s178 = sphi 0, %s180
    %s181 = sphi 0, %s178
    %s182 = sphi 0, %s181
    %s198 = sphi 0, %s182
  $region4: #{bn_relu_gconv_bn.1} parent=0 // loop_header_branch
    %15 = sbr.rel (%p13) target = $region8
  $region5: #{bn_relu_gconv_bn.1} parent=0 // loop_body
    %s17 = ssub.s32 %s12, 1
    %s18 = ssub.s32 %s12, 2
    %s19 = sadd.s32 %s12, 1
    %s20 = ssub.s32 %s12, %s19
    %p21 = scmp.eq.s32.totalorder %s20, 0
    %s23 = sadd.s32 %s22, 1
    %s24 = scalar_select %p21, %s22, %s23
    %p27 = pneg %p21
    %p28 = scmp.eq.s32.totalorder %s12, 6
    %p29 = por %p27, %p28
    %p30 = scmp.ne.s32.totalorder %s22, %s25
    %p31 = scmp.eq.s32.totalorder %s12, 0
    %p32 = por %p30, %p31
    %p33 = scmp.ne.s32.totalorder %s22, %s25
    %p34 = scmp.eq.s32.totalorder %s17, 6
    %p35 = por %p33, %p34
    %p36 = scmp.ne.s32.totalorder %s25, %s26
    %p37 = scmp.eq.s32.totalorder %s17, 0
    %p38 = por %p36, %p37
    %p39 = scmp.ne.s32.totalorder %s25, %s26
    %p40 = scmp.eq.s32.totalorder %s18, 6
    %p41 = por %p39, %p40
    %p43 = scmp.ne.s32.totalorder %s26, %s42
    %p44 = scmp.eq.s32.totalorder %s18, 0
    %p45 = por %p43, %p44
    %s46 = ssub.s32 %s12, %s19
    %p47 = scmp.eq.s32.totalorder %s46, 0
    %s49 = sadd.s32 %s48, 1
    %s50 = scalar_select %p47, %s48, %s49
    %p53 = pneg %p47
    %p54 = scmp.eq.s32.totalorder %s12, 6
    %p55 = por %p53, %p54
    %p56 = scmp.ne.s32.totalorder %s48, %s51
    %p57 = scmp.eq.s32.totalorder %s12, 0
    %p58 = por %p56, %p57
    %p59 = scmp.ne.s32.totalorder %s48, %s51
    %p60 = scmp.eq.s32.totalorder %s17, 6
    %p61 = por %p59, %p60
    %p62 = scmp.ne.s32.totalorder %s51, %s52
    %p63 = scmp.eq.s32.totalorder %s17, 0
    %p64 = por %p62, %p63
    %p65 = scmp.ne.s32.totalorder %s51, %s52
    %p66 = scmp.eq.s32.totalorder %s18, 6
    %p67 = por %p65, %p66
    %p69 = scmp.ne.s32.totalorder %s52, %s68
    %p70 = scmp.eq.s32.totalorder %s18, 0
    %p71 = por %p69, %p70
    %s72 = ssub.s32 %s12, %s19
    %p73 = scmp.eq.s32.totalorder %s72, 0
    %s75 = sadd.s32 %s74, 1
    %s76 = scalar_select %p73, %s74, %s75
    %p79 = pneg %p73
    %p80 = scmp.eq.s32.totalorder %s12, 6
    %p81 = por %p79, %p80
    %p82 = scmp.ne.s32.totalorder %s74, %s77
    %p83 = scmp.eq.s32.totalorder %s12, 0
    %p84 = por %p82, %p83
    %p85 = scmp.ne.s32.totalorder %s74, %s77
    %p86 = scmp.eq.s32.totalorder %s17, 6
    %p87 = por %p85, %p86
    %p88 = scmp.ne.s32.totalorder %s77, %s78
    %p89 = scmp.eq.s32.totalorder %s17, 0
    %p90 = por %p88, %p89
    %p91 = scmp.ne.s32.totalorder %s77, %s78
    %p92 = scmp.eq.s32.totalorder %s18, 6
    %p93 = por %p91, %p92
    %p95 = scmp.ne.s32.totalorder %s78, %s94
    %p96 = scmp.eq.s32.totalorder %s18, 0
    %p97 = por %p95, %p96
    %s98 = ssub.s32 %s12, %s19
    %p99 = scmp.eq.s32.totalorder %s98, 0
    %s101 = sadd.s32 %s100, 1
    %s102 = scalar_select %p99, %s100, %s101
    %p105 = pneg %p99
    %p106 = scmp.eq.s32.totalorder %s12, 6
    %p107 = por %p105, %p106
    %p108 = scmp.ne.s32.totalorder %s100, %s103
    %p109 = scmp.eq.s32.totalorder %s12, 0
    %p110 = por %p108, %p109
    %p111 = scmp.ne.s32.totalorder %s100, %s103
    %p112 = scmp.eq.s32.totalorder %s17, 6
    %p113 = por %p111, %p112
    %p114 = scmp.ne.s32.totalorder %s103, %s104
    %p115 = scmp.eq.s32.totalorder %s17, 0
    %p116 = por %p114, %p115
    %p117 = scmp.ne.s32.totalorder %s103, %s104
    %p118 = scmp.eq.s32.totalorder %s18, 6
    %p119 = por %p117, %p118
    %p121 = scmp.ne.s32.totalorder %s104, %s120
    %p122 = scmp.eq.s32.totalorder %s18, 0
    %p123 = por %p121, %p122
    %s124 = ssub.s32 %s12, %s19
    %p125 = scmp.eq.s32.totalorder %s124, 0
    %s127 = sadd.s32 %s126, 1
    %s128 = scalar_select %p125, %s126, %s127
    %p131 = pneg %p125
    %p132 = scmp.eq.s32.totalorder %s12, 6
    %p133 = por %p131, %p132
    %p134 = scmp.ne.s32.totalorder %s126, %s129
    %p135 = scmp.eq.s32.totalorder %s12, 0
    %p136 = por %p134, %p135
    %p137 = scmp.ne.s32.totalorder %s126, %s129
    %p138 = scmp.eq.s32.totalorder %s17, 6
    %p139 = por %p137, %p138
    %p140 = scmp.ne.s32.totalorder %s129, %s130
    %p141 = scmp.eq.s32.totalorder %s17, 0
    %p142 = por %p140, %p141
    %p143 = scmp.ne.s32.totalorder %s129, %s130
    %p144 = scmp.eq.s32.totalorder %s18, 6
    %p145 = por %p143, %p144
    %p147 = scmp.ne.s32.totalorder %s130, %s146
    %p148 = scmp.eq.s32.totalorder %s18, 0
    %p149 = por %p147, %p148
    %s150 = ssub.s32 %s12, %s19
    %p151 = scmp.eq.s32.totalorder %s150, 0
    %s153 = sadd.s32 %s152, 1
    %s154 = scalar_select %p151, %s152, %s153
    %p157 = pneg %p151
    %p158 = scmp.eq.s32.totalorder %s12, 6
    %p159 = por %p157, %p158
    %p160 = scmp.ne.s32.totalorder %s152, %s155
    %p161 = scmp.eq.s32.totalorder %s12, 0
    %p162 = por %p160, %p161
    %p163 = scmp.ne.s32.totalorder %s152, %s155
    %p164 = scmp.eq.s32.totalorder %s17, 6
    %p165 = por %p163, %p164
    %p166 = scmp.ne.s32.totalorder %s155, %s156
    %p167 = scmp.eq.s32.totalorder %s17, 0
    %p168 = por %p166, %p167
    %p169 = scmp.ne.s32.totalorder %s155, %s156
    %p170 = scmp.eq.s32.totalorder %s18, 6
    %p171 = por %p169, %p170
    %p173 = scmp.ne.s32.totalorder %s156, %s172
    %p174 = scmp.eq.s32.totalorder %s18, 0
    %p175 = por %p173, %p174
    %s176 = ssub.s32 %s12, %s19
    %p177 = scmp.eq.s32.totalorder %s176, 0
    %s179 = sadd.s32 %s178, 1
    %s180 = scalar_select %p177, %s178, %s179
    %p183 = pneg %p177
    %p184 = scmp.eq.s32.totalorder %s12, 6
    %p185 = por %p183, %p184
    %p186 = scmp.ne.s32.totalorder %s178, %s181
    %p187 = scmp.eq.s32.totalorder %s12, 0
    %p188 = por %p186, %p187
    %p189 = scmp.ne.s32.totalorder %s178, %s181
    %p190 = scmp.eq.s32.totalorder %s17, 6
    %p191 = por %p189, %p190
    %p192 = scmp.ne.s32.totalorder %s181, %s182
    %p193 = scmp.eq.s32.totalorder %s17, 0
    %p194 = por %p192, %p193
    %p195 = scmp.ne.s32.totalorder %s181, %s182
    %p196 = scmp.eq.s32.totalorder %s18, 6
    %p197 = por %p195, %p196
    %p199 = scmp.ne.s32.totalorder %s182, %s198
    %p200 = scmp.eq.s32.totalorder %s18, 0
    %p201 = por %p199, %p200
    %p202 = scmp.le.s32.totalorder 1, %s12
    %p203 = scmp.lt.s32.totalorder %s12, 8
    %p204 = pnand %p202, %p203
    %p205 = pneg %p204
    // Predicated region
    $region9: #{bn_relu_gconv_bn.1} parent=5 // pred_check
      _
    $region10: #{bn_relu_gconv_bn.1} parent=5 // pred_check_branch
      %207 = sbr.rel (%p204) target = $region12
    $region11: #{bn_relu_gconv_bn.1} parent=5 // pred_region
      %s208 = ssub.s32 %s12, 1
    $region12: #{bn_relu_gconv_bn.1} parent=5 // pred_fallthru
      _
    %p209 = scmp.lt.s32.totalorder %s12, 7
    // Predicated region
    $region13: #{bn_relu_gconv_bn.1} parent=5 // pred_check
      %p210 = pneg %p209
    $region14: #{bn_relu_gconv_bn.1} parent=5 // pred_check_branch
      %212 = sbr.rel (%p210) target = $region16
    $region15: #{bn_relu_gconv_bn.1} parent=5 // pred_region
      // Predicated region
      $region17: #{bn_relu_gconv_bn.1} parent=15 // pred_check
        %p213 = pneg %p32
      $region18: #{bn_relu_gconv_bn.1} parent=15 // pred_check_branch
        %215 = sbr.rel (%p213) target = $region20
      $region19: #{bn_relu_gconv_bn.1} parent=15 // pred_region
        %p216 = scmp.lt.s32.totalorder %s12, 6
        %s217 = scalar_select %p216, %s12, 6
        %s218 = smul.addr %s217, 64
        %s219 = smul.addr %s218, 8
        %s220 = scalar_lea.vmem %s0, %s219
      $region20: #{bn_relu_gconv_bn.1} parent=15 // pred_fallthru
        _
      // Predicated region
      $region21: #{bn_relu_gconv_bn.1} parent=15 // pred_check
        %p221 = pneg %p58
      $region22: #{bn_relu_gconv_bn.1} parent=15 // pred_check_branch
        %223 = sbr.rel (%p221) target = $region24
      $region23: #{bn_relu_gconv_bn.1} parent=15 // pred_region
        %p224 = scmp.lt.s32.totalorder %s12, 6
        %s225 = scalar_select %p224, %s12, 6
        %s226 = smul.addr %s225, 144
        %s227 = smul.addr %s226, 4
        %s228 = scalar_lea.vmem %s1, %s227
      $region24: #{bn_relu_gconv_bn.1} parent=15 // pred_fallthru
        _
      // Predicated region
      $region25: #{bn_relu_gconv_bn.1} parent=15 // pred_check
        %p229 = pneg %p84
      $region26: #{bn_relu_gconv_bn.1} parent=15 // pred_check_branch
        %231 = sbr.rel (%p229) target = $region28
      $region27: #{bn_relu_gconv_bn.1} parent=15 // pred_region
        %p232 = scmp.lt.s32.totalorder %s12, 6
        %s233 = scalar_select %p232, %s12, 6
        %s234 = scalar_lea.vmem %s2, %s233
      $region28: #{bn_relu_gconv_bn.1} parent=15 // pred_fallthru
        _
      // Predicated region
      $region29: #{bn_relu_gconv_bn.1} parent=15 // pred_check
        %p235 = pneg %p110
      $region30: #{bn_relu_gconv_bn.1} parent=15 // pred_check_branch
        %237 = sbr.rel (%p235) target = $region32
      $region31: #{bn_relu_gconv_bn.1} parent=15 // pred_region
        %p238 = scmp.lt.s32.totalorder %s12, 6
        %s239 = scalar_select %p238, %s12, 6
        %s240 = scalar_lea.vmem %s3, %s239
      $region32: #{bn_relu_gconv_bn.1} parent=15 // pred_fallthru
        _
      // Predicated region
      $region33: #{bn_relu_gconv_bn.1} parent=15 // pred_check
        %p241 = pneg %p136
      $region34: #{bn_relu_gconv_bn.1} parent=15 // pred_check_branch
        %243 = sbr.rel (%p241) target = $region36
      $region35: #{bn_relu_gconv_bn.1} parent=15 // pred_region
        %p244 = scmp.lt.s32.totalorder %s12, 6
        %s245 = scalar_select %p244, %s12, 6
        %s246 = scalar_lea.vmem %s4, %s245
      $region36: #{bn_relu_gconv_bn.1} parent=15 // pred_fallthru
        _
      // Predicated region
      $region37: #{bn_relu_gconv_bn.1} parent=15 // pred_check
        %p247 = pneg %p162
      $region38: #{bn_relu_gconv_bn.1} parent=15 // pred_check_branch
        %249 = sbr.rel (%p247) target = $region40
      $region39: #{bn_relu_gconv_bn.1} parent=15 // pred_region
        %p250 = scmp.lt.s32.totalorder %s12, 6
        %s251 = scalar_select %p250, %s12, 6
        %s252 = scalar_lea.vmem %s5, %s251
      $region40: #{bn_relu_gconv_bn.1} parent=15 // pred_fallthru
        _
    $region16: #{bn_relu_gconv_bn.1} parent=5 // pred_fallthru
      _
    %p253 = scmp.le.s32.totalorder 1, %s12
    %p254 = scmp.lt.s32.totalorder %s12, 8
    %p255 = pnand %p253, %p254
    %p256 = pneg %p255
    // Predicated region
    $region41: #{bn_relu_gconv_bn.1} parent=5 // pred_check
      _
    $region42: #{bn_relu_gconv_bn.1} parent=5 // pred_check_branch
      %258 = sbr.rel (%p255) target = $region44
    $region43: #{bn_relu_gconv_bn.1} parent=5 // pred_region
      %s259 = ssub.s32 %s12, 1
      %p260 = scmp.lt.s32.totalorder %s17, 6
      %s261 = scalar_select %p260, %s17, 6
      %s262 = smul.addr %s261, 64
      %s263 = smul.addr %s262, 8
      %s264 = scalar_lea.vmem %s0, %s263
      %p265 = pneg %p38
      %p266 = pneg %p35
      %p267 = scmp.lt.s32.totalorder %s17, 6
      %s268 = scalar_select %p267, %s17, 6
      %s269 = smul.addr %s268, 144
      %s270 = smul.addr %s269, 4
      %s271 = scalar_lea.vmem %s1, %s270
      %p272 = pneg %p64
      %p273 = pneg %p61
      %p274 = scmp.lt.s32.totalorder %s17, 6
      %s275 = scalar_select %p274, %s17, 6
      %s276 = scalar_lea.vmem %s2, %s275
      %p277 = pneg %p90
      %p278 = pneg %p87
      %p279 = scmp.lt.s32.totalorder %s17, 6
      %s280 = scalar_select %p279, %s17, 6
      %s281 = scalar_lea.vmem %s3, %s280
      %p282 = pneg %p116
      %p283 = pneg %p113
      %p284 = scmp.lt.s32.totalorder %s17, 6
      %s285 = scalar_select %p284, %s17, 6
      %s286 = scalar_lea.vmem %s4, %s285
      %p287 = pneg %p142
      %p288 = pneg %p139
      %p289 = scmp.lt.s32.totalorder %s17, 6
      %s290 = scalar_select %p289, %s17, 6
      %s291 = scalar_lea.vmem %s5, %s290
      %p292 = pneg %p168
      %p293 = pneg %p165
      %p294 = pneg %p194
      %p295 = pneg %p191
      %p296 = scmp.lt.s32.totalorder %s17, 6
      %s297 = scalar_select %p296, %s17, 6
      %s298 = smul.addr %s297, 16
      %s299 = smul.addr %s298, 8
      %s300 = scalar_lea.vmem %s6, %s299
      %p301 = scmp.lt.s32.totalorder %s17, 6
      %s302 = scalar_select %p301, %s17, 6
      %s303 = smul.addr %s302, 64
      %s304 = smul.addr %s303, 8
      %s305 = scalar_lea.vmem %s0, %s304
      %p306 = scmp.lt.s32.totalorder %s17, 6
      %s307 = scalar_select %p306, %s17, 6
      %s308 = smul.addr %s307, 144
      %s309 = smul.addr %s308, 4
      %s310 = scalar_lea.vmem %s1, %s309
      %p311 = scmp.lt.s32.totalorder %s17, 6
      %s312 = scalar_select %p311, %s17, 6
      %s313 = scalar_lea.vmem %s2, %s312
      %p314 = scmp.lt.s32.totalorder %s17, 6
      %s315 = scalar_select %p314, %s17, 6
      %s316 = scalar_lea.vmem %s3, %s315
      %p317 = scmp.lt.s32.totalorder %s17, 6
      %s318 = scalar_select %p317, %s17, 6
      %s319 = scalar_lea.vmem %s4, %s318
      %p320 = scmp.lt.s32.totalorder %s17, 6
      %s321 = scalar_select %p320, %s17, 6
      %s322 = scalar_lea.vmem %s5, %s321
      %p323 = scmp.lt.s32.totalorder %s17, 6
      %s324 = scalar_select %p323, %s17, 6
      %s325 = smul.addr %s324, 16
      %s326 = smul.addr %s325, 8
      %s327 = scalar_lea.vmem %s6, %s326
      %v329 = vld [vmem:[%s305] ss:$2 sm:$0xff]
      %s330 = scalar_lea.vmem %s305, 16
      %v331 = vld [vmem:[%s330] ss:$2 sm:$0xff]
      %s332 = scalar_lea.vmem %s305, 32
      %v333 = vld [vmem:[%s332] ss:$2 sm:$0xff]
      %s334 = scalar_lea.vmem %s305, 48
      %v335 = vld [vmem:[%s334] ss:$2 sm:$0xff]
      %s336 = scalar_lea.vmem %s305, 64
      %v337 = vld [vmem:[%s336] ss:$2 sm:$0xff]
      %s338 = scalar_lea.vmem %s305, 80
      %v339 = vld [vmem:[%s338] ss:$2 sm:$0xff]
      %s340 = scalar_lea.vmem %s305, 96
      %v341 = vld [vmem:[%s340] ss:$2 sm:$0xff]
      %s342 = scalar_lea.vmem %s305, 112
      %v343 = vld [vmem:[%s342] ss:$2 sm:$0xff]
      %s344 = scalar_lea.vmem %s305, 128
      %v345 = vld [vmem:[%s344] ss:$2 sm:$0xff]
      %s346 = scalar_lea.vmem %s305, 144
      %v347 = vld [vmem:[%s346] ss:$2 sm:$0xff]
      %s348 = scalar_lea.vmem %s305, 160
      %v349 = vld [vmem:[%s348] ss:$2 sm:$0xff]
      %s350 = scalar_lea.vmem %s305, 176
      %v351 = vld [vmem:[%s350] ss:$2 sm:$0xff]
      %s352 = scalar_lea.vmem %s305, 192
      %v353 = vld [vmem:[%s352] ss:$2 sm:$0xff]
      %s354 = scalar_lea.vmem %s305, 208
      %v355 = vld [vmem:[%s354] ss:$2 sm:$0xff]
      %s356 = scalar_lea.vmem %s305, 224
      %v357 = vld [vmem:[%s356] ss:$2 sm:$0xff]
      %s358 = scalar_lea.vmem %s305, 240
      %v359 = vld [vmem:[%s358] ss:$2 sm:$0xff]
      %s360 = scalar_lea.vmem %s305, 256
      %v361 = vld [vmem:[%s360] ss:$2 sm:$0xff]
      %s362 = scalar_lea.vmem %s305, 272
      %v363 = vld [vmem:[%s362] ss:$2 sm:$0xff]
      %s364 = scalar_lea.vmem %s305, 288
      %v365 = vld [vmem:[%s364] ss:$2 sm:$0xff]
      %s366 = scalar_lea.vmem %s305, 304
      %v367 = vld [vmem:[%s366] ss:$2 sm:$0xff]
      %s368 = scalar_lea.vmem %s305, 320
      %v369 = vld [vmem:[%s368] ss:$2 sm:$0xff]
      %s370 = scalar_lea.vmem %s305, 336
      %v371 = vld [vmem:[%s370] ss:$2 sm:$0xff]
      %s372 = scalar_lea.vmem %s305, 352
      %v373 = vld [vmem:[%s372] ss:$2 sm:$0xff]
      %s374 = scalar_lea.vmem %s305, 368
      %v375 = vld [vmem:[%s374] ss:$2 sm:$0xff]
      %s376 = scalar_lea.vmem %s305, 384
      %v377 = vld [vmem:[%s376] ss:$2 sm:$0xff]
      %s378 = scalar_lea.vmem %s305, 400
      %v379 = vld [vmem:[%s378] ss:$2 sm:$0xff]
      %s380 = scalar_lea.vmem %s305, 416
      %v381 = vld [vmem:[%s380] ss:$2 sm:$0xff]
      %s382 = scalar_lea.vmem %s305, 432
      %v383 = vld [vmem:[%s382] ss:$2 sm:$0xff]
      %s384 = scalar_lea.vmem %s305, 448
      %v385 = vld [vmem:[%s384] ss:$2 sm:$0xff]
      %s386 = scalar_lea.vmem %s305, 464
      %v387 = vld [vmem:[%s386] ss:$2 sm:$0xff]
      %s388 = scalar_lea.vmem %s305, 480
      %v389 = vld [vmem:[%s388] ss:$2 sm:$0xff]
      %s390 = scalar_lea.vmem %s305, 496
      %v391 = vld [vmem:[%s390] ss:$2 sm:$0xff]
      %s392 = scalar_lea.vmem %s305, 1
      %v393 = vld [vmem:[%s392] ss:$2 sm:$0xff]
      %s394 = scalar_lea.vmem %s305, 17
      %v395 = vld [vmem:[%s394] ss:$2 sm:$0xff]
      %s396 = scalar_lea.vmem %s305, 33
      %v397 = vld [vmem:[%s396] ss:$2 sm:$0xff]
      %s398 = scalar_lea.vmem %s305, 49
      %v399 = vld [vmem:[%s398] ss:$2 sm:$0xff]
      %s400 = scalar_lea.vmem %s305, 65
      %v401 = vld [vmem:[%s400] ss:$2 sm:$0xff]
      %s402 = scalar_lea.vmem %s305, 81
      %v403 = vld [vmem:[%s402] ss:$2 sm:$0xff]
      %s404 = scalar_lea.vmem %s305, 97
      %v405 = vld [vmem:[%s404] ss:$2 sm:$0xff]
      %s406 = scalar_lea.vmem %s305, 113
      %v407 = vld [vmem:[%s406] ss:$2 sm:$0xff]
      %s408 = scalar_lea.vmem %s305, 129
      %v409 = vld [vmem:[%s408] ss:$2 sm:$0xff]
      %s410 = scalar_lea.vmem %s305, 145
      %v411 = vld [vmem:[%s410] ss:$2 sm:$0xff]
      %s412 = scalar_lea.vmem %s305, 161
      %v413 = vld [vmem:[%s412] ss:$2 sm:$0xff]
      %s414 = scalar_lea.vmem %s305, 177
      %v415 = vld [vmem:[%s414] ss:$2 sm:$0xff]
      %s416 = scalar_lea.vmem %s305, 193
      %v417 = vld [vmem:[%s416] ss:$2 sm:$0xff]
      %s418 = scalar_lea.vmem %s305, 209
      %v419 = vld [vmem:[%s418] ss:$2 sm:$0xff]
      %s420 = scalar_lea.vmem %s305, 225
      %v421 = vld [vmem:[%s420] ss:$2 sm:$0xff]
      %s422 = scalar_lea.vmem %s305, 241
      %v423 = vld [vmem:[%s422] ss:$2 sm:$0xff]
      %s424 = scalar_lea.vmem %s305, 257
      %v425 = vld [vmem:[%s424] ss:$2 sm:$0xff]
      %s426 = scalar_lea.vmem %s305, 273
      %v427 = vld [vmem:[%s426] ss:$2 sm:$0xff]
      %s428 = scalar_lea.vmem %s305, 289
      %v429 = vld [vmem:[%s428] ss:$2 sm:$0xff]
      %s430 = scalar_lea.vmem %s305, 305
      %v431 = vld [vmem:[%s430] ss:$2 sm:$0xff]
      %s432 = scalar_lea.vmem %s305, 321
      %v433 = vld [vmem:[%s432] ss:$2 sm:$0xff]
      %s434 = scalar_lea.vmem %s305, 337
      %v435 = vld [vmem:[%s434] ss:$2 sm:$0xff]
      %s436 = scalar_lea.vmem %s305, 353
      %v437 = vld [vmem:[%s436] ss:$2 sm:$0xff]
      %s438 = scalar_lea.vmem %s305, 369
      %v439 = vld [vmem:[%s438] ss:$2 sm:$0xff]
      %s440 = scalar_lea.vmem %s305, 385
      %v441 = vld [vmem:[%s440] ss:$2 sm:$0xff]
      %s442 = scalar_lea.vmem %s305, 401
      %v443 = vld [vmem:[%s442] ss:$2 sm:$0xff]
      %s444 = scalar_lea.vmem %s305, 417
      %v445 = vld [vmem:[%s444] ss:$2 sm:$0xff]
      %s446 = scalar_lea.vmem %s305, 433
      %v447 = vld [vmem:[%s446] ss:$2 sm:$0xff]
      %s448 = scalar_lea.vmem %s305, 449
      %v449 = vld [vmem:[%s448] ss:$2 sm:$0xff]
      %s450 = scalar_lea.vmem %s305, 465
      %v451 = vld [vmem:[%s450] ss:$2 sm:$0xff]
      %s452 = scalar_lea.vmem %s305, 481
      %v453 = vld [vmem:[%s452] ss:$2 sm:$0xff]
      %s454 = scalar_lea.vmem %s305, 497
      %v455 = vld [vmem:[%s454] ss:$2 sm:$0xff]
      %v456 = vadd.f32 %v329, %v331
      %v457 = vadd.f32 %v456, %v333
      %v458 = vadd.f32 %v457, %v335
      %v459 = vadd.f32 %v458, %v337
      %v460 = vadd.f32 %v459, %v339
      %v461 = vadd.f32 %v460, %v341
      %v462 = vadd.f32 %v461, %v343
      %v463 = vadd.f32 %v462, %v345
      %v464 = vadd.f32 %v463, %v347
      %v465 = vadd.f32 %v464, %v349
      %v466 = vadd.f32 %v465, %v351
      %v467 = vadd.f32 %v466, %v353
      %v468 = vadd.f32 %v467, %v355
      %v469 = vadd.f32 %v468, %v357
      %v470 = vadd.f32 %v469, %v359
      %v471 = vadd.f32 %v470, %v361
      %v472 = vadd.f32 %v471, %v363
      %v473 = vadd.f32 %v472, %v365
      %v474 = vadd.f32 %v473, %v367
      %v475 = vadd.f32 %v474, %v369
      %v476 = vadd.f32 %v475, %v371
      %v477 = vadd.f32 %v476, %v373
      %v478 = vadd.f32 %v477, %v375
      %v479 = vadd.f32 %v478, %v377
      %v480 = vadd.f32 %v479, %v379
      %v481 = vadd.f32 %v480, %v381
      %v482 = vadd.f32 %v481, %v383
      %v483 = vadd.f32 %v482, %v385
      %v484 = vadd.f32 %v483, %v387
      %v485 = vadd.f32 %v484, %v389
      %v486 = vadd.f32 %v485, %v391
      %v487 = vrot.slane %v486, 4
      %v488 = vadd.f32 %v486, %v487
      %v489 = vrot.slane %v488, 2
      %v490 = vadd.f32 %v488, %v489
      %v491 = vrot.slane %v490, 1
      %v492 = vadd.f32 %v490, %v491
      %v493 = vadd.f32 %v393, %v395
      %v494 = vadd.f32 %v493, %v397
      %v495 = vadd.f32 %v494, %v399
      %v496 = vadd.f32 %v495, %v401
      %v497 = vadd.f32 %v496, %v403
      %v498 = vadd.f32 %v497, %v405
      %v499 = vadd.f32 %v498, %v407
      %v500 = vadd.f32 %v499, %v409
      %v501 = vadd.f32 %v500, %v411
      %v502 = vadd.f32 %v501, %v413
      %v503 = vadd.f32 %v502, %v415
      %v504 = vadd.f32 %v503, %v417
      %v505 = vadd.f32 %v504, %v419
      %v506 = vadd.f32 %v505, %v421
      %v507 = vadd.f32 %v506, %v423
      %v508 = vadd.f32 %v507, %v425
      %v509 = vadd.f32 %v508, %v427
      %v510 = vadd.f32 %v509, %v429
      %v511 = vadd.f32 %v510, %v431
      %v512 = vadd.f32 %v511, %v433
      %v513 = vadd.f32 %v512, %v435
      %v514 = vadd.f32 %v513, %v437
      %v515 = vadd.f32 %v514, %v439
      %v516 = vadd.f32 %v515, %v441
      %v517 = vadd.f32 %v516, %v443
      %v518 = vadd.f32 %v517, %v445
      %v519 = vadd.f32 %v518, %v447
      %v520 = vadd.f32 %v519, %v449
      %v521 = vadd.f32 %v520, %v451
      %v522 = vadd.f32 %v521, %v453
      %v523 = vadd.f32 %v522, %v455
      %v524 = vrot.slane %v523, 4
      %v525 = vadd.f32 %v523, %v524
      %v526 = vrot.slane %v525, 2
      %v527 = vadd.f32 %v525, %v526
      %v528 = vrot.slane %v527, 1
      %v529 = vadd.f32 %v527, %v528
      %v530 = vadd.f32 %v492, %v529
      %v531 = vmul.f32 %v329, %v329
      %v532 = vmul.f32 %v331, %v331
      %v533 = vmul.f32 %v333, %v333
      %v534 = vmul.f32 %v335, %v335
      %v535 = vmul.f32 %v337, %v337
      %v536 = vmul.f32 %v339, %v339
      %v537 = vmul.f32 %v341, %v341
      %v538 = vmul.f32 %v343, %v343
      %v539 = vmul.f32 %v345, %v345
      %v540 = vmul.f32 %v347, %v347
      %v541 = vmul.f32 %v349, %v349
      %v542 = vmul.f32 %v351, %v351
      %v543 = vmul.f32 %v353, %v353
      %v544 = vmul.f32 %v355, %v355
      %v545 = vmul.f32 %v357, %v357
      %v546 = vmul.f32 %v359, %v359
      %v547 = vmul.f32 %v361, %v361
      %v548 = vmul.f32 %v363, %v363
      %v549 = vmul.f32 %v365, %v365
      %v550 = vmul.f32 %v367, %v367
      %v551 = vmul.f32 %v369, %v369
      %v552 = vmul.f32 %v371, %v371
      %v553 = vmul.f32 %v373, %v373
      %v554 = vmul.f32 %v375, %v375
      %v555 = vmul.f32 %v377, %v377
      %v556 = vmul.f32 %v379, %v379
      %v557 = vmul.f32 %v381, %v381
      %v558 = vmul.f32 %v383, %v383
      %v559 = vmul.f32 %v385, %v385
      %v560 = vmul.f32 %v387, %v387
      %v561 = vmul.f32 %v389, %v389
      %v562 = vmul.f32 %v391, %v391
      %v563 = vadd.f32 %v531, %v532
      %v564 = vadd.f32 %v563, %v533
      %v565 = vadd.f32 %v564, %v534
      %v566 = vadd.f32 %v565, %v535
      %v567 = vadd.f32 %v566, %v536
      %v568 = vadd.f32 %v567, %v537
      %v569 = vadd.f32 %v568, %v538
      %v570 = vadd.f32 %v569, %v539
      %v571 = vadd.f32 %v570, %v540
      %v572 = vadd.f32 %v571, %v541
      %v573 = vadd.f32 %v572, %v542
      %v574 = vadd.f32 %v573, %v543
      %v575 = vadd.f32 %v574, %v544
      %v576 = vadd.f32 %v575, %v545
      %v577 = vadd.f32 %v576, %v546
      %v578 = vadd.f32 %v577, %v547
      %v579 = vadd.f32 %v578, %v548
      %v580 = vadd.f32 %v579, %v549
      %v581 = vadd.f32 %v580, %v550
      %v582 = vadd.f32 %v581, %v551
      %v583 = vadd.f32 %v582, %v552
      %v584 = vadd.f32 %v583, %v553
      %v585 = vadd.f32 %v584, %v554
      %v586 = vadd.f32 %v585, %v555
      %v587 = vadd.f32 %v586, %v556
      %v588 = vadd.f32 %v587, %v557
      %v589 = vadd.f32 %v588, %v558
      %v590 = vadd.f32 %v589, %v559
      %v591 = vadd.f32 %v590, %v560
      %v592 = vadd.f32 %v591, %v561
      %v593 = vadd.f32 %v592, %v562
      %v594 = vrot.slane %v593, 4
      %v595 = vadd.f32 %v593, %v594
      %v596 = vrot.slane %v595, 2
      %v597 = vadd.f32 %v595, %v596
      %v598 = vrot.slane %v597, 1
      %v599 = vadd.f32 %v597, %v598
      %v600 = vmul.f32 %v393, %v393
      %v601 = vmul.f32 %v395, %v395
      %v602 = vmul.f32 %v397, %v397
      %v603 = vmul.f32 %v399, %v399
      %v604 = vmul.f32 %v401, %v401
      %v605 = vmul.f32 %v403, %v403
      %v606 = vmul.f32 %v405, %v405
      %v607 = vmul.f32 %v407, %v407
      %v608 = vmul.f32 %v409, %v409
      %v609 = vmul.f32 %v411, %v411
      %v610 = vmul.f32 %v413, %v413
      %v611 = vmul.f32 %v415, %v415
      %v612 = vmul.f32 %v417, %v417
      %v613 = vmul.f32 %v419, %v419
      %v614 = vmul.f32 %v421, %v421
      %v615 = vmul.f32 %v423, %v423
      %v616 = vmul.f32 %v425, %v425
      %v617 = vmul.f32 %v427, %v427
      %v618 = vmul.f32 %v429, %v429
      %v619 = vmul.f32 %v431, %v431
      %v620 = vmul.f32 %v433, %v433
      %v621 = vmul.f32 %v435, %v435
      %v622 = vmul.f32 %v437, %v437
      %v623 = vmul.f32 %v439, %v439
      %v624 = vmul.f32 %v441, %v441
      %v625 = vmul.f32 %v443, %v443
      %v626 = vmul.f32 %v445, %v445
      %v627 = vmul.f32 %v447, %v447
      %v628 = vmul.f32 %v449, %v449
      %v629 = vmul.f32 %v451, %v451
      %v630 = vmul.f32 %v453, %v453
      %v631 = vmul.f32 %v455, %v455
      %v632 = vadd.f32 %v600, %v601
      %v633 = vadd.f32 %v632, %v602
      %v634 = vadd.f32 %v633, %v603
      %v635 = vadd.f32 %v634, %v604
      %v636 = vadd.f32 %v635, %v605
      %v637 = vadd.f32 %v636, %v606
      %v638 = vadd.f32 %v637, %v607
      %v639 = vadd.f32 %v638, %v608
      %v640 = vadd.f32 %v639, %v609
      %v641 = vadd.f32 %v640, %v610
      %v642 = vadd.f32 %v641, %v611
      %v643 = vadd.f32 %v642, %v612
      %v644 = vadd.f32 %v643, %v613
      %v645 = vadd.f32 %v644, %v614
      %v646 = vadd.f32 %v645, %v615
      %v647 = vadd.f32 %v646, %v616
      %v648 = vadd.f32 %v647, %v617
      %v649 = vadd.f32 %v648, %v618
      %v650 = vadd.f32 %v649, %v619
      %v651 = vadd.f32 %v650, %v620
      %v652 = vadd.f32 %v651, %v621
      %v653 = vadd.f32 %v652, %v622
      %v654 = vadd.f32 %v653, %v623
      %v655 = vadd.f32 %v654, %v624
      %v656 = vadd.f32 %v655, %v625
      %v657 = vadd.f32 %v656, %v626
      %v658 = vadd.f32 %v657, %v627
      %v659 = vadd.f32 %v658, %v628
      %v660 = vadd.f32 %v659, %v629
      %v661 = vadd.f32 %v660, %v630
      %v662 = vadd.f32 %v661, %v631
      %v663 = vrot.slane %v662, 4
      %v664 = vadd.f32 %v662, %v663
      %v665 = vrot.slane %v664, 2
      %v666 = vadd.f32 %v664, %v665
      %v667 = vrot.slane %v666, 1
      %v668 = vadd.f32 %v666, %v667
      %v669 = vadd.f32 %v599, %v668
      %v670 = vrcp.pop 512.0
      %v671 = vmul.f32 %v530, %v670
      %v672 = vmul.f32 %v669, %v670
      %v673 = vmul.f32 %v671, %v671
      %v674 = vsub.f32 %v672, %v673
      %v675 = vld [vmem:[%s313] sm:$0x1]
      %v676 = vld [vmem:[%s316] sm:$0x1]
      %v677 = vadd.f32 %v674, 1e-05
      %v678 = vrsqrt.pop %v677
      %v679 = vmul.f32 %v675, %v678
      %v680 = vmul.f32 %v671, %v679
      %v681 = vsub.f32 %v676, %v680
      %682 = vst [vmem:[#allocation2] sm:$0xff] 0.0
      %683 = vst [vmem:[#allocation2 + $0x8] sm:$0x1] 0.0
      %684 = vst [vmem:[#allocation2 + $0x110] sm:$0xff] 0.0
      %685 = vst [vmem:[#allocation2 + $0x118] sm:$0x1] 0.0
      %686 = vst [vmem:[#allocation2] sm:$0x1] 0.0
      %687 = vst [vmem:[#allocation2 + $0x10] sm:$0x1] 0.0
      %688 = vst [vmem:[#allocation2 + $0x20] sm:$0x1] 0.0
      %689 = vst [vmem:[#allocation2 + $0x30] sm:$0x1] 0.0
      %690 = vst [vmem:[#allocation2 + $0x40] sm:$0x1] 0.0
      %691 = vst [vmem:[#allocation2 + $0x50] sm:$0x1] 0.0
      %692 = vst [vmem:[#allocation2 + $0x60] sm:$0x1] 0.0
      %693 = vst [vmem:[#allocation2 + $0x70] sm:$0x1] 0.0
      %694 = vst [vmem:[#allocation2 + $0x80] sm:$0x1] 0.0
      %695 = vst [vmem:[#allocation2 + $0x90] sm:$0x1] 0.0
      %696 = vst [vmem:[#allocation2 + $0xa0] sm:$0x1] 0.0
      %697 = vst [vmem:[#allocation2 + $0xb0] sm:$0x1] 0.0
      %698 = vst [vmem:[#allocation2 + $0xc0] sm:$0x1] 0.0
      %699 = vst [vmem:[#allocation2 + $0xd0] sm:$0x1] 0.0
      %700 = vst [vmem:[#allocation2 + $0xe0] sm:$0x1] 0.0
      %701 = vst [vmem:[#allocation2 + $0xf0] sm:$0x1] 0.0
      %702 = vst [vmem:[#allocation2 + $0x100] sm:$0x1] 0.0
      %703 = vst [vmem:[#allocation2 + $0x110] sm:$0x1] 0.0
      %704 = vst [vmem:[#allocation2 + $0x120] sm:$0x1] 0.0
      %705 = vst [vmem:[#allocation2 + $0x130] sm:$0x1] 0.0
      %706 = vst [vmem:[#allocation2 + $0x140] sm:$0x1] 0.0
      %707 = vst [vmem:[#allocation2 + $0x150] sm:$0x1] 0.0
      %708 = vst [vmem:[#allocation2 + $0x160] sm:$0x1] 0.0
      %709 = vst [vmem:[#allocation2 + $0x170] sm:$0x1] 0.0
      %710 = vst [vmem:[#allocation2 + $0x180] sm:$0x1] 0.0
      %711 = vst [vmem:[#allocation2 + $0x190] sm:$0x1] 0.0
      %712 = vst [vmem:[#allocation2 + $0x1a0] sm:$0x1] 0.0
      %713 = vst [vmem:[#allocation2 + $0x1b0] sm:$0x1] 0.0
      %714 = vst [vmem:[#allocation2 + $0x1c0] sm:$0x1] 0.0
      %715 = vst [vmem:[#allocation2 + $0x1d0] sm:$0x1] 0.0
      %716 = vst [vmem:[#allocation2 + $0x1e0] sm:$0x1] 0.0
      %717 = vst [vmem:[#allocation2 + $0x1f0] sm:$0x1] 0.0
      %718 = vst [vmem:[#allocation2 + $0x200] sm:$0x1] 0.0
      %719 = vst [vmem:[#allocation2 + $0x210] sm:$0x1] 0.0
      %720 = vst [vmem:[#allocation3] sm:$0xff] 0.0
      %721 = vst [vmem:[#allocation3 + $0x88] sm:$0xff] 0.0
      %v723 = vlaneseq
      %v724 = vshrl.u32 %v723, 7
      %v725 = vsub.s32 0, %v724
      %v726 = vrot.slane %v679, %v725
      %v728 = vmul.f32 %v393, %v726
      %v729 = vmul.f32 %v395, %v726
      %v730 = vmul.f32 %v397, %v726
      %v731 = vmul.f32 %v399, %v726
      %v732 = vmul.f32 %v401, %v726
      %v733 = vmul.f32 %v403, %v726
      %v734 = vmul.f32 %v405, %v726
      %v735 = vmul.f32 %v407, %v726
      %v736 = vmul.f32 %v409, %v726
      %v737 = vmul.f32 %v411, %v726
      %v738 = vmul.f32 %v413, %v726
      %v739 = vmul.f32 %v415, %v726
      %v740 = vmul.f32 %v417, %v726
      %v741 = vmul.f32 %v419, %v726
      %v742 = vmul.f32 %v421, %v726
      %v743 = vmul.f32 %v423, %v726
      %v744 = vmul.f32 %v425, %v726
      %v745 = vmul.f32 %v427, %v726
      %v746 = vmul.f32 %v429, %v726
      %v747 = vmul.f32 %v431, %v726
      %v748 = vmul.f32 %v433, %v726
      %v749 = vmul.f32 %v435, %v726
      %v750 = vmul.f32 %v437, %v726
      %v751 = vmul.f32 %v439, %v726
      %v752 = vmul.f32 %v441, %v726
      %v753 = vmul.f32 %v443, %v726
      %v754 = vmul.f32 %v445, %v726
      %v755 = vmul.f32 %v447, %v726
      %v756 = vmul.f32 %v449, %v726
      %v757 = vmul.f32 %v451, %v726
      %v758 = vmul.f32 %v453, %v726
      %v759 = vmul.f32 %v455, %v726
      %v761 = vlaneseq
      %v762 = vshrl.u32 %v761, 7
      %v763 = vsub.s32 0, %v762
      %v764 = vrot.slane %v681, %v763
      %v766 = vadd.f32 %v728, %v764
      %v767 = vadd.f32 %v729, %v764
      %v768 = vadd.f32 %v730, %v764
      %v769 = vadd.f32 %v731, %v764
      %v770 = vadd.f32 %v732, %v764
      %v771 = vadd.f32 %v733, %v764
      %v772 = vadd.f32 %v734, %v764
      %v773 = vadd.f32 %v735, %v764
      %v774 = vadd.f32 %v736, %v764
      %v775 = vadd.f32 %v737, %v764
      %v776 = vadd.f32 %v738, %v764
      %v777 = vadd.f32 %v739, %v764
      %v778 = vadd.f32 %v740, %v764
      %v779 = vadd.f32 %v741, %v764
      %v780 = vadd.f32 %v742, %v764
      %v781 = vadd.f32 %v743, %v764
      %v782 = vadd.f32 %v744, %v764
      %v783 = vadd.f32 %v745, %v764
      %v784 = vadd.f32 %v746, %v764
      %v785 = vadd.f32 %v747, %v764
      %v786 = vadd.f32 %v748, %v764
      %v787 = vadd.f32 %v749, %v764
      %v788 = vadd.f32 %v750, %v764
      %v789 = vadd.f32 %v751, %v764
      %v790 = vadd.f32 %v752, %v764
      %v791 = vadd.f32 %v753, %v764
      %v792 = vadd.f32 %v754, %v764
      %v793 = vadd.f32 %v755, %v764
      %v794 = vadd.f32 %v756, %v764
      %v795 = vadd.f32 %v757, %v764
      %v796 = vadd.f32 %v758, %v764
      %v797 = vadd.f32 %v759, %v764
      %v798 = vmax.f32 %v766, 0.0
      %v799 = vmax.f32 %v767, 0.0
      %v800 = vmax.f32 %v768, 0.0
      %v801 = vmax.f32 %v769, 0.0
      %v802 = vmax.f32 %v770, 0.0
      %v803 = vmax.f32 %v771, 0.0
      %v804 = vmax.f32 %v772, 0.0
      %v805 = vmax.f32 %v773, 0.0
      %v806 = vmax.f32 %v774, 0.0
      %v807 = vmax.f32 %v775, 0.0
      %v808 = vmax.f32 %v776, 0.0
      %v809 = vmax.f32 %v777, 0.0
      %v810 = vmax.f32 %v778, 0.0
      %v811 = vmax.f32 %v779, 0.0
      %v812 = vmax.f32 %v780, 0.0
      %v813 = vmax.f32 %v781, 0.0
      %v814 = vmax.f32 %v782, 0.0
      %v815 = vmax.f32 %v783, 0.0
      %v816 = vmax.f32 %v784, 0.0
      %v817 = vmax.f32 %v785, 0.0
      %v818 = vmax.f32 %v786, 0.0
      %v819 = vmax.f32 %v787, 0.0
      %v820 = vmax.f32 %v788, 0.0
      %v821 = vmax.f32 %v789, 0.0
      %v822 = vmax.f32 %v790, 0.0
      %v823 = vmax.f32 %v791, 0.0
      %v824 = vmax.f32 %v792, 0.0
      %v825 = vmax.f32 %v793, 0.0
      %v826 = vmax.f32 %v794, 0.0
      %v827 = vmax.f32 %v795, 0.0
      %v828 = vmax.f32 %v796, 0.0
      %v829 = vmax.f32 %v797, 0.0
      %s830 = scalar_lea.vmem [#allocation2], 16
      %831 = vst [vmem:[%s830 + $0x1] sm:$0xff] %v798
      %832 = vst [vmem:[%s830 + $0x11] sm:$0xff] %v799
      %833 = vst [vmem:[%s830 + $0x21] sm:$0xff] %v800
      %834 = vst [vmem:[%s830 + $0x31] sm:$0xff] %v801
      %835 = vst [vmem:[%s830 + $0x41] sm:$0xff] %v802
      %836 = vst [vmem:[%s830 + $0x51] sm:$0xff] %v803
      %837 = vst [vmem:[%s830 + $0x61] sm:$0xff] %v804
      %838 = vst [vmem:[%s830 + $0x71] sm:$0xff] %v805
      %839 = vst [vmem:[%s830 + $0x81] sm:$0xff] %v806
      %840 = vst [vmem:[%s830 + $0x91] sm:$0xff] %v807
      %841 = vst [vmem:[%s830 + $0xa1] sm:$0xff] %v808
      %842 = vst [vmem:[%s830 + $0xb1] sm:$0xff] %v809
      %843 = vst [vmem:[%s830 + $0xc1] sm:$0xff] %v810
      %844 = vst [vmem:[%s830 + $0xd1] sm:$0xff] %v811
      %845 = vst [vmem:[%s830 + $0xe1] sm:$0xff] %v812
      %846 = vst [vmem:[%s830 + $0xf1] sm:$0xff] %v813
      %847 = vst [vmem:[%s830 + $0x111] sm:$0xff] %v814
      %848 = vst [vmem:[%s830 + $0x121] sm:$0xff] %v815
      %849 = vst [vmem:[%s830 + $0x131] sm:$0xff] %v816
      %850 = vst [vmem:[%s830 + $0x141] sm:$0xff] %v817
      %851 = vst [vmem:[%s830 + $0x151] sm:$0xff] %v818
      %852 = vst [vmem:[%s830 + $0x161] sm:$0xff] %v819
      %853 = vst [vmem:[%s830 + $0x171] sm:$0xff] %v820
      %854 = vst [vmem:[%s830 + $0x181] sm:$0xff] %v821
      %855 = vst [vmem:[%s830 + $0x191] sm:$0xff] %v822
      %856 = vst [vmem:[%s830 + $0x1a1] sm:$0xff] %v823
      %857 = vst [vmem:[%s830 + $0x1b1] sm:$0xff] %v824
      %858 = vst [vmem:[%s830 + $0x1c1] sm:$0xff] %v825
      %859 = vst [vmem:[%s830 + $0x1d1] sm:$0xff] %v826
      %860 = vst [vmem:[%s830 + $0x1e1] sm:$0xff] %v827
      %861 = vst [vmem:[%s830 + $0x1f1] sm:$0xff] %v828
      %862 = vst [vmem:[%s830 + $0x201] sm:$0xff] %v829
      %v863 = vmul.f32 %v329, %v726
      %v864 = vmul.f32 %v331, %v726
      %v865 = vmul.f32 %v333, %v726
      %v866 = vmul.f32 %v335, %v726
      %v867 = vmul.f32 %v337, %v726
      %v868 = vmul.f32 %v339, %v726
      %v869 = vmul.f32 %v341, %v726
      %v870 = vmul.f32 %v343, %v726
      %v871 = vmul.f32 %v345, %v726
      %v872 = vmul.f32 %v347, %v726
      %v873 = vmul.f32 %v349, %v726
      %v874 = vmul.f32 %v351, %v726
      %v875 = vmul.f32 %v353, %v726
      %v876 = vmul.f32 %v355, %v726
      %v877 = vmul.f32 %v357, %v726
      %v878 = vmul.f32 %v359, %v726
      %v879 = vmul.f32 %v361, %v726
      %v880 = vmul.f32 %v363, %v726
      %v881 = vmul.f32 %v365, %v726
      %v882 = vmul.f32 %v367, %v726
      %v883 = vmul.f32 %v369, %v726
      %v884 = vmul.f32 %v371, %v726
      %v885 = vmul.f32 %v373, %v726
      %v886 = vmul.f32 %v375, %v726
      %v887 = vmul.f32 %v377, %v726
      %v888 = vmul.f32 %v379, %v726
      %v889 = vmul.f32 %v381, %v726
      %v890 = vmul.f32 %v383, %v726
      %v891 = vmul.f32 %v385, %v726
      %v892 = vmul.f32 %v387, %v726
      %v893 = vmul.f32 %v389, %v726
      %v894 = vmul.f32 %v391, %v726
      %v895 = vadd.f32 %v863, %v764
      %v896 = vadd.f32 %v864, %v764
      %v897 = vadd.f32 %v865, %v764
      %v898 = vadd.f32 %v866, %v764
      %v899 = vadd.f32 %v867, %v764
      %v900 = vadd.f32 %v868, %v764
      %v901 = vadd.f32 %v869, %v764
      %v902 = vadd.f32 %v870, %v764
      %v903 = vadd.f32 %v871, %v764
      %v904 = vadd.f32 %v872, %v764
      %v905 = vadd.f32 %v873, %v764
      %v906 = vadd.f32 %v874, %v764
      %v907 = vadd.f32 %v875, %v764
      %v908 = vadd.f32 %v876, %v764
      %v909 = vadd.f32 %v877, %v764
      %v910 = vadd.f32 %v878, %v764
      %v911 = vadd.f32 %v879, %v764
      %v912 = vadd.f32 %v880, %v764
      %v913 = vadd.f32 %v881, %v764
      %v914 = vadd.f32 %v882, %v764
      %v915 = vadd.f32 %v883, %v764
      %v916 = vadd.f32 %v884, %v764
      %v917 = vadd.f32 %v885, %v764
      %v918 = vadd.f32 %v886, %v764
      %v919 = vadd.f32 %v887, %v764
      %v920 = vadd.f32 %v888, %v764
      %v921 = vadd.f32 %v889, %v764
      %v922 = vadd.f32 %v890, %v764
      %v923 = vadd.f32 %v891, %v764
      %v924 = vadd.f32 %v892, %v764
      %v925 = vadd.f32 %v893, %v764
      %v926 = vadd.f32 %v894, %v764
      %v927 = vmax.f32 %v895, 0.0
      %v928 = vmax.f32 %v896, 0.0
      %v929 = vmax.f32 %v897, 0.0
      %v930 = vmax.f32 %v898, 0.0
      %v931 = vmax.f32 %v899, 0.0
      %v932 = vmax.f32 %v900, 0.0
      %v933 = vmax.f32 %v901, 0.0
      %v934 = vmax.f32 %v902, 0.0
      %v935 = vmax.f32 %v903, 0.0
      %v936 = vmax.f32 %v904, 0.0
      %v937 = vmax.f32 %v905, 0.0
      %v938 = vmax.f32 %v906, 0.0
      %v939 = vmax.f32 %v907, 0.0
      %v940 = vmax.f32 %v908, 0.0
      %v941 = vmax.f32 %v909, 0.0
      %v942 = vmax.f32 %v910, 0.0
      %v943 = vmax.f32 %v911, 0.0
      %v944 = vmax.f32 %v912, 0.0
      %v945 = vmax.f32 %v913, 0.0
      %v946 = vmax.f32 %v914, 0.0
      %v947 = vmax.f32 %v915, 0.0
      %v948 = vmax.f32 %v916, 0.0
      %v949 = vmax.f32 %v917, 0.0
      %v950 = vmax.f32 %v918, 0.0
      %v951 = vmax.f32 %v919, 0.0
      %v952 = vmax.f32 %v920, 0.0
      %v953 = vmax.f32 %v921, 0.0
      %v954 = vmax.f32 %v922, 0.0
      %v955 = vmax.f32 %v923, 0.0
      %v956 = vmax.f32 %v924, 0.0
      %v957 = vmax.f32 %v925, 0.0
      %v958 = vmax.f32 %v926, 0.0
      %s959 = scalar_lea.vmem [#allocation3], 8
      %960 = vst [vmem:[%s959] sm:$0xff] %v927
      %961 = vst [vmem:[%s959 + $0x8] sm:$0xff] %v928
      %962 = vst [vmem:[%s959 + $0x10] sm:$0xff] %v929
      %963 = vst [vmem:[%s959 + $0x18] sm:$0xff] %v930
      %964 = vst [vmem:[%s959 + $0x20] sm:$0xff] %v931
      %965 = vst [vmem:[%s959 + $0x28] sm:$0xff] %v932
      %966 = vst [vmem:[%s959 + $0x30] sm:$0xff] %v933
      %967 = vst [vmem:[%s959 + $0x38] sm:$0xff] %v934
      %968 = vst [vmem:[%s959 + $0x40] sm:$0xff] %v935
      %969 = vst [vmem:[%s959 + $0x48] sm:$0xff] %v936
      %970 = vst [vmem:[%s959 + $0x50] sm:$0xff] %v937
      %971 = vst [vmem:[%s959 + $0x58] sm:$0xff] %v938
      %972 = vst [vmem:[%s959 + $0x60] sm:$0xff] %v939
      %973 = vst [vmem:[%s959 + $0x68] sm:$0xff] %v940
      %974 = vst [vmem:[%s959 + $0x70] sm:$0xff] %v941
      %975 = vst [vmem:[%s959 + $0x78] sm:$0xff] %v942
      %976 = vst [vmem:[%s959 + $0x88] sm:$0xff] %v943
      %977 = vst [vmem:[%s959 + $0x90] sm:$0xff] %v944
      %978 = vst [vmem:[%s959 + $0x98] sm:$0xff] %v945
      %979 = vst [vmem:[%s959 + $0xa0] sm:$0xff] %v946
      %980 = vst [vmem:[%s959 + $0xa8] sm:$0xff] %v947
      %981 = vst [vmem:[%s959 + $0xb0] sm:$0xff] %v948
      %982 = vst [vmem:[%s959 + $0xb8] sm:$0xff] %v949
      %983 = vst [vmem:[%s959 + $0xc0] sm:$0xff] %v950
      %984 = vst [vmem:[%s959 + $0xc8] sm:$0xff] %v951
      %985 = vst [vmem:[%s959 + $0xd0] sm:$0xff] %v952
      %986 = vst [vmem:[%s959 + $0xd8] sm:$0xff] %v953
      %987 = vst [vmem:[%s959 + $0xe0] sm:$0xff] %v954
      %988 = vst [vmem:[%s959 + $0xe8] sm:$0xff] %v955
      %989 = vst [vmem:[%s959 + $0xf0] sm:$0xff] %v956
      %990 = vst [vmem:[%s959 + $0xf8] sm:$0xff] %v957
      %991 = vst [vmem:[%s959 + $0x100] sm:$0xff] %v958
      %v992 = vld [vmem:[#allocation2] sm:$0xff]
      %v993 = vld [vmem:[#allocation2 + $0x20] sm:$0xff]
      %v994 = vld [vmem:[#allocation2 + $0x40] sm:$0xff]
      %v995 = vld [vmem:[#allocation2 + $0x60] sm:$0xff]
      %v996 = vld [vmem:[#allocation2 + $0x80] sm:$0xff]
      %v997 = vld [vmem:[#allocation2 + $0xa0] sm:$0xff]
      %v998 = vld [vmem:[#allocation2 + $0xc0] sm:$0xff]
      %v999 = vld [vmem:[#allocation2 + $0xe0] sm:$0xff]
      %v1000 = vld [vmem:[#allocation2 + $0x110] sm:$0xff]
      %v1001 = vld [vmem:[#allocation2 + $0x130] sm:$0xff]
      %v1002 = vld [vmem:[#allocation2 + $0x150] sm:$0xff]
      %v1003 = vld [vmem:[#allocation2 + $0x170] sm:$0xff]
      %v1004 = vld [vmem:[#allocation2 + $0x190] sm:$0xff]
      %v1005 = vld [vmem:[#allocation2 + $0x1b0] sm:$0xff]
      %v1006 = vld [vmem:[#allocation2 + $0x1d0] sm:$0xff]
      %v1007 = vld [vmem:[#allocation2 + $0x1f0] sm:$0xff]
      %v1008 = vpack.c.bf16 %v993, %v992
      %v1009 = vpack.c.bf16 %v995, %v994
      %v1010 = vpack.c.bf16 %v997, %v996
      %v1011 = vpack.c.bf16 %v999, %v998
      %v1012 = vpack.c.bf16 %v1001, %v1000
      %v1013 = vpack.c.bf16 %v1003, %v1002
      %v1014 = vpack.c.bf16 %v1005, %v1004
      %v1015 = vpack.c.bf16 %v1007, %v1006
      %v1016 = vld [vmem:[%s310] sm:$0xf]
      %v1017 = vld [vmem:[%s310 + $0x4] sm:$0xf]
      %v1018 = vld [vmem:[%s310 + $0x8] sm:$0xf]
      %v1019 = vld [vmem:[%s310 + $0xc] sm:$0xf]
      %v1020 = vld [vmem:[%s310 + $0x10] sm:$0xf]
      %v1021 = vld [vmem:[%s310 + $0x14] sm:$0xf]
      %v1022 = vld [vmem:[%s310 + $0x18] sm:$0xf]
      %v1023 = vld [vmem:[%s310 + $0x1c] sm:$0xf]
      %v1024 = vld [vmem:[%s310 + $0x20] sm:$0xf]
      %v1025 = vld [vmem:[%s310 + $0x24] sm:$0xf]
      %v1026 = vld [vmem:[%s310 + $0x28] sm:$0xf]
      %v1027 = vld [vmem:[%s310 + $0x2c] sm:$0xf]
      %v1028 = vld [vmem:[%s310 + $0x30] sm:$0xf]
      %v1029 = vld [vmem:[%s310 + $0x34] sm:$0xf]
      %v1030 = vld [vmem:[%s310 + $0x38] sm:$0xf]
      %v1031 = vld [vmem:[%s310 + $0x3c] sm:$0xf]
      %v1032 = vld [vmem:[#allocation3] sm:$0xff]
      %v1033 = vld [vmem:[#allocation3 + $0x10] sm:$0xff]
      %v1034 = vld [vmem:[#allocation3 + $0x20] sm:$0xff]
      %v1035 = vld [vmem:[#allocation3 + $0x30] sm:$0xff]
      %v1036 = vld [vmem:[#allocation3 + $0x40] sm:$0xff]
      %v1037 = vld [vmem:[#allocation3 + $0x50] sm:$0xff]
      %v1038 = vld [vmem:[#allocation3 + $0x60] sm:$0xff]
      %v1039 = vld [vmem:[#allocation3 + $0x70] sm:$0xff]
      %v1040 = vld [vmem:[#allocation3 + $0x88] sm:$0xff]
      %v1041 = vld [vmem:[#allocation3 + $0x98] sm:$0xff]
      %v1042 = vld [vmem:[#allocation3 + $0xa8] sm:$0xff]
      %v1043 = vld [vmem:[#allocation3 + $0xb8] sm:$0xff]
      %v1044 = vld [vmem:[#allocation3 + $0xc8] sm:$0xff]
      %v1045 = vld [vmem:[#allocation3 + $0xd8] sm:$0xff]
      %v1046 = vld [vmem:[#allocation3 + $0xe8] sm:$0xff]
      %v1047 = vld [vmem:[#allocation3 + $0xf8] sm:$0xff]
      %v1048 = vpack.c.bf16 %v1033, %v1032
      %v1049 = vpack.c.bf16 %v1035, %v1034
      %v1050 = vpack.c.bf16 %v1037, %v1036
      %v1051 = vpack.c.bf16 %v1039, %v1038
      %v1052 = vpack.c.bf16 %v1041, %v1040
      %v1053 = vpack.c.bf16 %v1043, %v1042
      %v1054 = vpack.c.bf16 %v1045, %v1044
      %v1055 = vpack.c.bf16 %v1047, %v1046
      %v1056 = vld [vmem:[%s310 + $0x40] sm:$0xf]
      %v1057 = vld [vmem:[%s310 + $0x44] sm:$0xf]
      %v1058 = vld [vmem:[%s310 + $0x48] sm:$0xf]
      %v1059 = vld [vmem:[%s310 + $0x4c] sm:$0xf]
      %v1060 = vld [vmem:[%s310 + $0x50] sm:$0xf]
      %v1061 = vld [vmem:[%s310 + $0x54] sm:$0xf]
      %v1062 = vld [vmem:[%s310 + $0x58] sm:$0xf]
      %v1063 = vld [vmem:[%s310 + $0x5c] sm:$0xf]
      %v1064 = vld [vmem:[%s310 + $0x60] sm:$0xf]
      %v1065 = vld [vmem:[%s310 + $0x64] sm:$0xf]
      %v1066 = vld [vmem:[%s310 + $0x68] sm:$0xf]
      %v1067 = vld [vmem:[%s310 + $0x6c] sm:$0xf]
      %v1068 = vld [vmem:[%s310 + $0x70] sm:$0xf]
      %v1069 = vld [vmem:[%s310 + $0x74] sm:$0xf]
      %v1070 = vld [vmem:[%s310 + $0x78] sm:$0xf]
      %v1071 = vld [vmem:[%s310 + $0x7c] sm:$0xf]
      %v1088 = vunpack.c.l.b16 %v1056
      %v1089 = vunpack.c.l.b16 %v1057
      %v1090 = vunpack.c.l.b16 %v1058
      %v1091 = vunpack.c.l.b16 %v1059
      %v1092 = vunpack.c.l.b16 %v1060
      %v1093 = vunpack.c.l.b16 %v1061
      %v1094 = vunpack.c.l.b16 %v1062
      %v1095 = vunpack.c.l.b16 %v1063
      %v1096 = vunpack.c.l.b16 %v1064
      %v1097 = vunpack.c.l.b16 %v1065
      %v1098 = vunpack.c.l.b16 %v1066
      %v1099 = vunpack.c.l.b16 %v1067
      %v1100 = vunpack.c.l.b16 %v1068
      %v1101 = vunpack.c.l.b16 %v1069
      %v1102 = vunpack.c.l.b16 %v1070
      %v1103 = vunpack.c.l.b16 %v1071
      %v1104 = vpack.c.b16 %v1089, %v1088
      %v1105 = vpack.c.b16 %v1091, %v1090
      %v1106 = vpack.c.b16 %v1093, %v1092
      %v1107 = vpack.c.b16 %v1095, %v1094
      %v1108 = vpack.c.b16 %v1097, %v1096
      %v1109 = vpack.c.b16 %v1099, %v1098
      %v1110 = vpack.c.b16 %v1101, %v1100
      %v1111 = vpack.c.b16 %v1103, %v1102
      %1120 = vmatprep.subr.bf16.mxu0 0
      %1121 = vmatpush1.bf16.msra.mxu0 %v1104
      %1122 = vmatprep.subr.bf16.mxu0 0
      %1123 = vmatpush1.bf16.msra.mxu0 %v1105
      %1124 = vmatprep.subr.bf16.mxu0 0
      %1125 = vmatpush1.bf16.msra.mxu0 %v1106
      %1126 = vmatprep.subr.bf16.mxu0 0
      %1127 = vmatpush1.bf16.msra.mxu0 %v1107
      %1128 = vmatprep.subr.bf16.mxu0 0
      %1129 = vmatpush1.bf16.msra.mxu0 %v1108
      %1130 = vmatprep.subr.bf16.mxu0 0
      %1131 = vmatpush1.bf16.msra.mxu0 %v1109
      %1132 = vmatprep.subr.bf16.mxu0 0
      %1133 = vmatpush1.bf16.msra.mxu0 %v1110
      %1134 = vmatprep.subr.bf16.mxu0 0
      %1135 = vmatpush1.bf16.msra.mxu0 %v1111
      %1136 = vmatprep.subr.bf16.mxu0 0
      %1137 = vmatpush1.bf16.msra.mxu0 0
      %1138 = vmatprep.subr.bf16.mxu0 0
      %1139 = vmatpush1.bf16.msra.mxu0 0
      %1140 = vmatprep.subr.bf16.mxu0 0
      %1141 = vmatpush1.bf16.msra.mxu0 0
      %1142 = vmatprep.subr.bf16.mxu0 0
      %1143 = vmatpush1.bf16.msra.mxu0 0
      %1144 = vmatprep.subr.bf16.mxu0 0
      %1145 = vmatpush1.bf16.msra.mxu0 0
      %1146 = vmatprep.subr.bf16.mxu0 0
      %1147 = vmatpush1.bf16.msra.mxu0 0
      %1148 = vmatprep.subr.bf16.mxu0 0
      %1149 = vmatpush1.bf16.msra.mxu0 0
      %1150 = vmatprep.subr.bf16.mxu0 0
      %1151 = vmatpush1.bf16.msra.mxu0 0
      %1152 = vmatprep.mubr.bf16.mxu0 0
      %1153 = vmatmul.mubr.bf16.gmra.mrb[0].mxu0 %v1048
      %v1154 = vpop.f32.mrb[0].mxu0
      %v1155 = vadd.f32 0.0, %v1154
      %v1156 = vpop.f32.mrb[0].mxu0
      %v1157 = vpop.f32.mrb[0].mxu0
      %v1158 = vadd.f32 0.0, %v1157
      %v1159 = vpop.f32.mrb[0].mxu0
      %1160 = vmatprep.mubr.bf16.mxu0 0
      %1161 = vmatmul.mubr.bf16.gmra.mrb[0].mxu0 %v1049
      %v1162 = vpop.f32.mrb[0].mxu0
      %v1163 = vadd.f32 0.0, %v1162
      %v1164 = vpop.f32.mrb[0].mxu0
      %v1165 = vpop.f32.mrb[0].mxu0
      %v1166 = vadd.f32 0.0, %v1165
      %v1167 = vpop.f32.mrb[0].mxu0
      %1168 = vmatprep.mubr.bf16.mxu0 0
      %1169 = vmatmul.mubr.bf16.gmra.mrb[0].mxu0 %v1050
      %v1170 = vpop.f32.mrb[0].mxu0
      %v1171 = vadd.f32 0.0, %v1170
      %v1172 = vpop.f32.mrb[0].mxu0
      %v1173 = vpop.f32.mrb[0].mxu0
      %v1174 = vadd.f32 0.0, %v1173
      %v1175 = vpop.f32.mrb[0].mxu0
      %1176 = vmatprep.mubr.bf16.mxu0 0
      %1177 = vmatmul.mubr.bf16.gmra.mrb[0].mxu0 %v1051
      %v1178 = vpop.f32.mrb[0].mxu0
      %v1179 = vadd.f32 0.0, %v1178
      %v1180 = vpop.f32.mrb[0].mxu0
      %v1181 = vpop.f32.mrb[0].mxu0
      %v1182 = vadd.f32 0.0, %v1181
      %v1183 = vpop.f32.mrb[0].mxu0
      %1184 = vmatprep.mubr.bf16.mxu0 0
      %1185 = vmatmul.mubr.bf16.gmra.mrb[0].mxu0 %v1052
      %v1186 = vpop.f32.mrb[0].mxu0
      %v1187 = vadd.f32 0.0, %v1186
      %v1188 = vpop.f32.mrb[0].mxu0
      %v1189 = vpop.f32.mrb[0].mxu0
      %v1190 = vadd.f32 0.0, %v1189
      %v1191 = vpop.f32.mrb[0].mxu0
      %1192 = vmatprep.mubr.bf16.mxu0 0
      %1193 = vmatmul.mubr.bf16.gmra.mrb[0].mxu0 %v1053
      %v1194 = vpop.f32.mrb[0].mxu0
      %v1195 = vadd.f32 0.0, %v1194
      %v1196 = vpop.f32.mrb[0].mxu0
      %v1197 = vpop.f32.mrb[0].mxu0
      %v1198 = vadd.f32 0.0, %v1197
      %v1199 = vpop.f32.mrb[0].mxu0
      %1200 = vmatprep.mubr.bf16.mxu0 0
      %1201 = vmatmul.mubr.bf16.gmra.mrb[0].mxu0 %v1054
      %v1202 = vpop.f32.mrb[0].mxu0
      %v1203 = vadd.f32 0.0, %v1202
      %v1204 = vpop.f32.mrb[0].mxu0
      %v1205 = vpop.f32.mrb[0].mxu0
      %v1206 = vadd.f32 0.0, %v1205
      %v1207 = vpop.f32.mrb[0].mxu0
      %1208 = vmatprep.mubr.bf16.mxu0 0
      %1209 = vmatmul.mubr.bf16.gmra.mrb[0].mxu0 %v1055
      %v1210 = vpop.f32.mrb[0].mxu0
      %v1211 = vadd.f32 0.0, %v1210
      %v1212 = vpop.f32.mrb[0].mxu0
      %v1213 = vpop.f32.mrb[0].mxu0
      %v1214 = vadd.f32 0.0, %v1213
      %v1215 = vpop.f32.mrb[0].mxu0
      %1216 = vdwg.mxu0
      %v1233 = vunpack.c.l.b16 %v1016
      %v1234 = vunpack.c.l.b16 %v1017
      %v1235 = vunpack.c.l.b16 %v1018
      %v1236 = vunpack.c.l.b16 %v1019
      %v1237 = vunpack.c.l.b16 %v1020
      %v1238 = vunpack.c.l.b16 %v1021
      %v1239 = vunpack.c.l.b16 %v1022
      %v1240 = vunpack.c.l.b16 %v1023
      %v1241 = vunpack.c.l.b16 %v1024
      %v1242 = vunpack.c.l.b16 %v1025
      %v1243 = vunpack.c.l.b16 %v1026
      %v1244 = vunpack.c.l.b16 %v1027
      %v1245 = vunpack.c.l.b16 %v1028
      %v1246 = vunpack.c.l.b16 %v1029
      %v1247 = vunpack.c.l.b16 %v1030
      %v1248 = vunpack.c.l.b16 %v1031
      %v1249 = vpack.c.b16 %v1234, %v1233
      %v1250 = vpack.c.b16 %v1236, %v1235
      %v1251 = vpack.c.b16 %v1238, %v1237
      %v1252 = vpack.c.b16 %v1240, %v1239
      %v1253 = vpack.c.b16 %v1242, %v1241
      %v1254 = vpack.c.b16 %v1244, %v1243
      %v1255 = vpack.c.b16 %v1246, %v1245
      %v1256 = vpack.c.b16 %v1248, %v1247
      %1265 = vmatprep.subr.bf16.mxu0 0
      %1266 = vmatpush1.bf16.msra.mxu0 %v1249
      %1267 = vmatprep.subr.bf16.mxu0 0
      %1268 = vmatpush1.bf16.msra.mxu0 %v1250
      %1269 = vmatprep.subr.bf16.mxu0 0
      %1270 = vmatpush1.bf16.msra.mxu0 %v1251
      %1271 = vmatprep.subr.bf16.mxu0 0
      %1272 = vmatpush1.bf16.msra.mxu0 %v1252
      %1273 = vmatprep.subr.bf16.mxu0 0
      %1274 = vmatpush1.bf16.msra.mxu0 %v1253
      %1275 = vmatprep.subr.bf16.mxu0 0
      %1276 = vmatpush1.bf16.msra.mxu0 %v1254
      %1277 = vmatprep.subr.bf16.mxu0 0
      %1278 = vmatpush1.bf16.msra.mxu0 %v1255
      %1279 = vmatprep.subr.bf16.mxu0 0
      %1280 = vmatpush1.bf16.msra.mxu0 %v1256
      %1281 = vmatprep.subr.bf16.mxu0 0
      %1282 = vmatpush1.bf16.msra.mxu0 0
      %1283 = vmatprep.subr.bf16.mxu0 0
      %1284 = vmatpush1.bf16.msra.mxu0 0
      %1285 = vmatprep.subr.bf16.mxu0 0
      %1286 = vmatpush1.bf16.msra.mxu0 0
      %1287 = vmatprep.subr.bf16.mxu0 0
      %1288 = vmatpush1.bf16.msra.mxu0 0
      %1289 = vmatprep.subr.bf16.mxu0 0
      %1290 = vmatpush1.bf16.msra.mxu0 0
      %1291 = vmatprep.subr.bf16.mxu0 0
      %1292 = vmatpush1.bf16.msra.mxu0 0
      %1293 = vmatprep.subr.bf16.mxu0 0
      %1294 = vmatpush1.bf16.msra.mxu0 0
      %1295 = vmatprep.subr.bf16.mxu0 0
      %1296 = vmatpush1.bf16.msra.mxu0 0
      %1297 = vmatprep.mubr.bf16.mxu0 0
      %1298 = vmatmul.mubr.bf16.gmra.mrb[0].mxu0 %v1008
      %v1299 = vpop.f32.mrb[0].mxu0
      %v1300 = vadd.f32 %v1155, %v1299
      %v1301 = vpop.f32.mrb[0].mxu0
      %v1302 = vpop.f32.mrb[0].mxu0
      %v1303 = vadd.f32 %v1158, %v1302
      %v1304 = vpop.f32.mrb[0].mxu0
      %1305 = vmatprep.mubr.bf16.mxu0 0
      %1306 = vmatmul.mubr.bf16.gmra.mrb[0].mxu0 %v1009
      %v1307 = vpop.f32.mrb[0].mxu0
      %v1308 = vadd.f32 %v1163, %v1307
      %v1309 = vpop.f32.mrb[0].mxu0
      %v1310 = vpop.f32.mrb[0].mxu0
      %v1311 = vadd.f32 %v1166, %v1310
      %v1312 = vpop.f32.mrb[0].mxu0
      %1313 = vmatprep.mubr.bf16.mxu0 0
      %1314 = vmatmul.mubr.bf16.gmra.mrb[0].mxu0 %v1010
      %v1315 = vpop.f32.mrb[0].mxu0
      %v1316 = vadd.f32 %v1171, %v1315
      %v1317 = vpop.f32.mrb[0].mxu0
      %v1318 = vpop.f32.mrb[0].mxu0
      %v1319 = vadd.f32 %v1174, %v1318
      %v1320 = vpop.f32.mrb[0].mxu0
      %1321 = vmatprep.mubr.bf16.mxu0 0
      %1322 = vmatmul.mubr.bf16.gmra.mrb[0].mxu0 %v1011
      %v1323 = vpop.f32.mrb[0].mxu0
      %v1324 = vadd.f32 %v1179, %v1323
      %v1325 = vpop.f32.mrb[0].mxu0
      %v1326 = vpop.f32.mrb[0].mxu0
      %v1327 = vadd.f32 %v1182, %v1326
      %v1328 = vpop.f32.mrb[0].mxu0
      %1329 = vmatprep.mubr.bf16.mxu0 0
      %1330 = vmatmul.mubr.bf16.gmra.mrb[0].mxu0 %v1012
      %v1331 = vpop.f32.mrb[0].mxu0
      %v1332 = vadd.f32 %v1187, %v1331
      %v1333 = vpop.f32.mrb[0].mxu0
      %v1334 = vpop.f32.mrb[0].mxu0
      %v1335 = vadd.f32 %v1190, %v1334
      %v1336 = vpop.f32.mrb[0].mxu0
      %1337 = vmatprep.mubr.bf16.mxu0 0
      %1338 = vmatmul.mubr.bf16.gmra.mrb[0].mxu0 %v1013
      %v1339 = vpop.f32.mrb[0].mxu0
      %v1340 = vadd.f32 %v1195, %v1339
      %v1341 = vpop.f32.mrb[0].mxu0
      %v1342 = vpop.f32.mrb[0].mxu0
      %v1343 = vadd.f32 %v1198, %v1342
      %v1344 = vpop.f32.mrb[0].mxu0
      %1345 = vmatprep.mubr.bf16.mxu0 0
      %1346 = vmatmul.mubr.bf16.gmra.mrb[0].mxu0 %v1014
      %v1347 = vpop.f32.mrb[0].mxu0
      %v1348 = vadd.f32 %v1203, %v1347
      %v1349 = vpop.f32.mrb[0].mxu0
      %v1350 = vpop.f32.mrb[0].mxu0
      %v1351 = vadd.f32 %v1206, %v1350
      %v1352 = vpop.f32.mrb[0].mxu0
      %1353 = vmatprep.mubr.bf16.mxu0 0
      %1354 = vmatmul.mubr.bf16.gmra.mrb[0].mxu0 %v1015
      %v1355 = vpop.f32.mrb[0].mxu0
      %v1356 = vadd.f32 %v1211, %v1355
      %v1357 = vpop.f32.mrb[0].mxu0
      %v1358 = vpop.f32.mrb[0].mxu0
      %v1359 = vadd.f32 %v1214, %v1358
      %v1360 = vpop.f32.mrb[0].mxu0
      %1361 = vdwg.mxu0
      %v1362 = vld [vmem:[#allocation2 + $0x1] sm:$0xff]
      %v1363 = vld [vmem:[#allocation2 + $0x21] sm:$0xff]
      %v1364 = vld [vmem:[#allocation2 + $0x41] sm:$0xff]
      %v1365 = vld [vmem:[#allocation2 + $0x61] sm:$0xff]
      %v1366 = vld [vmem:[#allocation2 + $0x81] sm:$0xff]
      %v1367 = vld [vmem:[#allocation2 + $0xa1] sm:$0xff]
      %v1368 = vld [vmem:[#allocation2 + $0xc1] sm:$0xff]
      %v1369 = vld [vmem:[#allocation2 + $0xe1] sm:$0xff]
      %v1370 = vld [vmem:[#allocation2 + $0x111] sm:$0xff]
      %v1371 = vld [vmem:[#allocation2 + $0x131] sm:$0xff]
      %v1372 = vld [vmem:[#allocation2 + $0x151] sm:$0xff]
      %v1373 = vld [vmem:[#allocation2 + $0x171] sm:$0xff]
      %v1374 = vld [vmem:[#allocation2 + $0x191] sm:$0xff]
      %v1375 = vld [vmem:[#allocation2 + $0x1b1] sm:$0xff]
      %v1376 = vld [vmem:[#allocation2 + $0x1d1] sm:$0xff]
      %v1377 = vld [vmem:[#allocation2 + $0x1f1] sm:$0xff]
      %v1378 = vpack.c.bf16 %v1363, %v1362
      %v1379 = vpack.c.bf16 %v1365, %v1364
      %v1380 = vpack.c.bf16 %v1367, %v1366
      %v1381 = vpack.c.bf16 %v1369, %v1368
      %v1382 = vpack.c.bf16 %v1371, %v1370
      %v1383 = vpack.c.bf16 %v1373, %v1372
      %v1384 = vpack.c.bf16 %v1375, %v1374
      %v1385 = vpack.c.bf16 %v1377, %v1376
      %v1386 = vld [vmem:[%s310 + $0x80] sm:$0xf]
      %v1387 = vld [vmem:[%s310 + $0x84] sm:$0xf]
      %v1388 = vld [vmem:[%s310 + $0x88] sm:$0xf]
      %v1389 = vld [vmem:[%s310 + $0x8c] sm:$0xf]
      %v1390 = vld [vmem:[%s310 + $0x90] sm:$0xf]
      %v1391 = vld [vmem:[%s310 + $0x94] sm:$0xf]
      %v1392 = vld [vmem:[%s310 + $0x98] sm:$0xf]
      %v1393 = vld [vmem:[%s310 + $0x9c] sm:$0xf]
      %v1394 = vld [vmem:[%s310 + $0xa0] sm:$0xf]
      %v1395 = vld [vmem:[%s310 + $0xa4] sm:$0xf]
      %v1396 = vld [vmem:[%s310 + $0xa8] sm:$0xf]
      %v1397 = vld [vmem:[%s310 + $0xac] sm:$0xf]
      %v1398 = vld [vmem:[%s310 + $0xb0] sm:$0xf]
      %v1399 = vld [vmem:[%s310 + $0xb4] sm:$0xf]
      %v1400 = vld [vmem:[%s310 + $0xb8] sm:$0xf]
      %v1401 = vld [vmem:[%s310 + $0xbc] sm:$0xf]
      %v1418 = vunpack.c.l.b16 %v1386
      %v1419 = vunpack.c.l.b16 %v1387
      %v1420 = vunpack.c.l.b16 %v1388
      %v1421 = vunpack.c.l.b16 %v1389
      %v1422 = vunpack.c.l.b16 %v1390
      %v1423 = vunpack.c.l.b16 %v1391
      %v1424 = vunpack.c.l.b16 %v1392
      %v1425 = vunpack.c.l.b16 %v1393
      %v1426 = vunpack.c.l.b16 %v1394
      %v1427 = vunpack.c.l.b16 %v1395
      %v1428 = vunpack.c.l.b16 %v1396
      %v1429 = vunpack.c.l.b16 %v1397
      %v1430 = vunpack.c.l.b16 %v1398
      %v1431 = vunpack.c.l.b16 %v1399
      %v1432 = vunpack.c.l.b16 %v1400
      %v1433 = vunpack.c.l.b16 %v1401
      %v1434 = vpack.c.b16 %v1419, %v1418
      %v1435 = vpack.c.b16 %v1421, %v1420
      %v1436 = vpack.c.b16 %v1423, %v1422
      %v1437 = vpack.c.b16 %v1425, %v1424
      %v1438 = vpack.c.b16 %v1427, %v1426
      %v1439 = vpack.c.b16 %v1429, %v1428
      %v1440 = vpack.c.b16 %v1431, %v1430
      %v1441 = vpack.c.b16 %v1433, %v1432
      %1450 = vmatprep.subr.bf16.mxu0 0
      %1451 = vmatpush1.bf16.msra.mxu0 %v1434
      %1452 = vmatprep.subr.bf16.mxu0 0
      %1453 = vmatpush1.bf16.msra.mxu0 %v1435
      %1454 = vmatprep.subr.bf16.mxu0 0
      %1455 = vmatpush1.bf16.msra.mxu0 %v1436
      %1456 = vmatprep.subr.bf16.mxu0 0
      %1457 = vmatpush1.bf16.msra.mxu0 %v1437
      %1458 = vmatprep.subr.bf16.mxu0 0
      %1459 = vmatpush1.bf16.msra.mxu0 %v1438
      %1460 = vmatprep.subr.bf16.mxu0 0
      %1461 = vmatpush1.bf16.msra.mxu0 %v1439
      %1462 = vmatprep.subr.bf16.mxu0 0
      %1463 = vmatpush1.bf16.msra.mxu0 %v1440
      %1464 = vmatprep.subr.bf16.mxu0 0
      %1465 = vmatpush1.bf16.msra.mxu0 %v1441
      %1466 = vmatprep.subr.bf16.mxu0 0
      %1467 = vmatpush1.bf16.msra.mxu0 0
      %1468 = vmatprep.subr.bf16.mxu0 0
      %1469 = vmatpush1.bf16.msra.mxu0 0
      %1470 = vmatprep.subr.bf16.mxu0 0
      %1471 = vmatpush1.bf16.msra.mxu0 0
      %1472 = vmatprep.subr.bf16.mxu0 0
      %1473 = vmatpush1.bf16.msra.mxu0 0
      %1474 = vmatprep.subr.bf16.mxu0 0
      %1475 = vmatpush1.bf16.msra.mxu0 0
      %1476 = vmatprep.subr.bf16.mxu0 0
      %1477 = vmatpush1.bf16.msra.mxu0 0
      %1478 = vmatprep.subr.bf16.mxu0 0
      %1479 = vmatpush1.bf16.msra.mxu0 0
      %1480 = vmatprep.subr.bf16.mxu0 0
      %1481 = vmatpush1.bf16.msra.mxu0 0
      %1482 = vmatprep.mubr.bf16.mxu0 0
      %1483 = vmatmul.mubr.bf16.gmra.mrb[0].mxu0 %v1378
      %v1484 = vpop.f32.mrb[0].mxu0
      %v1485 = vadd.f32 0.0, %v1484
      %v1486 = vpop.f32.mrb[0].mxu0
      %v1487 = vpop.f32.mrb[0].mxu0
      %v1488 = vadd.f32 0.0, %v1487
      %v1489 = vpop.f32.mrb[0].mxu0
      %1490 = vmatprep.mubr.bf16.mxu0 0
      %1491 = vmatmul.mubr.bf16.gmra.mrb[0].mxu0 %v1379
      %v1492 = vpop.f32.mrb[0].mxu0
      %v1493 = vadd.f32 0.0, %v1492
      %v1494 = vpop.f32.mrb[0].mxu0
      %v1495 = vpop.f32.mrb[0].mxu0
      %v1496 = vadd.f32 0.0, %v1495
      %v1497 = vpop.f32.mrb[0].mxu0
      %1498 = vmatprep.mubr.bf16.mxu0 0
      %1499 = vmatmul.mubr.bf16.gmra.mrb[0].mxu0 %v1380
      %v1500 = vpop.f32.mrb[0].mxu0
      %v1501 = vadd.f32 0.0, %v1500
      %v1502 = vpop.f32.mrb[0].mxu0
      %v1503 = vpop.f32.mrb[0].mxu0
      %v1504 = vadd.f32 0.0, %v1503
      %v1505 = vpop.f32.mrb[0].mxu0
      %1506 = vmatprep.mubr.bf16.mxu0 0
      %1507 = vmatmul.mubr.bf16.gmra.mrb[0].mxu0 %v1381
      %v1508 = vpop.f32.mrb[0].mxu0
      %v1509 = vadd.f32 0.0, %v1508
      %v1510 = vpop.f32.mrb[0].mxu0
      %v1511 = vpop.f32.mrb[0].mxu0
      %v1512 = vadd.f32 0.0, %v1511
      %v1513 = vpop.f32.mrb[0].mxu0
      %1514 = vmatprep.mubr.bf16.mxu0 0
      %1515 = vmatmul.mubr.bf16.gmra.mrb[0].mxu0 %v1382
      %v1516 = vpop.f32.mrb[0].mxu0
      %v1517 = vadd.f32 0.0, %v1516
      %v1518 = vpop.f32.mrb[0].mxu0
      %v1519 = vpop.f32.mrb[0].mxu0
      %v1520 = vadd.f32 0.0, %v1519
      %v1521 = vpop.f32.mrb[0].mxu0
      %1522 = vmatprep.mubr.bf16.mxu0 0
      %1523 = vmatmul.mubr.bf16.gmra.mrb[0].mxu0 %v1383
      %v1524 = vpop.f32.mrb[0].mxu0
      %v1525 = vadd.f32 0.0, %v1524
      %v1526 = vpop.f32.mrb[0].mxu0
      %v1527 = vpop.f32.mrb[0].mxu0
      %v1528 = vadd.f32 0.0, %v1527
      %v1529 = vpop.f32.mrb[0].mxu0
      %1530 = vmatprep.mubr.bf16.mxu0 0
      %1531 = vmatmul.mubr.bf16.gmra.mrb[0].mxu0 %v1384
      %v1532 = vpop.f32.mrb[0].mxu0
      %v1533 = vadd.f32 0.0, %v1532
      %v1534 = vpop.f32.mrb[0].mxu0
      %v1535 = vpop.f32.mrb[0].mxu0
      %v1536 = vadd.f32 0.0, %v1535
      %v1537 = vpop.f32.mrb[0].mxu0
      %1538 = vmatprep.mubr.bf16.mxu0 0
      %1539 = vmatmul.mubr.bf16.gmra.mrb[0].mxu0 %v1385
      %v1540 = vpop.f32.mrb[0].mxu0
      %v1541 = vadd.f32 0.0, %v1540
      %v1542 = vpop.f32.mrb[0].mxu0
      %v1543 = vpop.f32.mrb[0].mxu0
      %v1544 = vadd.f32 0.0, %v1543
      %v1545 = vpop.f32.mrb[0].mxu0
      %1546 = vdwg.mxu0
      %v1547 = vadd.f32 %v1300, %v1485
      %v1548 = vadd.f32 %v1303, %v1488
      %v1549 = vadd.f32 %v1308, %v1493
      %v1550 = vadd.f32 %v1311, %v1496
      %v1551 = vadd.f32 %v1316, %v1501
      %v1552 = vadd.f32 %v1319, %v1504
      %v1553 = vadd.f32 %v1324, %v1509
      %v1554 = vadd.f32 %v1327, %v1512
      %v1555 = vadd.f32 %v1332, %v1517
      %v1556 = vadd.f32 %v1335, %v1520
      %v1557 = vadd.f32 %v1340, %v1525
      %v1558 = vadd.f32 %v1343, %v1528
      %v1559 = vadd.f32 %v1348, %v1533
      %v1560 = vadd.f32 %v1351, %v1536
      %v1561 = vadd.f32 %v1356, %v1541
      %v1562 = vadd.f32 %v1359, %v1544
      %v1563 = vld [vmem:[%s830] sm:$0xff]
      %v1564 = vld [vmem:[%s830 + $0x20] sm:$0xff]
      %v1565 = vld [vmem:[%s830 + $0x40] sm:$0xff]
      %v1566 = vld [vmem:[%s830 + $0x60] sm:$0xff]
      %v1567 = vld [vmem:[%s830 + $0x80] sm:$0xff]
      %v1568 = vld [vmem:[%s830 + $0xa0] sm:$0xff]
      %v1569 = vld [vmem:[%s830 + $0xc0] sm:$0xff]
      %v1570 = vld [vmem:[%s830 + $0xe0] sm:$0xff]
      %v1571 = vld [vmem:[%s830 + $0x110] sm:$0xff]
      %v1572 = vld [vmem:[%s830 + $0x130] sm:$0xff]
      %v1573 = vld [vmem:[%s830 + $0x150] sm:$0xff]
      %v1574 = vld [vmem:[%s830 + $0x170] sm:$0xff]
      %v1575 = vld [vmem:[%s830 + $0x190] sm:$0xff]
      %v1576 = vld [vmem:[%s830 + $0x1b0] sm:$0xff]
      %v1577 = vld [vmem:[%s830 + $0x1d0] sm:$0xff]
      %v1578 = vld [vmem:[%s830 + $0x1f0] sm:$0xff]
      %v1579 = vpack.c.bf16 %v1564, %v1563
      %v1580 = vpack.c.bf16 %v1566, %v1565
      %v1581 = vpack.c.bf16 %v1568, %v1567
      %v1582 = vpack.c.bf16 %v1570, %v1569
      %v1583 = vpack.c.bf16 %v1572, %v1571
      %v1584 = vpack.c.bf16 %v1574, %v1573
      %v1585 = vpack.c.bf16 %v1576, %v1575
      %v1586 = vpack.c.bf16 %v1578, %v1577
      %v1587 = vld [vmem:[%s310 + $0xc0] sm:$0xf]
      %v1588 = vld [vmem:[%s310 + $0xc4] sm:$0xf]
      %v1589 = vld [vmem:[%s310 + $0xc8] sm:$0xf]
      %v1590 = vld [vmem:[%s310 + $0xcc] sm:$0xf]
      %v1591 = vld [vmem:[%s310 + $0xd0] sm:$0xf]
      %v1592 = vld [vmem:[%s310 + $0xd4] sm:$0xf]
      %v1593 = vld [vmem:[%s310 + $0xd8] sm:$0xf]
      %v1594 = vld [vmem:[%s310 + $0xdc] sm:$0xf]
      %v1595 = vld [vmem:[%s310 + $0xe0] sm:$0xf]
      %v1596 = vld [vmem:[%s310 + $0xe4] sm:$0xf]
      %v1597 = vld [vmem:[%s310 + $0xe8] sm:$0xf]
      %v1598 = vld [vmem:[%s310 + $0xec] sm:$0xf]
      %v1599 = vld [vmem:[%s310 + $0xf0] sm:$0xf]
      %v1600 = vld [vmem:[%s310 + $0xf4] sm:$0xf]
      %v1601 = vld [vmem:[%s310 + $0xf8] sm:$0xf]
      %v1602 = vld [vmem:[%s310 + $0xfc] sm:$0xf]
      %v1619 = vunpack.c.l.b16 %v1587
      %v1620 = vunpack.c.l.b16 %v1588
      %v1621 = vunpack.c.l.b16 %v1589
      %v1622 = vunpack.c.l.b16 %v1590
      %v1623 = vunpack.c.l.b16 %v1591
      %v1624 = vunpack.c.l.b16 %v1592
      %v1625 = vunpack.c.l.b16 %v1593
      %v1626 = vunpack.c.l.b16 %v1594
      %v1627 = vunpack.c.l.b16 %v1595
      %v1628 = vunpack.c.l.b16 %v1596
      %v1629 = vunpack.c.l.b16 %v1597
      %v1630 = vunpack.c.l.b16 %v1598
      %v1631 = vunpack.c.l.b16 %v1599
      %v1632 = vunpack.c.l.b16 %v1600
      %v1633 = vunpack.c.l.b16 %v1601
      %v1634 = vunpack.c.l.b16 %v1602
      %v1635 = vpack.c.b16 %v1620, %v1619
      %v1636 = vpack.c.b16 %v1622, %v1621
      %v1637 = vpack.c.b16 %v1624, %v1623
      %v1638 = vpack.c.b16 %v1626, %v1625
      %v1639 = vpack.c.b16 %v1628, %v1627
      %v1640 = vpack.c.b16 %v1630, %v1629
      %v1641 = vpack.c.b16 %v1632, %v1631
      %v1642 = vpack.c.b16 %v1634, %v1633
      %1651 = vmatprep.subr.bf16.mxu0 0
      %1652 = vmatpush1.bf16.msra.mxu0 %v1635
      %1653 = vmatprep.subr.bf16.mxu0 0
      %1654 = vmatpush1.bf16.msra.mxu0 %v1636
      %1655 = vmatprep.subr.bf16.mxu0 0
      %1656 = vmatpush1.bf16.msra.mxu0 %v1637
      %1657 = vmatprep.subr.bf16.mxu0 0
      %1658 = vmatpush1.bf16.msra.mxu0 %v1638
      %1659 = vmatprep.subr.bf16.mxu0 0
      %1660 = vmatpush1.bf16.msra.mxu0 %v1639
      %1661 = vmatprep.subr.bf16.mxu0 0
      %1662 = vmatpush1.bf16.msra.mxu0 %v1640
      %1663 = vmatprep.subr.bf16.mxu0 0
      %1664 = vmatpush1.bf16.msra.mxu0 %v1641
      %1665 = vmatprep.subr.bf16.mxu0 0
      %1666 = vmatpush1.bf16.msra.mxu0 %v1642
      %1667 = vmatprep.subr.bf16.mxu0 0
      %1668 = vmatpush1.bf16.msra.mxu0 0
      %1669 = vmatprep.subr.bf16.mxu0 0
      %1670 = vmatpush1.bf16.msra.mxu0 0
      %1671 = vmatprep.subr.bf16.mxu0 0
      %1672 = vmatpush1.bf16.msra.mxu0 0
      %1673 = vmatprep.subr.bf16.mxu0 0
      %1674 = vmatpush1.bf16.msra.mxu0 0
      %1675 = vmatprep.subr.bf16.mxu0 0
      %1676 = vmatpush1.bf16.msra.mxu0 0
      %1677 = vmatprep.subr.bf16.mxu0 0
      %1678 = vmatpush1.bf16.msra.mxu0 0
      %1679 = vmatprep.subr.bf16.mxu0 0
      %1680 = vmatpush1.bf16.msra.mxu0 0
      %1681 = vmatprep.subr.bf16.mxu0 0
      %1682 = vmatpush1.bf16.msra.mxu0 0
      %1683 = vmatprep.mubr.bf16.mxu0 0
      %1684 = vmatmul.mubr.bf16.gmra.mrb[0].mxu0 %v1579
      %v1685 = vpop.f32.mrb[0].mxu0
      %v1686 = vadd.f32 0.0, %v1685
      %v1687 = vpop.f32.mrb[0].mxu0
      %v1688 = vpop.f32.mrb[0].mxu0
      %v1689 = vadd.f32 0.0, %v1688
      %v1690 = vpop.f32.mrb[0].mxu0
      %1691 = vmatprep.mubr.bf16.mxu0 0
      %1692 = vmatmul.mubr.bf16.gmra.mrb[0].mxu0 %v1580
      %v1693 = vpop.f32.mrb[0].mxu0
      %v1694 = vadd.f32 0.0, %v1693
      %v1695 = vpop.f32.mrb[0].mxu0
      %v1696 = vpop.f32.mrb[0].mxu0
      %v1697 = vadd.f32 0.0, %v1696
      %v1698 = vpop.f32.mrb[0].mxu0
      %1699 = vmatprep.mubr.bf16.mxu0 0
      %1700 = vmatmul.mubr.bf16.gmra.mrb[0].mxu0 %v1581
      %v1701 = vpop.f32.mrb[0].mxu0
      %v1702 = vadd.f32 0.0, %v1701
      %v1703 = vpop.f32.mrb[0].mxu0
      %v1704 = vpop.f32.mrb[0].mxu0
      %v1705 = vadd.f32 0.0, %v1704
      %v1706 = vpop.f32.mrb[0].mxu0
      %1707 = vmatprep.mubr.bf16.mxu0 0
      %1708 = vmatmul.mubr.bf16.gmra.mrb[0].mxu0 %v1582
      %v1709 = vpop.f32.mrb[0].mxu0
      %v1710 = vadd.f32 0.0, %v1709
      %v1711 = vpop.f32.mrb[0].mxu0
      %v1712 = vpop.f32.mrb[0].mxu0
      %v1713 = vadd.f32 0.0, %v1712
      %v1714 = vpop.f32.mrb[0].mxu0
      %1715 = vmatprep.mubr.bf16.mxu0 0
      %1716 = vmatmul.mubr.bf16.gmra.mrb[0].mxu0 %v1583
      %v1717 = vpop.f32.mrb[0].mxu0
      %v1718 = vadd.f32 0.0, %v1717
      %v1719 = vpop.f32.mrb[0].mxu0
      %v1720 = vpop.f32.mrb[0].mxu0
      %v1721 = vadd.f32 0.0, %v1720
      %v1722 = vpop.f32.mrb[0].mxu0
      %1723 = vmatprep.mubr.bf16.mxu0 0
      %1724 = vmatmul.mubr.bf16.gmra.mrb[0].mxu0 %v1584
      %v1725 = vpop.f32.mrb[0].mxu0
      %v1726 = vadd.f32 0.0, %v1725
      %v1727 = vpop.f32.mrb[0].mxu0
      %v1728 = vpop.f32.mrb[0].mxu0
      %v1729 = vadd.f32 0.0, %v1728
      %v1730 = vpop.f32.mrb[0].mxu0
      %1731 = vmatprep.mubr.bf16.mxu0 0
      %1732 = vmatmul.mubr.bf16.gmra.mrb[0].mxu0 %v1585
      %v1733 = vpop.f32.mrb[0].mxu0
      %v1734 = vadd.f32 0.0, %v1733
      %v1735 = vpop.f32.mrb[0].mxu0
      %v1736 = vpop.f32.mrb[0].mxu0
      %v1737 = vadd.f32 0.0, %v1736
      %v1738 = vpop.f32.mrb[0].mxu0
      %1739 = vmatprep.mubr.bf16.mxu0 0
      %1740 = vmatmul.mubr.bf16.gmra.mrb[0].mxu0 %v1586
      %v1741 = vpop.f32.mrb[0].mxu0
      %v1742 = vadd.f32 0.0, %v1741
      %v1743 = vpop.f32.mrb[0].mxu0
      %v1744 = vpop.f32.mrb[0].mxu0
      %v1745 = vadd.f32 0.0, %v1744
      %v1746 = vpop.f32.mrb[0].mxu0
      %1747 = vdwg.mxu0
      %v1748 = vadd.f32 %v1547, %v1686
      %v1749 = vadd.f32 %v1548, %v1689
      %v1750 = vadd.f32 %v1549, %v1694
      %v1751 = vadd.f32 %v1550, %v1697
      %v1752 = vadd.f32 %v1551, %v1702
      %v1753 = vadd.f32 %v1552, %v1705
      %v1754 = vadd.f32 %v1553, %v1710
      %v1755 = vadd.f32 %v1554, %v1713
      %v1756 = vadd.f32 %v1555, %v1718
      %v1757 = vadd.f32 %v1556, %v1721
      %v1758 = vadd.f32 %v1557, %v1726
      %v1759 = vadd.f32 %v1558, %v1729
      %v1760 = vadd.f32 %v1559, %v1734
      %v1761 = vadd.f32 %v1560, %v1737
      %v1762 = vadd.f32 %v1561, %v1742
      %v1763 = vadd.f32 %v1562, %v1745
      %v1764 = vld [vmem:[%s959] sm:$0xff]
      %v1765 = vld [vmem:[%s959 + $0x10] sm:$0xff]
      %v1766 = vld [vmem:[%s959 + $0x20] sm:$0xff]
      %v1767 = vld [vmem:[%s959 + $0x30] sm:$0xff]
      %v1768 = vld [vmem:[%s959 + $0x40] sm:$0xff]
      %v1769 = vld [vmem:[%s959 + $0x50] sm:$0xff]
      %v1770 = vld [vmem:[%s959 + $0x60] sm:$0xff]
      %v1771 = vld [vmem:[%s959 + $0x70] sm:$0xff]
      %v1772 = vld [vmem:[%s959 + $0x88] sm:$0xff]
      %v1773 = vld [vmem:[%s959 + $0x98] sm:$0xff]
      %v1774 = vld [vmem:[%s959 + $0xa8] sm:$0xff]
      %v1775 = vld [vmem:[%s959 + $0xb8] sm:$0xff]
      %v1776 = vld [vmem:[%s959 + $0xc8] sm:$0xff]
      %v1777 = vld [vmem:[%s959 + $0xd8] sm:$0xff]
      %v1778 = vld [vmem:[%s959 + $0xe8] sm:$0xff]
      %v1779 = vld [vmem:[%s959 + $0xf8] sm:$0xff]
      %v1780 = vpack.c.bf16 %v1765, %v1764
      %v1781 = vpack.c.bf16 %v1767, %v1766
      %v1782 = vpack.c.bf16 %v1769, %v1768
      %v1783 = vpack.c.bf16 %v1771, %v1770
      %v1784 = vpack.c.bf16 %v1773, %v1772
      %v1785 = vpack.c.bf16 %v1775, %v1774
      %v1786 = vpack.c.bf16 %v1777, %v1776
      %v1787 = vpack.c.bf16 %v1779, %v1778
      %v1788 = vld [vmem:[%s310 + $0x100] sm:$0xf]
      %v1789 = vld [vmem:[%s310 + $0x104] sm:$0xf]
      %v1790 = vld [vmem:[%s310 + $0x108] sm:$0xf]
      %v1791 = vld [vmem:[%s310 + $0x10c] sm:$0xf]
      %v1792 = vld [vmem:[%s310 + $0x110] sm:$0xf]
      %v1793 = vld [vmem:[%s310 + $0x114] sm:$0xf]
      %v1794 = vld [vmem:[%s310 + $0x118] sm:$0xf]
      %v1795 = vld [vmem:[%s310 + $0x11c] sm:$0xf]
      %v1796 = vld [vmem:[%s310 + $0x120] sm:$0xf]
      %v1797 = vld [vmem:[%s310 + $0x124] sm:$0xf]
      %v1798 = vld [vmem:[%s310 + $0x128] sm:$0xf]
      %v1799 = vld [vmem:[%s310 + $0x12c] sm:$0xf]
      %v1800 = vld [vmem:[%s310 + $0x130] sm:$0xf]
      %v1801 = vld [vmem:[%s310 + $0x134] sm:$0xf]
      %v1802 = vld [vmem:[%s310 + $0x138] sm:$0xf]
      %v1803 = vld [vmem:[%s310 + $0x13c] sm:$0xf]
      %v1820 = vunpack.c.l.b16 %v1788
      %v1821 = vunpack.c.l.b16 %v1789
      %v1822 = vunpack.c.l.b16 %v1790
      %v1823 = vunpack.c.l.b16 %v1791
      %v1824 = vunpack.c.l.b16 %v1792
      %v1825 = vunpack.c.l.b16 %v1793
      %v1826 = vunpack.c.l.b16 %v1794
      %v1827 = vunpack.c.l.b16 %v1795
      %v1828 = vunpack.c.l.b16 %v1796
      %v1829 = vunpack.c.l.b16 %v1797
      %v1830 = vunpack.c.l.b16 %v1798
      %v1831 = vunpack.c.l.b16 %v1799
      %v1832 = vunpack.c.l.b16 %v1800
      %v1833 = vunpack.c.l.b16 %v1801
      %v1834 = vunpack.c.l.b16 %v1802
      %v1835 = vunpack.c.l.b16 %v1803
      %v1836 = vpack.c.b16 %v1821, %v1820
      %v1837 = vpack.c.b16 %v1823, %v1822
      %v1838 = vpack.c.b16 %v1825, %v1824
      %v1839 = vpack.c.b16 %v1827, %v1826
      %v1840 = vpack.c.b16 %v1829, %v1828
      %v1841 = vpack.c.b16 %v1831, %v1830
      %v1842 = vpack.c.b16 %v1833, %v1832
      %v1843 = vpack.c.b16 %v1835, %v1834
      %1852 = vmatprep.subr.bf16.mxu0 0
      %1853 = vmatpush1.bf16.msra.mxu0 %v1836
      %1854 = vmatprep.subr.bf16.mxu0 0
      %1855 = vmatpush1.bf16.msra.mxu0 %v1837
      %1856 = vmatprep.subr.bf16.mxu0 0
      %1857 = vmatpush1.bf16.msra.mxu0 %v1838
      %1858 = vmatprep.subr.bf16.mxu0 0
      %1859 = vmatpush1.bf16.msra.mxu0 %v1839
      %1860 = vmatprep.subr.bf16.mxu0 0
      %1861 = vmatpush1.bf16.msra.mxu0 %v1840
      %1862 = vmatprep.subr.bf16.mxu0 0
      %1863 = vmatpush1.bf16.msra.mxu0 %v1841
      %1864 = vmatprep.subr.bf16.mxu0 0
      %1865 = vmatpush1.bf16.msra.mxu0 %v1842
      %1866 = vmatprep.subr.bf16.mxu0 0
      %1867 = vmatpush1.bf16.msra.mxu0 %v1843
      %1868 = vmatprep.subr.bf16.mxu0 0
      %1869 = vmatpush1.bf16.msra.mxu0 0
      %1870 = vmatprep.subr.bf16.mxu0 0
      %1871 = vmatpush1.bf16.msra.mxu0 0
      %1872 = vmatprep.subr.bf16.mxu0 0
      %1873 = vmatpush1.bf16.msra.mxu0 0
      %1874 = vmatprep.subr.bf16.mxu0 0
      %1875 = vmatpush1.bf16.msra.mxu0 0
      %1876 = vmatprep.subr.bf16.mxu0 0
      %1877 = vmatpush1.bf16.msra.mxu0 0
      %1878 = vmatprep.subr.bf16.mxu0 0
      %1879 = vmatpush1.bf16.msra.mxu0 0
      %1880 = vmatprep.subr.bf16.mxu0 0
      %1881 = vmatpush1.bf16.msra.mxu0 0
      %1882 = vmatprep.subr.bf16.mxu0 0
      %1883 = vmatpush1.bf16.msra.mxu0 0
      %1884 = vmatprep.mubr.bf16.mxu0 0
      %1885 = vmatmul.mubr.bf16.gmra.mrb[0].mxu0 %v1780
      %v1886 = vpop.f32.mrb[0].mxu0
      %v1887 = vadd.f32 0.0, %v1886
      %v1888 = vpop.f32.mrb[0].mxu0
      %v1889 = vpop.f32.mrb[0].mxu0
      %v1890 = vadd.f32 0.0, %v1889
      %v1891 = vpop.f32.mrb[0].mxu0
      %1892 = vmatprep.mubr.bf16.mxu0 0
      %1893 = vmatmul.mubr.bf16.gmra.mrb[0].mxu0 %v1781
      %v1894 = vpop.f32.mrb[0].mxu0
      %v1895 = vadd.f32 0.0, %v1894
      %v1896 = vpop.f32.mrb[0].mxu0
      %v1897 = vpop.f32.mrb[0].mxu0
      %v1898 = vadd.f32 0.0, %v1897
      %v1899 = vpop.f32.mrb[0].mxu0
      %1900 = vmatprep.mubr.bf16.mxu0 0
      %1901 = vmatmul.mubr.bf16.gmra.mrb[0].mxu0 %v1782
      %v1902 = vpop.f32.mrb[0].mxu0
      %v1903 = vadd.f32 0.0, %v1902
      %v1904 = vpop.f32.mrb[0].mxu0
      %v1905 = vpop.f32.mrb[0].mxu0
      %v1906 = vadd.f32 0.0, %v1905
      %v1907 = vpop.f32.mrb[0].mxu0
      %1908 = vmatprep.mubr.bf16.mxu0 0
      %1909 = vmatmul.mubr.bf16.gmra.mrb[0].mxu0 %v1783
      %v1910 = vpop.f32.mrb[0].mxu0
      %v1911 = vadd.f32 0.0, %v1910
      %v1912 = vpop.f32.mrb[0].mxu0
      %v1913 = vpop.f32.mrb[0].mxu0
      %v1914 = vadd.f32 0.0, %v1913
      %v1915 = vpop.f32.mrb[0].mxu0
      %1916 = vmatprep.mubr.bf16.mxu0 0
      %1917 = vmatmul.mubr.bf16.gmra.mrb[0].mxu0 %v1784
      %v1918 = vpop.f32.mrb[0].mxu0
      %v1919 = vadd.f32 0.0, %v1918
      %v1920 = vpop.f32.mrb[0].mxu0
      %v1921 = vpop.f32.mrb[0].mxu0
      %v1922 = vadd.f32 0.0, %v1921
      %v1923 = vpop.f32.mrb[0].mxu0
      %1924 = vmatprep.mubr.bf16.mxu0 0
      %1925 = vmatmul.mubr.bf16.gmra.mrb[0].mxu0 %v1785
      %v1926 = vpop.f32.mrb[0].mxu0
      %v1927 = vadd.f32 0.0, %v1926
      %v1928 = vpop.f32.mrb[0].mxu0
      %v1929 = vpop.f32.mrb[0].mxu0
      %v1930 = vadd.f32 0.0, %v1929
      %v1931 = vpop.f32.mrb[0].mxu0
      %1932 = vmatprep.mubr.bf16.mxu0 0
      %1933 = vmatmul.mubr.bf16.gmra.mrb[0].mxu0 %v1786
      %v1934 = vpop.f32.mrb[0].mxu0
      %v1935 = vadd.f32 0.0, %v1934
      %v1936 = vpop.f32.mrb[0].mxu0
      %v1937 = vpop.f32.mrb[0].mxu0
      %v1938 = vadd.f32 0.0, %v1937
      %v1939 = vpop.f32.mrb[0].mxu0
      %1940 = vmatprep.mubr.bf16.mxu0 0
      %1941 = vmatmul.mubr.bf16.gmra.mrb[0].mxu0 %v1787
      %v1942 = vpop.f32.mrb[0].mxu0
      %v1943 = vadd.f32 0.0, %v1942
      %v1944 = vpop.f32.mrb[0].mxu0
      %v1945 = vpop.f32.mrb[0].mxu0
      %v1946 = vadd.f32 0.0, %v1945
      %v1947 = vpop.f32.mrb[0].mxu0
      %1948 = vdwg.mxu0
      %v1949 = vadd.f32 %v1748, %v1887
      %v1950 = vadd.f32 %v1749, %v1890
      %v1951 = vadd.f32 %v1750, %v1895
      %v1952 = vadd.f32 %v1751, %v1898
      %v1953 = vadd.f32 %v1752, %v1903
      %v1954 = vadd.f32 %v1753, %v1906
      %v1955 = vadd.f32 %v1754, %v1911
      %v1956 = vadd.f32 %v1755, %v1914
      %v1957 = vadd.f32 %v1756, %v1919
      %v1958 = vadd.f32 %v1757, %v1922
      %v1959 = vadd.f32 %v1758, %v1927
      %v1960 = vadd.f32 %v1759, %v1930
      %v1961 = vadd.f32 %v1760, %v1935
      %v1962 = vadd.f32 %v1761, %v1938
      %v1963 = vadd.f32 %v1762, %v1943
      %v1964 = vadd.f32 %v1763, %v1946
      %v1965 = vld [vmem:[%s830 + $0x1] sm:$0xff]
      %v1966 = vld [vmem:[%s830 + $0x21] sm:$0xff]
      %v1967 = vld [vmem:[%s830 + $0x41] sm:$0xff]
      %v1968 = vld [vmem:[%s830 + $0x61] sm:$0xff]
      %v1969 = vld [vmem:[%s830 + $0x81] sm:$0xff]
      %v1970 = vld [vmem:[%s830 + $0xa1] sm:$0xff]
      %v1971 = vld [vmem:[%s830 + $0xc1] sm:$0xff]
      %v1972 = vld [vmem:[%s830 + $0xe1] sm:$0xff]
      %v1973 = vld [vmem:[%s830 + $0x111] sm:$0xff]
      %v1974 = vld [vmem:[%s830 + $0x131] sm:$0xff]
      %v1975 = vld [vmem:[%s830 + $0x151] sm:$0xff]
      %v1976 = vld [vmem:[%s830 + $0x171] sm:$0xff]
      %v1977 = vld [vmem:[%s830 + $0x191] sm:$0xff]
      %v1978 = vld [vmem:[%s830 + $0x1b1] sm:$0xff]
      %v1979 = vld [vmem:[%s830 + $0x1d1] sm:$0xff]
      %v1980 = vld [vmem:[%s830 + $0x1f1] sm:$0xff]
      %v1981 = vpack.c.bf16 %v1966, %v1965
      %v1982 = vpack.c.bf16 %v1968, %v1967
      %v1983 = vpack.c.bf16 %v1970, %v1969
      %v1984 = vpack.c.bf16 %v1972, %v1971
      %v1985 = vpack.c.bf16 %v1974, %v1973
      %v1986 = vpack.c.bf16 %v1976, %v1975
      %v1987 = vpack.c.bf16 %v1978, %v1977
      %v1988 = vpack.c.bf16 %v1980, %v1979
      %v1989 = vld [vmem:[%s310 + $0x140] sm:$0xf]
      %v1990 = vld [vmem:[%s310 + $0x144] sm:$0xf]
      %v1991 = vld [vmem:[%s310 + $0x148] sm:$0xf]
      %v1992 = vld [vmem:[%s310 + $0x14c] sm:$0xf]
      %v1993 = vld [vmem:[%s310 + $0x150] sm:$0xf]
      %v1994 = vld [vmem:[%s310 + $0x154] sm:$0xf]
      %v1995 = vld [vmem:[%s310 + $0x158] sm:$0xf]
      %v1996 = vld [vmem:[%s310 + $0x15c] sm:$0xf]
      %v1997 = vld [vmem:[%s310 + $0x160] sm:$0xf]
      %v1998 = vld [vmem:[%s310 + $0x164] sm:$0xf]
      %v1999 = vld [vmem:[%s310 + $0x168] sm:$0xf]
      %v2000 = vld [vmem:[%s310 + $0x16c] sm:$0xf]
      %v2001 = vld [vmem:[%s310 + $0x170] sm:$0xf]
      %v2002 = vld [vmem:[%s310 + $0x174] sm:$0xf]
      %v2003 = vld [vmem:[%s310 + $0x178] sm:$0xf]
      %v2004 = vld [vmem:[%s310 + $0x17c] sm:$0xf]
      %v2021 = vunpack.c.l.b16 %v1989
      %v2022 = vunpack.c.l.b16 %v1990
      %v2023 = vunpack.c.l.b16 %v1991
      %v2024 = vunpack.c.l.b16 %v1992
      %v2025 = vunpack.c.l.b16 %v1993
      %v2026 = vunpack.c.l.b16 %v1994
      %v2027 = vunpack.c.l.b16 %v1995
      %v2028 = vunpack.c.l.b16 %v1996
      %v2029 = vunpack.c.l.b16 %v1997
      %v2030 = vunpack.c.l.b16 %v1998
      %v2031 = vunpack.c.l.b16 %v1999
      %v2032 = vunpack.c.l.b16 %v2000
      %v2033 = vunpack.c.l.b16 %v2001
      %v2034 = vunpack.c.l.b16 %v2002
      %v2035 = vunpack.c.l.b16 %v2003
      %v2036 = vunpack.c.l.b16 %v2004
      %v2037 = vpack.c.b16 %v2022, %v2021
      %v2038 = vpack.c.b16 %v2024, %v2023
      %v2039 = vpack.c.b16 %v2026, %v2025
      %v2040 = vpack.c.b16 %v2028, %v2027
      %v2041 = vpack.c.b16 %v2030, %v2029
      %v2042 = vpack.c.b16 %v2032, %v2031
      %v2043 = vpack.c.b16 %v2034, %v2033
      %v2044 = vpack.c.b16 %v2036, %v2035
      %2053 = vmatprep.subr.bf16.mxu0 0
      %2054 = vmatpush1.bf16.msra.mxu0 %v2037
      %2055 = vmatprep.subr.bf16.mxu0 0
      %2056 = vmatpush1.bf16.msra.mxu0 %v2038
      %2057 = vmatprep.subr.bf16.mxu0 0
      %2058 = vmatpush1.bf16.msra.mxu0 %v2039
      %2059 = vmatprep.subr.bf16.mxu0 0
      %2060 = vmatpush1.bf16.msra.mxu0 %v2040
      %2061 = vmatprep.subr.bf16.mxu0 0
      %2062 = vmatpush1.bf16.msra.mxu0 %v2041
      %2063 = vmatprep.subr.bf16.mxu0 0
      %2064 = vmatpush1.bf16.msra.mxu0 %v2042
      %2065 = vmatprep.subr.bf16.mxu0 0
      %2066 = vmatpush1.bf16.msra.mxu0 %v2043
      %2067 = vmatprep.subr.bf16.mxu0 0
      %2068 = vmatpush1.bf16.msra.mxu0 %v2044
      %2069 = vmatprep.subr.bf16.mxu0 0
      %2070 = vmatpush1.bf16.msra.mxu0 0
      %2071 = vmatprep.subr.bf16.mxu0 0
      %2072 = vmatpush1.bf16.msra.mxu0 0
      %2073 = vmatprep.subr.bf16.mxu0 0
      %2074 = vmatpush1.bf16.msra.mxu0 0
      %2075 = vmatprep.subr.bf16.mxu0 0
      %2076 = vmatpush1.bf16.msra.mxu0 0
      %2077 = vmatprep.subr.bf16.mxu0 0
      %2078 = vmatpush1.bf16.msra.mxu0 0
      %2079 = vmatprep.subr.bf16.mxu0 0
      %2080 = vmatpush1.bf16.msra.mxu0 0
      %2081 = vmatprep.subr.bf16.mxu0 0
      %2082 = vmatpush1.bf16.msra.mxu0 0
      %2083 = vmatprep.subr.bf16.mxu0 0
      %2084 = vmatpush1.bf16.msra.mxu0 0
      %2085 = vmatprep.mubr.bf16.mxu0 0
      %2086 = vmatmul.mubr.bf16.gmra.mrb[0].mxu0 %v1981
      %v2087 = vpop.f32.mrb[0].mxu0
      %v2088 = vadd.f32 0.0, %v2087
      %v2089 = vpop.f32.mrb[0].mxu0
      %v2090 = vpop.f32.mrb[0].mxu0
      %v2091 = vadd.f32 0.0, %v2090
      %v2092 = vpop.f32.mrb[0].mxu0
      %2093 = vmatprep.mubr.bf16.mxu0 0
      %2094 = vmatmul.mubr.bf16.gmra.mrb[0].mxu0 %v1982
      %v2095 = vpop.f32.mrb[0].mxu0
      %v2096 = vadd.f32 0.0, %v2095
      %v2097 = vpop.f32.mrb[0].mxu0
      %v2098 = vpop.f32.mrb[0].mxu0
      %v2099 = vadd.f32 0.0, %v2098
      %v2100 = vpop.f32.mrb[0].mxu0
      %2101 = vmatprep.mubr.bf16.mxu0 0
      %2102 = vmatmul.mubr.bf16.gmra.mrb[0].mxu0 %v1983
      %v2103 = vpop.f32.mrb[0].mxu0
      %v2104 = vadd.f32 0.0, %v2103
      %v2105 = vpop.f32.mrb[0].mxu0
      %v2106 = vpop.f32.mrb[0].mxu0
      %v2107 = vadd.f32 0.0, %v2106
      %v2108 = vpop.f32.mrb[0].mxu0
      %2109 = vmatprep.mubr.bf16.mxu0 0
      %2110 = vmatmul.mubr.bf16.gmra.mrb[0].mxu0 %v1984
      %v2111 = vpop.f32.mrb[0].mxu0
      %v2112 = vadd.f32 0.0, %v2111
      %v2113 = vpop.f32.mrb[0].mxu0
      %v2114 = vpop.f32.mrb[0].mxu0
      %v2115 = vadd.f32 0.0, %v2114
      %v2116 = vpop.f32.mrb[0].mxu0
      %2117 = vmatprep.mubr.bf16.mxu0 0
      %2118 = vmatmul.mubr.bf16.gmra.mrb[0].mxu0 %v1985
      %v2119 = vpop.f32.mrb[0].mxu0
      %v2120 = vadd.f32 0.0, %v2119
      %v2121 = vpop.f32.mrb[0].mxu0
      %v2122 = vpop.f32.mrb[0].mxu0
      %v2123 = vadd.f32 0.0, %v2122
      %v2124 = vpop.f32.mrb[0].mxu0
      %2125 = vmatprep.mubr.bf16.mxu0 0
      %2126 = vmatmul.mubr.bf16.gmra.mrb[0].mxu0 %v1986
      %v2127 = vpop.f32.mrb[0].mxu0
      %v2128 = vadd.f32 0.0, %v2127
      %v2129 = vpop.f32.mrb[0].mxu0
      %v2130 = vpop.f32.mrb[0].mxu0
      %v2131 = vadd.f32 0.0, %v2130
      %v2132 = vpop.f32.mrb[0].mxu0
      %2133 = vmatprep.mubr.bf16.mxu0 0
      %2134 = vmatmul.mubr.bf16.gmra.mrb[0].mxu0 %v1987
      %v2135 = vpop.f32.mrb[0].mxu0
      %v2136 = vadd.f32 0.0, %v2135
      %v2137 = vpop.f32.mrb[0].mxu0
      %v2138 = vpop.f32.mrb[0].mxu0
      %v2139 = vadd.f32 0.0, %v2138
      %v2140 = vpop.f32.mrb[0].mxu0
      %2141 = vmatprep.mubr.bf16.mxu0 0
      %2142 = vmatmul.mubr.bf16.gmra.mrb[0].mxu0 %v1988
      %v2143 = vpop.f32.mrb[0].mxu0
      %v2144 = vadd.f32 0.0, %v2143
      %v2145 = vpop.f32.mrb[0].mxu0
      %v2146 = vpop.f32.mrb[0].mxu0
      %v2147 = vadd.f32 0.0, %v2146
      %v2148 = vpop.f32.mrb[0].mxu0
      %2149 = vdwg.mxu0
      %v2150 = vadd.f32 %v1949, %v2088
      %v2151 = vadd.f32 %v1950, %v2091
      %v2152 = vadd.f32 %v1951, %v2096
      %v2153 = vadd.f32 %v1952, %v2099
      %v2154 = vadd.f32 %v1953, %v2104
      %v2155 = vadd.f32 %v1954, %v2107
      %v2156 = vadd.f32 %v1955, %v2112
      %v2157 = vadd.f32 %v1956, %v2115
      %v2158 = vadd.f32 %v1957, %v2120
      %v2159 = vadd.f32 %v1958, %v2123
      %v2160 = vadd.f32 %v1959, %v2128
      %v2161 = vadd.f32 %v1960, %v2131
      %v2162 = vadd.f32 %v1961, %v2136
      %v2163 = vadd.f32 %v1962, %v2139
      %v2164 = vadd.f32 %v1963, %v2144
      %v2165 = vadd.f32 %v1964, %v2147
      %s2166 = scalar_lea.vmem [#allocation2], 32
      %v2167 = vld [vmem:[%s2166] sm:$0xff]
      %v2168 = vld [vmem:[%s2166 + $0x20] sm:$0xff]
      %v2169 = vld [vmem:[%s2166 + $0x40] sm:$0xff]
      %v2170 = vld [vmem:[%s2166 + $0x60] sm:$0xff]
      %v2171 = vld [vmem:[%s2166 + $0x80] sm:$0xff]
      %v2172 = vld [vmem:[%s2166 + $0xa0] sm:$0xff]
      %v2173 = vld [vmem:[%s2166 + $0xc0] sm:$0xff]
      %v2174 = vld [vmem:[%s2166 + $0xe0] sm:$0xff]
      %v2175 = vld [vmem:[%s2166 + $0x110] sm:$0xff]
      %v2176 = vld [vmem:[%s2166 + $0x130] sm:$0xff]
      %v2177 = vld [vmem:[%s2166 + $0x150] sm:$0xff]
      %v2178 = vld [vmem:[%s2166 + $0x170] sm:$0xff]
      %v2179 = vld [vmem:[%s2166 + $0x190] sm:$0xff]
      %v2180 = vld [vmem:[%s2166 + $0x1b0] sm:$0xff]
      %v2181 = vld [vmem:[%s2166 + $0x1d0] sm:$0xff]
      %v2182 = vld [vmem:[%s2166 + $0x1f0] sm:$0xff]
      %v2183 = vpack.c.bf16 %v2168, %v2167
      %v2184 = vpack.c.bf16 %v2170, %v2169
      %v2185 = vpack.c.bf16 %v2172, %v2171
      %v2186 = vpack.c.bf16 %v2174, %v2173
      %v2187 = vpack.c.bf16 %v2176, %v2175
      %v2188 = vpack.c.bf16 %v2178, %v2177
      %v2189 = vpack.c.bf16 %v2180, %v2179
      %v2190 = vpack.c.bf16 %v2182, %v2181
      %v2191 = vld [vmem:[%s310 + $0x180] sm:$0xf]
      %v2192 = vld [vmem:[%s310 + $0x184] sm:$0xf]
      %v2193 = vld [vmem:[%s310 + $0x188] sm:$0xf]
      %v2194 = vld [vmem:[%s310 + $0x18c] sm:$0xf]
      %v2195 = vld [vmem:[%s310 + $0x190] sm:$0xf]
      %v2196 = vld [vmem:[%s310 + $0x194] sm:$0xf]
      %v2197 = vld [vmem:[%s310 + $0x198] sm:$0xf]
      %v2198 = vld [vmem:[%s310 + $0x19c] sm:$0xf]
      %v2199 = vld [vmem:[%s310 + $0x1a0] sm:$0xf]
      %v2200 = vld [vmem:[%s310 + $0x1a4] sm:$0xf]
      %v2201 = vld [vmem:[%s310 + $0x1a8] sm:$0xf]
      %v2202 = vld [vmem:[%s310 + $0x1ac] sm:$0xf]
      %v2203 = vld [vmem:[%s310 + $0x1b0] sm:$0xf]
      %v2204 = vld [vmem:[%s310 + $0x1b4] sm:$0xf]
      %v2205 = vld [vmem:[%s310 + $0x1b8] sm:$0xf]
      %v2206 = vld [vmem:[%s310 + $0x1bc] sm:$0xf]
      %v2223 = vunpack.c.l.b16 %v2191
      %v2224 = vunpack.c.l.b16 %v2192
      %v2225 = vunpack.c.l.b16 %v2193
      %v2226 = vunpack.c.l.b16 %v2194
      %v2227 = vunpack.c.l.b16 %v2195
      %v2228 = vunpack.c.l.b16 %v2196
      %v2229 = vunpack.c.l.b16 %v2197
      %v2230 = vunpack.c.l.b16 %v2198
      %v2231 = vunpack.c.l.b16 %v2199
      %v2232 = vunpack.c.l.b16 %v2200
      %v2233 = vunpack.c.l.b16 %v2201
      %v2234 = vunpack.c.l.b16 %v2202
      %v2235 = vunpack.c.l.b16 %v2203
      %v2236 = vunpack.c.l.b16 %v2204
      %v2237 = vunpack.c.l.b16 %v2205
      %v2238 = vunpack.c.l.b16 %v2206
      %v2239 = vpack.c.b16 %v2224, %v2223
      %v2240 = vpack.c.b16 %v2226, %v2225
      %v2241 = vpack.c.b16 %v2228, %v2227
      %v2242 = vpack.c.b16 %v2230, %v2229
      %v2243 = vpack.c.b16 %v2232, %v2231
      %v2244 = vpack.c.b16 %v2234, %v2233
      %v2245 = vpack.c.b16 %v2236, %v2235
      %v2246 = vpack.c.b16 %v2238, %v2237
      %2255 = vmatprep.subr.bf16.mxu0 0
      %2256 = vmatpush1.bf16.msra.mxu0 %v2239
      %2257 = vmatprep.subr.bf16.mxu0 0
      %2258 = vmatpush1.bf16.msra.mxu0 %v2240
      %2259 = vmatprep.subr.bf16.mxu0 0
      %2260 = vmatpush1.bf16.msra.mxu0 %v2241
      %2261 = vmatprep.subr.bf16.mxu0 0
      %2262 = vmatpush1.bf16.msra.mxu0 %v2242
      %2263 = vmatprep.subr.bf16.mxu0 0
      %2264 = vmatpush1.bf16.msra.mxu0 %v2243
      %2265 = vmatprep.subr.bf16.mxu0 0
      %2266 = vmatpush1.bf16.msra.mxu0 %v2244
      %2267 = vmatprep.subr.bf16.mxu0 0
      %2268 = vmatpush1.bf16.msra.mxu0 %v2245
      %2269 = vmatprep.subr.bf16.mxu0 0
      %2270 = vmatpush1.bf16.msra.mxu0 %v2246
      %2271 = vmatprep.subr.bf16.mxu0 0
      %2272 = vmatpush1.bf16.msra.mxu0 0
      %2273 = vmatprep.subr.bf16.mxu0 0
      %2274 = vmatpush1.bf16.msra.mxu0 0
      %2275 = vmatprep.subr.bf16.mxu0 0
      %2276 = vmatpush1.bf16.msra.mxu0 0
      %2277 = vmatprep.subr.bf16.mxu0 0
      %2278 = vmatpush1.bf16.msra.mxu0 0
      %2279 = vmatprep.subr.bf16.mxu0 0
      %2280 = vmatpush1.bf16.msra.mxu0 0
      %2281 = vmatprep.subr.bf16.mxu0 0
      %2282 = vmatpush1.bf16.msra.mxu0 0
      %2283 = vmatprep.subr.bf16.mxu0 0
      %2284 = vmatpush1.bf16.msra.mxu0 0
      %2285 = vmatprep.subr.bf16.mxu0 0
      %2286 = vmatpush1.bf16.msra.mxu0 0
      %2287 = vmatprep.mubr.bf16.mxu0 0
      %2288 = vmatmul.mubr.bf16.gmra.mrb[0].mxu0 %v2183
      %v2289 = vpop.f32.mrb[0].mxu0
      %v2290 = vadd.f32 0.0, %v2289
      %v2291 = vpop.f32.mrb[0].mxu0
      %v2292 = vpop.f32.mrb[0].mxu0
      %v2293 = vadd.f32 0.0, %v2292
      %v2294 = vpop.f32.mrb[0].mxu0
      %2295 = vmatprep.mubr.bf16.mxu0 0
      %2296 = vmatmul.mubr.bf16.gmra.mrb[0].mxu0 %v2184
      %v2297 = vpop.f32.mrb[0].mxu0
      %v2298 = vadd.f32 0.0, %v2297
      %v2299 = vpop.f32.mrb[0].mxu0
      %v2300 = vpop.f32.mrb[0].mxu0
      %v2301 = vadd.f32 0.0, %v2300
      %v2302 = vpop.f32.mrb[0].mxu0
      %2303 = vmatprep.mubr.bf16.mxu0 0
      %2304 = vmatmul.mubr.bf16.gmra.mrb[0].mxu0 %v2185
      %v2305 = vpop.f32.mrb[0].mxu0
      %v2306 = vadd.f32 0.0, %v2305
      %v2307 = vpop.f32.mrb[0].mxu0
      %v2308 = vpop.f32.mrb[0].mxu0
      %v2309 = vadd.f32 0.0, %v2308
      %v2310 = vpop.f32.mrb[0].mxu0
      %2311 = vmatprep.mubr.bf16.mxu0 0
      %2312 = vmatmul.mubr.bf16.gmra.mrb[0].mxu0 %v2186
      %v2313 = vpop.f32.mrb[0].mxu0
      %v2314 = vadd.f32 0.0, %v2313
      %v2315 = vpop.f32.mrb[0].mxu0
      %v2316 = vpop.f32.mrb[0].mxu0
      %v2317 = vadd.f32 0.0, %v2316
      %v2318 = vpop.f32.mrb[0].mxu0
      %2319 = vmatprep.mubr.bf16.mxu0 0
      %2320 = vmatmul.mubr.bf16.gmra.mrb[0].mxu0 %v2187
      %v2321 = vpop.f32.mrb[0].mxu0
      %v2322 = vadd.f32 0.0, %v2321
      %v2323 = vpop.f32.mrb[0].mxu0
      %v2324 = vpop.f32.mrb[0].mxu0
      %v2325 = vadd.f32 0.0, %v2324
      %v2326 = vpop.f32.mrb[0].mxu0
      %2327 = vmatprep.mubr.bf16.mxu0 0
      %2328 = vmatmul.mubr.bf16.gmra.mrb[0].mxu0 %v2188
      %v2329 = vpop.f32.mrb[0].mxu0
      %v2330 = vadd.f32 0.0, %v2329
      %v2331 = vpop.f32.mrb[0].mxu0
      %v2332 = vpop.f32.mrb[0].mxu0
      %v2333 = vadd.f32 0.0, %v2332
      %v2334 = vpop.f32.mrb[0].mxu0
      %2335 = vmatprep.mubr.bf16.mxu0 0
      %2336 = vmatmul.mubr.bf16.gmra.mrb[0].mxu0 %v2189
      %v2337 = vpop.f32.mrb[0].mxu0
      %v2338 = vadd.f32 0.0, %v2337
      %v2339 = vpop.f32.mrb[0].mxu0
      %v2340 = vpop.f32.mrb[0].mxu0
      %v2341 = vadd.f32 0.0, %v2340
      %v2342 = vpop.f32.mrb[0].mxu0
      %2343 = vmatprep.mubr.bf16.mxu0 0
      %2344 = vmatmul.mubr.bf16.gmra.mrb[0].mxu0 %v2190
      %v2345 = vpop.f32.mrb[0].mxu0
      %v2346 = vadd.f32 0.0, %v2345
      %v2347 = vpop.f32.mrb[0].mxu0
      %v2348 = vpop.f32.mrb[0].mxu0
      %v2349 = vadd.f32 0.0, %v2348
      %v2350 = vpop.f32.mrb[0].mxu0
      %2351 = vdwg.mxu0
      %v2352 = vadd.f32 %v2150, %v2290
      %v2353 = vadd.f32 %v2151, %v2293
      %v2354 = vadd.f32 %v2152, %v2298
      %v2355 = vadd.f32 %v2153, %v2301
      %v2356 = vadd.f32 %v2154, %v2306
      %v2357 = vadd.f32 %v2155, %v2309
      %v2358 = vadd.f32 %v2156, %v2314
      %v2359 = vadd.f32 %v2157, %v2317
      %v2360 = vadd.f32 %v2158, %v2322
      %v2361 = vadd.f32 %v2159, %v2325
      %v2362 = vadd.f32 %v2160, %v2330
      %v2363 = vadd.f32 %v2161, %v2333
      %v2364 = vadd.f32 %v2162, %v2338
      %v2365 = vadd.f32 %v2163, %v2341
      %v2366 = vadd.f32 %v2164, %v2346
      %v2367 = vadd.f32 %v2165, %v2349
      %s2368 = scalar_lea.vmem [#allocation3], 16
      %v2369 = vld [vmem:[%s2368] sm:$0xff]
      %v2370 = vld [vmem:[%s2368 + $0x10] sm:$0xff]
      %v2371 = vld [vmem:[%s2368 + $0x20] sm:$0xff]
      %v2372 = vld [vmem:[%s2368 + $0x30] sm:$0xff]
      %v2373 = vld [vmem:[%s2368 + $0x40] sm:$0xff]
      %v2374 = vld [vmem:[%s2368 + $0x50] sm:$0xff]
      %v2375 = vld [vmem:[%s2368 + $0x60] sm:$0xff]
      %v2376 = vld [vmem:[%s2368 + $0x70] sm:$0xff]
      %v2377 = vld [vmem:[%s2368 + $0x88] sm:$0xff]
      %v2378 = vld [vmem:[%s2368 + $0x98] sm:$0xff]
      %v2379 = vld [vmem:[%s2368 + $0xa8] sm:$0xff]
      %v2380 = vld [vmem:[%s2368 + $0xb8] sm:$0xff]
      %v2381 = vld [vmem:[%s2368 + $0xc8] sm:$0xff]
      %v2382 = vld [vmem:[%s2368 + $0xd8] sm:$0xff]
      %v2383 = vld [vmem:[%s2368 + $0xe8] sm:$0xff]
      %v2384 = vld [vmem:[%s2368 + $0xf8] sm:$0xff]
      %v2385 = vpack.c.bf16 %v2370, %v2369
      %v2386 = vpack.c.bf16 %v2372, %v2371
      %v2387 = vpack.c.bf16 %v2374, %v2373
      %v2388 = vpack.c.bf16 %v2376, %v2375
      %v2389 = vpack.c.bf16 %v2378, %v2377
      %v2390 = vpack.c.bf16 %v2380, %v2379
      %v2391 = vpack.c.bf16 %v2382, %v2381
      %v2392 = vpack.c.bf16 %v2384, %v2383
      %v2393 = vld [vmem:[%s310 + $0x1c0] sm:$0xf]
      %v2394 = vld [vmem:[%s310 + $0x1c4] sm:$0xf]
      %v2395 = vld [vmem:[%s310 + $0x1c8] sm:$0xf]
      %v2396 = vld [vmem:[%s310 + $0x1cc] sm:$0xf]
      %v2397 = vld [vmem:[%s310 + $0x1d0] sm:$0xf]
      %v2398 = vld [vmem:[%s310 + $0x1d4] sm:$0xf]
      %v2399 = vld [vmem:[%s310 + $0x1d8] sm:$0xf]
      %v2400 = vld [vmem:[%s310 + $0x1dc] sm:$0xf]
      %v2401 = vld [vmem:[%s310 + $0x1e0] sm:$0xf]
      %v2402 = vld [vmem:[%s310 + $0x1e4] sm:$0xf]
      %v2403 = vld [vmem:[%s310 + $0x1e8] sm:$0xf]
      %v2404 = vld [vmem:[%s310 + $0x1ec] sm:$0xf]
      %v2405 = vld [vmem:[%s310 + $0x1f0] sm:$0xf]
      %v2406 = vld [vmem:[%s310 + $0x1f4] sm:$0xf]
      %v2407 = vld [vmem:[%s310 + $0x1f8] sm:$0xf]
      %v2408 = vld [vmem:[%s310 + $0x1fc] sm:$0xf]
      %v2425 = vunpack.c.l.b16 %v2393
      %v2426 = vunpack.c.l.b16 %v2394
      %v2427 = vunpack.c.l.b16 %v2395
      %v2428 = vunpack.c.l.b16 %v2396
      %v2429 = vunpack.c.l.b16 %v2397
      %v2430 = vunpack.c.l.b16 %v2398
      %v2431 = vunpack.c.l.b16 %v2399
      %v2432 = vunpack.c.l.b16 %v2400
      %v2433 = vunpack.c.l.b16 %v2401
      %v2434 = vunpack.c.l.b16 %v2402
      %v2435 = vunpack.c.l.b16 %v2403
      %v2436 = vunpack.c.l.b16 %v2404
      %v2437 = vunpack.c.l.b16 %v2405
      %v2438 = vunpack.c.l.b16 %v2406
      %v2439 = vunpack.c.l.b16 %v2407
      %v2440 = vunpack.c.l.b16 %v2408
      %v2441 = vpack.c.b16 %v2426, %v2425
      %v2442 = vpack.c.b16 %v2428, %v2427
      %v2443 = vpack.c.b16 %v2430, %v2429
      %v2444 = vpack.c.b16 %v2432, %v2431
      %v2445 = vpack.c.b16 %v2434, %v2433
      %v2446 = vpack.c.b16 %v2436, %v2435
      %v2447 = vpack.c.b16 %v2438, %v2437
      %v2448 = vpack.c.b16 %v2440, %v2439
      %2457 = vmatprep.subr.bf16.mxu0 0
      %2458 = vmatpush1.bf16.msra.mxu0 %v2441
      %2459 = vmatprep.subr.bf16.mxu0 0
      %2460 = vmatpush1.bf16.msra.mxu0 %v2442
      %2461 = vmatprep.subr.bf16.mxu0 0
      %2462 = vmatpush1.bf16.msra.mxu0 %v2443
      %2463 = vmatprep.subr.bf16.mxu0 0
      %2464 = vmatpush1.bf16.msra.mxu0 %v2444
      %2465 = vmatprep.subr.bf16.mxu0 0
      %2466 = vmatpush1.bf16.msra.mxu0 %v2445
      %2467 = vmatprep.subr.bf16.mxu0 0
      %2468 = vmatpush1.bf16.msra.mxu0 %v2446
      %2469 = vmatprep.subr.bf16.mxu0 0
      %2470 = vmatpush1.bf16.msra.mxu0 %v2447
      %2471 = vmatprep.subr.bf16.mxu0 0
      %2472 = vmatpush1.bf16.msra.mxu0 %v2448
      %2473 = vmatprep.subr.bf16.mxu0 0
      %2474 = vmatpush1.bf16.msra.mxu0 0
      %2475 = vmatprep.subr.bf16.mxu0 0
      %2476 = vmatpush1.bf16.msra.mxu0 0
      %2477 = vmatprep.subr.bf16.mxu0 0
      %2478 = vmatpush1.bf16.msra.mxu0 0
      %2479 = vmatprep.subr.bf16.mxu0 0
      %2480 = vmatpush1.bf16.msra.mxu0 0
      %2481 = vmatprep.subr.bf16.mxu0 0
      %2482 = vmatpush1.bf16.msra.mxu0 0
      %2483 = vmatprep.subr.bf16.mxu0 0
      %2484 = vmatpush1.bf16.msra.mxu0 0
      %2485 = vmatprep.subr.bf16.mxu0 0
      %2486 = vmatpush1.bf16.msra.mxu0 0
      %2487 = vmatprep.subr.bf16.mxu0 0
      %2488 = vmatpush1.bf16.msra.mxu0 0
      %2489 = vmatprep.mubr.bf16.mxu0 0
      %2490 = vmatmul.mubr.bf16.gmra.mrb[0].mxu0 %v2385
      %v2491 = vpop.f32.mrb[0].mxu0
      %v2492 = vadd.f32 0.0, %v2491
      %v2493 = vpop.f32.mrb[0].mxu0
      %v2494 = vpop.f32.mrb[0].mxu0
      %v2495 = vadd.f32 0.0, %v2494
      %v2496 = vpop.f32.mrb[0].mxu0
      %2497 = vmatprep.mubr.bf16.mxu0 0
      %2498 = vmatmul.mubr.bf16.gmra.mrb[0].mxu0 %v2386
      %v2499 = vpop.f32.mrb[0].mxu0
      %v2500 = vadd.f32 0.0, %v2499
      %v2501 = vpop.f32.mrb[0].mxu0
      %v2502 = vpop.f32.mrb[0].mxu0
      %v2503 = vadd.f32 0.0, %v2502
      %v2504 = vpop.f32.mrb[0].mxu0
      %2505 = vmatprep.mubr.bf16.mxu0 0
      %2506 = vmatmul.mubr.bf16.gmra.mrb[0].mxu0 %v2387
      %v2507 = vpop.f32.mrb[0].mxu0
      %v2508 = vadd.f32 0.0, %v2507
      %v2509 = vpop.f32.mrb[0].mxu0
      %v2510 = vpop.f32.mrb[0].mxu0
      %v2511 = vadd.f32 0.0, %v2510
      %v2512 = vpop.f32.mrb[0].mxu0
      %2513 = vmatprep.mubr.bf16.mxu0 0
      %2514 = vmatmul.mubr.bf16.gmra.mrb[0].mxu0 %v2388
      %v2515 = vpop.f32.mrb[0].mxu0
      %v2516 = vadd.f32 0.0, %v2515
      %v2517 = vpop.f32.mrb[0].mxu0
      %v2518 = vpop.f32.mrb[0].mxu0
      %v2519 = vadd.f32 0.0, %v2518
      %v2520 = vpop.f32.mrb[0].mxu0
      %2521 = vmatprep.mubr.bf16.mxu0 0
      %2522 = vmatmul.mubr.bf16.gmra.mrb[0].mxu0 %v2389
      %v2523 = vpop.f32.mrb[0].mxu0
      %v2524 = vadd.f32 0.0, %v2523
      %v2525 = vpop.f32.mrb[0].mxu0
      %v2526 = vpop.f32.mrb[0].mxu0
      %v2527 = vadd.f32 0.0, %v2526
      %v2528 = vpop.f32.mrb[0].mxu0
      %2529 = vmatprep.mubr.bf16.mxu0 0
      %2530 = vmatmul.mubr.bf16.gmra.mrb[0].mxu0 %v2390
      %v2531 = vpop.f32.mrb[0].mxu0
      %v2532 = vadd.f32 0.0, %v2531
      %v2533 = vpop.f32.mrb[0].mxu0
      %v2534 = vpop.f32.mrb[0].mxu0
      %v2535 = vadd.f32 0.0, %v2534
      %v2536 = vpop.f32.mrb[0].mxu0
      %2537 = vmatprep.mubr.bf16.mxu0 0
      %2538 = vmatmul.mubr.bf16.gmra.mrb[0].mxu0 %v2391
      %v2539 = vpop.f32.mrb[0].mxu0
      %v2540 = vadd.f32 0.0, %v2539
      %v2541 = vpop.f32.mrb[0].mxu0
      %v2542 = vpop.f32.mrb[0].mxu0
      %v2543 = vadd.f32 0.0, %v2542
      %v2544 = vpop.f32.mrb[0].mxu0
      %2545 = vmatprep.mubr.bf16.mxu0 0
      %2546 = vmatmul.mubr.bf16.gmra.mrb[0].mxu0 %v2392
      %v2547 = vpop.f32.mrb[0].mxu0
      %v2548 = vadd.f32 0.0, %v2547
      %v2549 = vpop.f32.mrb[0].mxu0
      %v2550 = vpop.f32.mrb[0].mxu0
      %v2551 = vadd.f32 0.0, %v2550
      %v2552 = vpop.f32.mrb[0].mxu0
      %2553 = vdwg.mxu0
      %v2554 = vadd.f32 %v2352, %v2492
      %v2555 = vadd.f32 %v2353, %v2495
      %v2556 = vadd.f32 %v2354, %v2500
      %v2557 = vadd.f32 %v2355, %v2503
      %v2558 = vadd.f32 %v2356, %v2508
      %v2559 = vadd.f32 %v2357, %v2511
      %v2560 = vadd.f32 %v2358, %v2516
      %v2561 = vadd.f32 %v2359, %v2519
      %v2562 = vadd.f32 %v2360, %v2524
      %v2563 = vadd.f32 %v2361, %v2527
      %v2564 = vadd.f32 %v2362, %v2532
      %v2565 = vadd.f32 %v2363, %v2535
      %v2566 = vadd.f32 %v2364, %v2540
      %v2567 = vadd.f32 %v2365, %v2543
      %v2568 = vadd.f32 %v2366, %v2548
      %v2569 = vadd.f32 %v2367, %v2551
      %v2570 = vld [vmem:[%s2166 + $0x1] sm:$0xff]
      %v2571 = vld [vmem:[%s2166 + $0x21] sm:$0xff]
      %v2572 = vld [vmem:[%s2166 + $0x41] sm:$0xff]
      %v2573 = vld [vmem:[%s2166 + $0x61] sm:$0xff]
      %v2574 = vld [vmem:[%s2166 + $0x81] sm:$0xff]
      %v2575 = vld [vmem:[%s2166 + $0xa1] sm:$0xff]
      %v2576 = vld [vmem:[%s2166 + $0xc1] sm:$0xff]
      %v2577 = vld [vmem:[%s2166 + $0xe1] sm:$0xff]
      %v2578 = vld [vmem:[%s2166 + $0x111] sm:$0xff]
      %v2579 = vld [vmem:[%s2166 + $0x131] sm:$0xff]
      %v2580 = vld [vmem:[%s2166 + $0x151] sm:$0xff]
      %v2581 = vld [vmem:[%s2166 + $0x171] sm:$0xff]
      %v2582 = vld [vmem:[%s2166 + $0x191] sm:$0xff]
      %v2583 = vld [vmem:[%s2166 + $0x1b1] sm:$0xff]
      %v2584 = vld [vmem:[%s2166 + $0x1d1] sm:$0xff]
      %v2585 = vld [vmem:[%s2166 + $0x1f1] sm:$0xff]
      %v2586 = vpack.c.bf16 %v2571, %v2570
      %v2587 = vpack.c.bf16 %v2573, %v2572
      %v2588 = vpack.c.bf16 %v2575, %v2574
      %v2589 = vpack.c.bf16 %v2577, %v2576
      %v2590 = vpack.c.bf16 %v2579, %v2578
      %v2591 = vpack.c.bf16 %v2581, %v2580
      %v2592 = vpack.c.bf16 %v2583, %v2582
      %v2593 = vpack.c.bf16 %v2585, %v2584
      %v2594 = vld [vmem:[%s310 + $0x200] sm:$0xf]
      %v2595 = vld [vmem:[%s310 + $0x204] sm:$0xf]
      %v2596 = vld [vmem:[%s310 + $0x208] sm:$0xf]
      %v2597 = vld [vmem:[%s310 + $0x20c] sm:$0xf]
      %v2598 = vld [vmem:[%s310 + $0x210] sm:$0xf]
      %v2599 = vld [vmem:[%s310 + $0x214] sm:$0xf]
      %v2600 = vld [vmem:[%s310 + $0x218] sm:$0xf]
      %v2601 = vld [vmem:[%s310 + $0x21c] sm:$0xf]
      %v2602 = vld [vmem:[%s310 + $0x220] sm:$0xf]
      %v2603 = vld [vmem:[%s310 + $0x224] sm:$0xf]
      %v2604 = vld [vmem:[%s310 + $0x228] sm:$0xf]
      %v2605 = vld [vmem:[%s310 + $0x22c] sm:$0xf]
      %v2606 = vld [vmem:[%s310 + $0x230] sm:$0xf]
      %v2607 = vld [vmem:[%s310 + $0x234] sm:$0xf]
      %v2608 = vld [vmem:[%s310 + $0x238] sm:$0xf]
      %v2609 = vld [vmem:[%s310 + $0x23c] sm:$0xf]
      %v2626 = vunpack.c.l.b16 %v2594
      %v2627 = vunpack.c.l.b16 %v2595
      %v2628 = vunpack.c.l.b16 %v2596
      %v2629 = vunpack.c.l.b16 %v2597
      %v2630 = vunpack.c.l.b16 %v2598
      %v2631 = vunpack.c.l.b16 %v2599
      %v2632 = vunpack.c.l.b16 %v2600
      %v2633 = vunpack.c.l.b16 %v2601
      %v2634 = vunpack.c.l.b16 %v2602
      %v2635 = vunpack.c.l.b16 %v2603
      %v2636 = vunpack.c.l.b16 %v2604
      %v2637 = vunpack.c.l.b16 %v2605
      %v2638 = vunpack.c.l.b16 %v2606
      %v2639 = vunpack.c.l.b16 %v2607
      %v2640 = vunpack.c.l.b16 %v2608
      %v2641 = vunpack.c.l.b16 %v2609
      %v2642 = vpack.c.b16 %v2627, %v2626
      %v2643 = vpack.c.b16 %v2629, %v2628
      %v2644 = vpack.c.b16 %v2631, %v2630
      %v2645 = vpack.c.b16 %v2633, %v2632
      %v2646 = vpack.c.b16 %v2635, %v2634
      %v2647 = vpack.c.b16 %v2637, %v2636
      %v2648 = vpack.c.b16 %v2639, %v2638
      %v2649 = vpack.c.b16 %v2641, %v2640
      %2658 = vmatprep.subr.bf16.mxu0 0
      %2659 = vmatpush1.bf16.msra.mxu0 %v2642
      %2660 = vmatprep.subr.bf16.mxu0 0
      %2661 = vmatpush1.bf16.msra.mxu0 %v2643
      %2662 = vmatprep.subr.bf16.mxu0 0
      %2663 = vmatpush1.bf16.msra.mxu0 %v2644
      %2664 = vmatprep.subr.bf16.mxu0 0
      %2665 = vmatpush1.bf16.msra.mxu0 %v2645
      %2666 = vmatprep.subr.bf16.mxu0 0
      %2667 = vmatpush1.bf16.msra.mxu0 %v2646
      %2668 = vmatprep.subr.bf16.mxu0 0
      %2669 = vmatpush1.bf16.msra.mxu0 %v2647
      %2670 = vmatprep.subr.bf16.mxu0 0
      %2671 = vmatpush1.bf16.msra.mxu0 %v2648
      %2672 = vmatprep.subr.bf16.mxu0 0
      %2673 = vmatpush1.bf16.msra.mxu0 %v2649
      %2674 = vmatprep.subr.bf16.mxu0 0
      %2675 = vmatpush1.bf16.msra.mxu0 0
      %2676 = vmatprep.subr.bf16.mxu0 0
      %2677 = vmatpush1.bf16.msra.mxu0 0
      %2678 = vmatprep.subr.bf16.mxu0 0
      %2679 = vmatpush1.bf16.msra.mxu0 0
      %2680 = vmatprep.subr.bf16.mxu0 0
      %2681 = vmatpush1.bf16.msra.mxu0 0
      %2682 = vmatprep.subr.bf16.mxu0 0
      %2683 = vmatpush1.bf16.msra.mxu0 0
      %2684 = vmatprep.subr.bf16.mxu0 0
      %2685 = vmatpush1.bf16.msra.mxu0 0
      %2686 = vmatprep.subr.bf16.mxu0 0
      %2687 = vmatpush1.bf16.msra.mxu0 0
      %2688 = vmatprep.subr.bf16.mxu0 0
      %2689 = vmatpush1.bf16.msra.mxu0 0
      %2690 = vmatprep.mubr.bf16.mxu0 0
      %2691 = vmatmul.mubr.bf16.gmra.mrb[0].mxu0 %v2586
      %v2692 = vpop.f32.mrb[0].mxu0
      %v2693 = vadd.f32 0.0, %v2692
      %v2694 = vpop.f32.mrb[0].mxu0
      %v2695 = vpop.f32.mrb[0].mxu0
      %v2696 = vadd.f32 0.0, %v2695
      %v2697 = vpop.f32.mrb[0].mxu0
      %2698 = vmatprep.mubr.bf16.mxu0 0
      %2699 = vmatmul.mubr.bf16.gmra.mrb[0].mxu0 %v2587
      %v2700 = vpop.f32.mrb[0].mxu0
      %v2701 = vadd.f32 0.0, %v2700
      %v2702 = vpop.f32.mrb[0].mxu0
      %v2703 = vpop.f32.mrb[0].mxu0
      %v2704 = vadd.f32 0.0, %v2703
      %v2705 = vpop.f32.mrb[0].mxu0
      %2706 = vmatprep.mubr.bf16.mxu0 0
      %2707 = vmatmul.mubr.bf16.gmra.mrb[0].mxu0 %v2588
      %v2708 = vpop.f32.mrb[0].mxu0
      %v2709 = vadd.f32 0.0, %v2708
      %v2710 = vpop.f32.mrb[0].mxu0
      %v2711 = vpop.f32.mrb[0].mxu0
      %v2712 = vadd.f32 0.0, %v2711
      %v2713 = vpop.f32.mrb[0].mxu0
      %2714 = vmatprep.mubr.bf16.mxu0 0
      %2715 = vmatmul.mubr.bf16.gmra.mrb[0].mxu0 %v2589
      %v2716 = vpop.f32.mrb[0].mxu0
      %v2717 = vadd.f32 0.0, %v2716
      %v2718 = vpop.f32.mrb[0].mxu0
      %v2719 = vpop.f32.mrb[0].mxu0
      %v2720 = vadd.f32 0.0, %v2719
      %v2721 = vpop.f32.mrb[0].mxu0
      %2722 = vmatprep.mubr.bf16.mxu0 0
      %2723 = vmatmul.mubr.bf16.gmra.mrb[0].mxu0 %v2590
      %v2724 = vpop.f32.mrb[0].mxu0
      %v2725 = vadd.f32 0.0, %v2724
      %v2726 = vpop.f32.mrb[0].mxu0
      %v2727 = vpop.f32.mrb[0].mxu0
      %v2728 = vadd.f32 0.0, %v2727
      %v2729 = vpop.f32.mrb[0].mxu0
      %2730 = vmatprep.mubr.bf16.mxu0 0
      %2731 = vmatmul.mubr.bf16.gmra.mrb[0].mxu0 %v2591
      %v2732 = vpop.f32.mrb[0].mxu0
      %v2733 = vadd.f32 0.0, %v2732
      %v2734 = vpop.f32.mrb[0].mxu0
      %v2735 = vpop.f32.mrb[0].mxu0
      %v2736 = vadd.f32 0.0, %v2735
      %v2737 = vpop.f32.mrb[0].mxu0
      %2738 = vmatprep.mubr.bf16.mxu0 0
      %2739 = vmatmul.mubr.bf16.gmra.mrb[0].mxu0 %v2592
      %v2740 = vpop.f32.mrb[0].mxu0
      %v2741 = vadd.f32 0.0, %v2740
      %v2742 = vpop.f32.mrb[0].mxu0
      %v2743 = vpop.f32.mrb[0].mxu0
      %v2744 = vadd.f32 0.0, %v2743
      %v2745 = vpop.f32.mrb[0].mxu0
      %2746 = vmatprep.mubr.bf16.mxu0 0
      %2747 = vmatmul.mubr.bf16.gmra.mrb[0].mxu0 %v2593
      %v2748 = vpop.f32.mrb[0].mxu0
      %v2749 = vadd.f32 0.0, %v2748
      %v2750 = vpop.f32.mrb[0].mxu0
      %v2751 = vpop.f32.mrb[0].mxu0
      %v2752 = vadd.f32 0.0, %v2751
      %v2753 = vpop.f32.mrb[0].mxu0
      %2754 = vdwg.mxu0
      %v2755 = vadd.f32 %v2554, %v2693
      %v2756 = vadd.f32 %v2555, %v2696
      %v2757 = vadd.f32 %v2556, %v2701
      %v2758 = vadd.f32 %v2557, %v2704
      %v2759 = vadd.f32 %v2558, %v2709
      %v2760 = vadd.f32 %v2559, %v2712
      %v2761 = vadd.f32 %v2560, %v2717
      %v2762 = vadd.f32 %v2561, %v2720
      %v2763 = vadd.f32 %v2562, %v2725
      %v2764 = vadd.f32 %v2563, %v2728
      %v2765 = vadd.f32 %v2564, %v2733
      %v2766 = vadd.f32 %v2565, %v2736
      %v2767 = vadd.f32 %v2566, %v2741
      %v2768 = vadd.f32 %v2567, %v2744
      %v2769 = vadd.f32 %v2568, %v2749
      %v2770 = vadd.f32 %v2569, %v2752
      %v2771 = vadd.f32 %v2755, %v2756
      %v2772 = vadd.f32 %v2771, %v2757
      %v2773 = vadd.f32 %v2772, %v2758
      %v2774 = vadd.f32 %v2773, %v2759
      %v2775 = vadd.f32 %v2774, %v2760
      %v2776 = vadd.f32 %v2775, %v2761
      %v2777 = vadd.f32 %v2776, %v2762
      %v2778 = vadd.f32 %v2777, %v2763
      %v2779 = vadd.f32 %v2778, %v2764
      %v2780 = vadd.f32 %v2779, %v2765
      %v2781 = vadd.f32 %v2780, %v2766
      %v2782 = vadd.f32 %v2781, %v2767
      %v2783 = vadd.f32 %v2782, %v2768
      %v2784 = vadd.f32 %v2783, %v2769
      %v2785 = vadd.f32 %v2784, %v2770
      %v2786 = vrot.slane %v2785, 4
      %v2787 = vadd.f32 %v2785, %v2786
      %v2788 = vrot.slane %v2787, 2
      %v2789 = vadd.f32 %v2787, %v2788
      %v2790 = vrot.slane %v2789, 1
      %v2791 = vadd.f32 %v2789, %v2790
      %v2792 = vrcp.pop 128.0
      %v2793 = vmul.f32 %v2791, %v2792
      %v2794 = vmul.f32 %v2755, %v2755
      %v2795 = vmul.f32 %v2756, %v2756
      %v2796 = vmul.f32 %v2757, %v2757
      %v2797 = vmul.f32 %v2758, %v2758
      %v2798 = vmul.f32 %v2759, %v2759
      %v2799 = vmul.f32 %v2760, %v2760
      %v2800 = vmul.f32 %v2761, %v2761
      %v2801 = vmul.f32 %v2762, %v2762
      %v2802 = vmul.f32 %v2763, %v2763
      %v2803 = vmul.f32 %v2764, %v2764
      %v2804 = vmul.f32 %v2765, %v2765
      %v2805 = vmul.f32 %v2766, %v2766
      %v2806 = vmul.f32 %v2767, %v2767
      %v2807 = vmul.f32 %v2768, %v2768
      %v2808 = vmul.f32 %v2769, %v2769
      %v2809 = vmul.f32 %v2770, %v2770
      %v2810 = vadd.f32 %v2794, %v2795
      %v2811 = vadd.f32 %v2810, %v2796
      %v2812 = vadd.f32 %v2811, %v2797
      %v2813 = vadd.f32 %v2812, %v2798
      %v2814 = vadd.f32 %v2813, %v2799
      %v2815 = vadd.f32 %v2814, %v2800
      %v2816 = vadd.f32 %v2815, %v2801
      %v2817 = vadd.f32 %v2816, %v2802
      %v2818 = vadd.f32 %v2817, %v2803
      %v2819 = vadd.f32 %v2818, %v2804
      %v2820 = vadd.f32 %v2819, %v2805
      %v2821 = vadd.f32 %v2820, %v2806
      %v2822 = vadd.f32 %v2821, %v2807
      %v2823 = vadd.f32 %v2822, %v2808
      %v2824 = vadd.f32 %v2823, %v2809
      %v2825 = vrot.slane %v2824, 4
      %v2826 = vadd.f32 %v2824, %v2825
      %v2827 = vrot.slane %v2826, 2
      %v2828 = vadd.f32 %v2826, %v2827
      %v2829 = vrot.slane %v2828, 1
      %v2830 = vadd.f32 %v2828, %v2829
      %v2831 = vmul.f32 %v2830, %v2792
      %v2832 = vmul.f32 %v2793, %v2793
      %v2833 = vsub.f32 %v2831, %v2832
      %v2834 = vld [vmem:[%s319] sm:$0x1]
      %v2835 = vadd.f32 %v2833, 1e-05
      %v2836 = vrsqrt.pop %v2835
      %v2837 = vmul.f32 %v2834, %v2836
      %v2838 = vld [vmem:[%s322] sm:$0x1]
      %v2839 = vmul.f32 %v2793, %v2837
      %v2840 = vsub.f32 %v2838, %v2839
      %v2842 = vlaneseq
      %v2843 = vshrl.u32 %v2842, 7
      %v2844 = vsub.s32 0, %v2843
      %v2845 = vrot.slane %v2837, %v2844
      %v2847 = vmul.f32 %v2755, %v2845
      %v2848 = vmul.f32 %v2756, %v2845
      %v2849 = vmul.f32 %v2757, %v2845
      %v2850 = vmul.f32 %v2758, %v2845
      %v2851 = vmul.f32 %v2759, %v2845
      %v2852 = vmul.f32 %v2760, %v2845
      %v2853 = vmul.f32 %v2761, %v2845
      %v2854 = vmul.f32 %v2762, %v2845
      %v2855 = vmul.f32 %v2763, %v2845
      %v2856 = vmul.f32 %v2764, %v2845
      %v2857 = vmul.f32 %v2765, %v2845
      %v2858 = vmul.f32 %v2766, %v2845
      %v2859 = vmul.f32 %v2767, %v2845
      %v2860 = vmul.f32 %v2768, %v2845
      %v2861 = vmul.f32 %v2769, %v2845
      %v2862 = vmul.f32 %v2770, %v2845
      %v2864 = vlaneseq
      %v2865 = vshrl.u32 %v2864, 7
      %v2866 = vsub.s32 0, %v2865
      %v2867 = vrot.slane %v2840, %v2866
      %v2869 = vadd.f32 %v2847, %v2867
      %v2870 = vadd.f32 %v2848, %v2867
      %v2871 = vadd.f32 %v2849, %v2867
      %v2872 = vadd.f32 %v2850, %v2867
      %v2873 = vadd.f32 %v2851, %v2867
      %v2874 = vadd.f32 %v2852, %v2867
      %v2875 = vadd.f32 %v2853, %v2867
      %v2876 = vadd.f32 %v2854, %v2867
      %v2877 = vadd.f32 %v2855, %v2867
      %v2878 = vadd.f32 %v2856, %v2867
      %v2879 = vadd.f32 %v2857, %v2867
      %v2880 = vadd.f32 %v2858, %v2867
      %v2881 = vadd.f32 %v2859, %v2867
      %v2882 = vadd.f32 %v2860, %v2867
      %v2883 = vadd.f32 %v2861, %v2867
      %v2884 = vadd.f32 %v2862, %v2867
      %2885 = vst [vmem:[%s327] sm:$0xff] %v2869
      %2886 = vst [vmem:[%s327 + $0x8] sm:$0xff] %v2870
      %2887 = vst [vmem:[%s327 + $0x10] sm:$0xff] %v2871
      %2888 = vst [vmem:[%s327 + $0x18] sm:$0xff] %v2872
      %2889 = vst [vmem:[%s327 + $0x20] sm:$0xff] %v2873
      %2890 = vst [vmem:[%s327 + $0x28] sm:$0xff] %v2874
      %2891 = vst [vmem:[%s327 + $0x30] sm:$0xff] %v2875
      %2892 = vst [vmem:[%s327 + $0x38] sm:$0xff] %v2876
      %2893 = vst [vmem:[%s327 + $0x40] sm:$0xff] %v2877
      %2894 = vst [vmem:[%s327 + $0x48] sm:$0xff] %v2878
      %2895 = vst [vmem:[%s327 + $0x50] sm:$0xff] %v2879
      %2896 = vst [vmem:[%s327 + $0x58] sm:$0xff] %v2880
      %2897 = vst [vmem:[%s327 + $0x60] sm:$0xff] %v2881
      %2898 = vst [vmem:[%s327 + $0x68] sm:$0xff] %v2882
      %2899 = vst [vmem:[%s327 + $0x70] sm:$0xff] %v2883
      %2900 = vst [vmem:[%s327 + $0x78] sm:$0xff] %v2884
      %p2901 = scmp.lt.s32.totalorder %s17, 6
      %s2902 = scalar_select %p2901, %s17, 6
      %s2903 = smul.addr %s2902, 16
      %s2904 = smul.addr %s2903, 8
      %s2905 = scalar_lea.vmem %s6, %s2904
      // Predicated region
      $region45: #{bn_relu_gconv_bn.1} parent=43 // pred_check
        %p2906 = pneg %p191
      $region46: #{bn_relu_gconv_bn.1} parent=43 // pred_check_branch
        %2908 = sbr.rel (%p2906) target = $region48
      $region47: #{bn_relu_gconv_bn.1} parent=43 // pred_region
        _
      $region48: #{bn_relu_gconv_bn.1} parent=43 // pred_fallthru
        _
    $region44: #{bn_relu_gconv_bn.1} parent=5 // pred_fallthru
      _
    %p2909 = scmp.le.s32.totalorder 2, %s12
    // Predicated region
    $region49: #{bn_relu_gconv_bn.1} parent=5 // pred_check
      %p2910 = pneg %p2909
    $region50: #{bn_relu_gconv_bn.1} parent=5 // pred_check_branch
      %2912 = sbr.rel (%p2910) target = $region52
    $region51: #{bn_relu_gconv_bn.1} parent=5 // pred_region
      %s2913 = ssub.s32 %s12, 2
      // Predicated region
      $region53: #{bn_relu_gconv_bn.1} parent=51 // pred_check
        %p2914 = pneg %p197
      $region54: #{bn_relu_gconv_bn.1} parent=51 // pred_check_branch
        %2916 = sbr.rel (%p2914) target = $region56
      $region55: #{bn_relu_gconv_bn.1} parent=51 // pred_region
        %p2917 = scmp.lt.s32.totalorder %s18, 6
        %s2918 = scalar_select %p2917, %s18, 6
        %s2919 = smul.addr %s2918, 16
        %s2920 = smul.addr %s2919, 8
        %s2921 = scalar_lea.vmem %s6, %s2920
      $region56: #{bn_relu_gconv_bn.1} parent=51 // pred_fallthru
        _
    $region52: #{bn_relu_gconv_bn.1} parent=5 // pred_fallthru
      _
  $region6: #{bn_relu_gconv_bn.1} parent=0 // loop_footer
    %s16 = sadd.s32 1, %s12
  $region7: #{bn_relu_gconv_bn.1} parent=0 // loop_footer_branch
    %11 = sbr.rel target = $region3
  $region8: #{bn_relu_gconv_bn.1} parent=0 // loop_exit
    _

</llo_original>
